<compile_context>
chip_gen: v7x
topology: tpu7x:2x2x1
jax: 0.10.0
libtpu: 0.0.40
codegen_flags: <defaults>
</compile_context>

<pallas_src>
import numpy as np

import jax
import jax.numpy as jnp
from jax import lax
from jax.experimental import pallas as pl
from jax.experimental.pallas import tpu as pltpu


# -----------------------------------------------------------------------------
# Flat-spatial geometry (input 32x32, conv 5x5 valid, pool 2x2 stride 2)
#
# conv1 output position (y,x) lives at flat index s = 32*y + x   (y,x in [0,27])
#   -> need input slices of length L1 = 27*32 + 27 + 1 = 892, offsets 32*i + j
# pool1 keeps values at s = 64*yp + 2*xp (yp,xp in [0,13]); max needed index 858
# conv2 output position (y,x) lives at s = 64*y + 2*x (y,x in [0,9])
#   -> slices of length L2 = 64*9 + 18 + 1 = 595 from the 859-long pooled-1 map,
#      offsets 64*i + 2*j
# pool2 keeps values at s = 128*yq + 4*xq (yq,xq in [0,4]); max needed index 528
# -----------------------------------------------------------------------------
_L1 = 892          # conv1 flat output extent
_B1 = _L1 - 1      # 891 after +1 (x) pair-max
_C1 = _B1 - 32     # 859 after +32 (y) pair-max  (= pooled-1 sparse map length)
_L2 = 595          # conv2 flat output extent
_B2 = _L2 - 2      # 593 after +2 (x) pair-max
_C2 = _B2 - 64     # 529 after +64 (y) pair-max  (= pooled-2 sparse map length)


def _convnet_kernel(x_ref, w1_ref, b1_ref, w2_ref, b2_ref, sel_ref,
                    f1w_ref, f1b_ref, f2w_ref, f2b_ref, f3w_ref, f3b_ref,
                    out_ref, p1_ref, p2_ref, feat_ref):
    # ---------------- conv1 (3->6, 5x5) : in-kernel im2col + lane-dense MXU matmul
    for k in range(25):
        i, j = divmod(k, 5)
        off = 32 * i + j
        p1_ref[3 * k:3 * k + 3, :] = x_ref[0, :, off:off + _L1]          # (3, 892)
    a1 = jnp.dot(w1_ref[...], p1_ref[...],
                 preferred_element_type=jnp.float32)                     # (6, 892)
    a1 = jnp.maximum(a1 + b1_ref[...], 0.0)                              # + bias, ReLU
    # 2x2/2 max-pool in flat coords: neighbours at +1 (x) and +32 (y)
    m1 = jnp.maximum(a1[:, 0:_B1], a1[:, 1:_B1 + 1])                     # (6, 891)
    c1 = jnp.maximum(m1[:, 0:_C1], m1[:, 32:_B1])                        # (6, 859)

    # ---------------- conv2 (6->16, 5x5) on the sparse pooled map (x stride 2, y stride 64)
    for k in range(25):
        i, j = divmod(k, 5)
        off = 64 * i + 2 * j
        p2_ref[6 * k:6 * k + 6, :] = c1[:, off:off + _L2]                # (6, 595)
    a2 = jnp.dot(w2_ref[...], p2_ref[...],
                 preferred_element_type=jnp.float32)                     # (16, 595)
    a2 = jnp.maximum(a2 + b2_ref[...], 0.0)
    m2 = jnp.maximum(a2[:, 0:_B2], a2[:, 2:_B2 + 2])                     # (16, 593)
    c2 = jnp.maximum(m2[:, 0:_C2], m2[:, 64:_B2])                        # (16, 529)

    # ---------------- compact the 5x5 pooled grid with an exact 0/1 selection matmul
    f = jnp.dot(c2, sel_ref[...], preferred_element_type=jnp.float32)    # (16, 25)

    # ---------------- flatten exactly like torch .view(-1, 400): index = c*25 + y*5 + x
    for c in range(16):
        feat_ref[:, 25 * c:25 * c + 25] = f[c:c + 1, :]
    x = feat_ref[...]                                                    # (1, 400)

    # ---------------- fc1 -> relu -> fc2 -> relu -> fc3 (all in VMEM / MXU)
    h = jnp.maximum(jnp.dot(x, f1w_ref[...],
                            preferred_element_type=jnp.float32) + f1b_ref[...], 0.0)
    h = jnp.maximum(jnp.dot(h, f2w_ref[...],
                            preferred_element_type=jnp.float32) + f2b_ref[...], 0.0)
    out_ref[0] = jnp.dot(h, f3w_ref[...],
                         preferred_element_type=jnp.float32) + f3b_ref[...]


def _pool2_selection():
    """(529, 25) 0/1 matrix picking pooled-2 value (yq,xq) from sparse index 128*yq+4*xq."""
    sel = np.zeros((_C2, 25), np.float32)
    for y in range(5):
        for x in range(5):
            sel[128 * y + 4 * x, 5 * y + x] = 1.0
    return jnp.asarray(sel)


def _tpu_compiler_params():
    cls = getattr(pltpu, "CompilerParams", None) or getattr(pltpu, "TPUCompilerParams", None)
    if cls is None:
        return None
    return cls(dimension_semantics=("parallel",))   # batch axis -> both TCs on v7x


def convnet_forward(params, x):
    """x: (N, 3, 32, 32) float32 NCHW -> logits (N, 10)."""
    n = x.shape[0]
    assert x.shape[1:] == (3, 32, 32)
    xf = x.reshape(n, 3, 1024).astype(jnp.float32)        # flatten spatial only (no inflation)

    # Weight prep (host-side, one-time):  W[o, (i*KW+j)*C + c] = w[o, c, i, j]
    w1 = params["conv1_w"].transpose(0, 2, 3, 1).reshape(6, 75)
    b1 = params["conv1_b"].reshape(6, 1)
    w2 = params["conv2_w"].transpose(0, 2, 3, 1).reshape(16, 150)
    b2 = params["conv2_b"].reshape(16, 1)
    sel = _pool2_selection()
    f1w, f1b = params["fc1_w"], params["fc1_b"].reshape(1, 100)
    f2w, f2b = params["fc2_w"], params["fc2_b"].reshape(1, 100)
    f3w, f3b = params["fc3_w"], params["fc3_b"].reshape(1, 10)

    def whole(a):
        nd = a.ndim
        return pl.BlockSpec(a.shape, lambda i, _nd=nd: (0,) * _nd)

    out = pl.pallas_call(
        _convnet_kernel,
        out_shape=jax.ShapeDtypeStruct((n, 1, 10), jnp.float32),
        grid=(n,),
        in_specs=[
            pl.BlockSpec((1, 3, 1024), lambda i: (i, 0, 0)),   # one image per grid step
            whole(w1), whole(b1), whole(w2), whole(b2), whole(sel),
            whole(f1w), whole(f1b), whole(f2w), whole(f2b), whole(f3w), whole(f3b),
        ],
        out_specs=pl.BlockSpec((1, 1, 10), lambda i: (i, 0, 0)),
        scratch_shapes=[
            pltpu.VMEM((75, _L1), jnp.float32),    # conv1 im2col patches
            pltpu.VMEM((150, _L2), jnp.float32),   # conv2 im2col patches
            pltpu.VMEM((1, 400), jnp.float32),     # flattened features
        ],
        compiler_params=_tpu_compiler_params(),
    )(xf, w1, b1, w2, b2, sel, f1w, f1b, f2w, f2b, f3w, f3b)
    return out.reshape(n, 10)


# -----------------------------------------------------------------------------
# Parameters (deterministic, PyTorch-default-style uniform init)
# -----------------------------------------------------------------------------
def init_params(key):
    def uniform(k, shape, fan_in):
        bound = 1.0 / jnp.sqrt(jnp.float32(fan_in))
        return jax.random.uniform(k, shape, jnp.float32, -bound, bound)

    keys = jax.random.split(key, 10)
    p = {}
    p["conv1_w"] = uniform(keys[0], (6, 3, 5, 5), 3 * 5 * 5)
    p["conv1_b"] = uniform(keys[1], (6,), 3 * 5 * 5)
    p["conv2_w"] = uniform(keys[2], (16, 6, 5, 5), 6 * 5 * 5)
    p["conv2_b"] = uniform(keys[3], (16,), 6 * 5 * 5)
    p["fc1_w"] = uniform(keys[4], (400, 100), 400)   # stored (in, out)
    p["fc1_b"] = uniform(keys[5], (100,), 400)
    p["fc2_w"] = uniform(keys[6], (100, 100), 100)
    p["fc2_b"] = uniform(keys[7], (100,), 100)
    p["fc3_w"] = uniform(keys[8], (100, 10), 100)
    p["fc3_b"] = uniform(keys[9], (10,), 100)
    return p


# -----------------------------------------------------------------------------
# Pure-JAX reference (for a correctness check against the fused kernel)
# -----------------------------------------------------------------------------
def _maxpool2x2_ref(x):
    n, c, h, w = x.shape
    return x.reshape(n, c, h // 2, 2, w // 2, 2).max(axis=(3, 5))


def convnet_reference(params, x):
    hp = lax.Precision.HIGHEST
    dn = ("NCHW", "OIHW", "NCHW")
    y = lax.conv_general_dilated(x, params["conv1_w"], (1, 1), "VALID",
                                 dimension_numbers=dn, precision=hp)
    y = jnp.maximum(y + params["conv1_b"].reshape(1, 6, 1, 1), 0.0)
    y = _maxpool2x2_ref(y)
    y = lax.conv_general_dilated(y, params["conv2_w"], (1, 1), "VALID",
                                 dimension_numbers=dn, precision=hp)
    y = jnp.maximum(y + params["conv2_b"].reshape(1, 16, 1, 1), 0.0)
    y = _maxpool2x2_ref(y)
    y = y.reshape(y.shape[0], 400)
    y = jnp.maximum(jnp.dot(y, params["fc1_w"], precision=hp) + params["fc1_b"], 0.0)
    y = jnp.maximum(jnp.dot(y, params["fc2_w"], precision=hp) + params["fc2_b"], 0.0)
    return jnp.dot(y, params["fc3_w"], precision=hp) + params["fc3_b"]


if __name__ == "__main__":
    key = jax.random.PRNGKey(0)
    k_param, k_x = jax.random.split(key)
    params = init_params(k_param)
    # CIFAR-sized input (the flatten to 16*5*5 requires 32x32 spatial), batch = 2.
    x = jax.random.normal(k_x, (2, 3, 32, 32), dtype=jnp.float32)

    logits = jax.block_until_ready(jax.jit(convnet_forward)(params, x))
    assert logits.shape == (2, 10) and logits.dtype == jnp.float32

    ref = jax.block_until_ready(jax.jit(convnet_reference)(params, x))
    err = np.abs(np.asarray(logits) - np.asarray(ref)).max()
    assert np.allclose(np.asarray(logits), np.asarray(ref), atol=3e-2, rtol=3e-2), err

    print("KERNEL_OK")
</pallas_src>

<mosaic_0001>
module attributes {stable_mosaic.version = 11 : i64} {
  func.func @_convnet_kernel(%arg0: i32, %arg1: memref<1x3x1024xf32, #tpu.memory_space<vmem>>, %arg2: memref<6x75xf32, #tpu.memory_space<vmem>>, %arg3: memref<6x1xf32, #tpu.memory_space<vmem>>, %arg4: memref<16x150xf32, #tpu.memory_space<vmem>>, %arg5: memref<16x1xf32, #tpu.memory_space<vmem>>, %arg6: memref<529x25xf32, #tpu.memory_space<vmem>>, %arg7: memref<400x100xf32, #tpu.memory_space<vmem>>, %arg8: memref<1x100xf32, #tpu.memory_space<vmem>>, %arg9: memref<100x100xf32, #tpu.memory_space<vmem>>, %arg10: memref<1x100xf32, #tpu.memory_space<vmem>>, %arg11: memref<100x10xf32, #tpu.memory_space<vmem>>, %arg12: memref<1x10xf32, #tpu.memory_space<vmem>>, %arg13: memref<1x1x10xf32, #tpu.memory_space<vmem>>, %arg14: memref<75x892xf32, #tpu.memory_space<vmem>>, %arg15: memref<150x595xf32, #tpu.memory_space<vmem>>, %arg16: memref<1x400xf32, #tpu.memory_space<vmem>>) attributes {dimension_semantics = [#tpu.dimension_semantics<parallel>], iteration_bounds = array<i64: 2>, scalar_prefetch = 0 : i64, scratch_operands = 3 : i64, tpu.core_type = #tpu.core_type<tc>, window_params = [{transform_indices = @transform_0, window_bounds = array<i64: 1, 3, 1024>}, {pipeline_mode = #tpu.pipeline_mode<synchronous>, transform_indices = @transform_1, window_bounds = array<i64: 6, 75>}, {pipeline_mode = #tpu.pipeline_mode<synchronous>, transform_indices = @transform_2, window_bounds = array<i64: 6, 1>}, {pipeline_mode = #tpu.pipeline_mode<synchronous>, transform_indices = @transform_3, window_bounds = array<i64: 16, 150>}, {pipeline_mode = #tpu.pipeline_mode<synchronous>, transform_indices = @transform_4, window_bounds = array<i64: 16, 1>}, {pipeline_mode = #tpu.pipeline_mode<synchronous>, transform_indices = @transform_5, window_bounds = array<i64: 529, 25>}, {pipeline_mode = #tpu.pipeline_mode<synchronous>, transform_indices = @transform_6, window_bounds = array<i64: 400, 100>}, {pipeline_mode = #tpu.pipeline_mode<synchronous>, transform_indices = @transform_7, window_bounds = array<i64: 1, 100>}, {pipeline_mode = #tpu.pipeline_mode<synchronous>, transform_indices = @transform_8, window_bounds = array<i64: 100, 100>}, {pipeline_mode = #tpu.pipeline_mode<synchronous>, transform_indices = @transform_9, window_bounds = array<i64: 1, 100>}, {pipeline_mode = #tpu.pipeline_mode<synchronous>, transform_indices = @transform_10, window_bounds = array<i64: 100, 10>}, {pipeline_mode = #tpu.pipeline_mode<synchronous>, transform_indices = @transform_11, window_bounds = array<i64: 1, 10>}, {transform_indices = @transform_12, window_bounds = array<i64: 1, 1, 10>}]} {
    %c0 = arith.constant 0 : index
    %c0_0 = arith.constant 0 : index
    %c0_1 = arith.constant 0 : index
    %0 = vector.load %arg1[%c0, %c0_0, %c0_1] : memref<1x3x1024xf32, #tpu.memory_space<vmem>>, vector<1x3x892xf32>
    %1 = vector.shape_cast %0 : vector<1x3x892xf32> to vector<3x892xf32>
    %c0_2 = arith.constant 0 : index
    %c0_3 = arith.constant 0 : index
    %2 = vector.load %arg14[%c0_2, %c0_3] : memref<75x892xf32, #tpu.memory_space<vmem>>, vector<3x892xf32>
    tpu.vector_store %arg14[%c0_2, %c0_3], %1 {strides = array<i32>} : memref<75x892xf32, #tpu.memory_space<vmem>>, vector<3x892xf32>,
    %c0_4 = arith.constant 0 : index
    %c0_5 = arith.constant 0 : index
    %c1 = arith.constant 1 : index
    %3 = vector.load %arg1[%c0_4, %c0_5, %c1] : memref<1x3x1024xf32, #tpu.memory_space<vmem>>, vector<1x3x892xf32>
    %4 = vector.shape_cast %3 : vector<1x3x892xf32> to vector<3x892xf32>
    %c3 = arith.constant 3 : index
    %c0_6 = arith.constant 0 : index
    %5 = vector.load %arg14[%c3, %c0_6] : memref<75x892xf32, #tpu.memory_space<vmem>>, vector<3x892xf32>
    tpu.vector_store %arg14[%c3, %c0_6], %4 {strides = array<i32>} : memref<75x892xf32, #tpu.memory_space<vmem>>, vector<3x892xf32>,
    %c0_7 = arith.constant 0 : index
    %c0_8 = arith.constant 0 : index
    %c2 = arith.constant 2 : index
    %6 = vector.load %arg1[%c0_7, %c0_8, %c2] : memref<1x3x1024xf32, #tpu.memory_space<vmem>>, vector<1x3x892xf32>
    %7 = vector.shape_cast %6 : vector<1x3x892xf32> to vector<3x892xf32>
    %c6 = arith.constant 6 : index
    %c0_9 = arith.constant 0 : index
    %8 = vector.load %arg14[%c6, %c0_9] : memref<75x892xf32, #tpu.memory_space<vmem>>, vector<3x892xf32>
    tpu.vector_store %arg14[%c6, %c0_9], %7 {strides = array<i32>} : memref<75x892xf32, #tpu.memory_space<vmem>>, vector<3x892xf32>,
    %c0_10 = arith.constant 0 : index
    %c0_11 = arith.constant 0 : index
    %c3_12 = arith.constant 3 : index
    %9 = vector.load %arg1[%c0_10, %c0_11, %c3_12] : memref<1x3x1024xf32, #tpu.memory_space<vmem>>, vector<1x3x892xf32>
    %10 = vector.shape_cast %9 : vector<1x3x892xf32> to vector<3x892xf32>
    %c9 = arith.constant 9 : index
    %c0_13 = arith.constant 0 : index
    %11 = vector.load %arg14[%c9, %c0_13] : memref<75x892xf32, #tpu.memory_space<vmem>>, vector<3x892xf32>
    tpu.vector_store %arg14[%c9, %c0_13], %10 {strides = array<i32>} : memref<75x892xf32, #tpu.memory_space<vmem>>, vector<3x892xf32>,
    %c0_14 = arith.constant 0 : index
    %c0_15 = arith.constant 0 : index
    %c4 = arith.constant 4 : index
    %12 = vector.load %arg1[%c0_14, %c0_15, %c4] : memref<1x3x1024xf32, #tpu.memory_space<vmem>>, vector<1x3x892xf32>
    %13 = vector.shape_cast %12 : vector<1x3x892xf32> to vector<3x892xf32>
    %c12 = arith.constant 12 : index
    %c0_16 = arith.constant 0 : index
    %14 = vector.load %arg14[%c12, %c0_16] : memref<75x892xf32, #tpu.memory_space<vmem>>, vector<3x892xf32>
    tpu.vector_store %arg14[%c12, %c0_16], %13 {strides = array<i32>} : memref<75x892xf32, #tpu.memory_space<vmem>>, vector<3x892xf32>,
    %c0_17 = arith.constant 0 : index
    %c0_18 = arith.constant 0 : index
    %c32 = arith.constant 32 : index
    %15 = vector.load %arg1[%c0_17, %c0_18, %c32] : memref<1x3x1024xf32, #tpu.memory_space<vmem>>, vector<1x3x892xf32>
    %16 = vector.shape_cast %15 : vector<1x3x892xf32> to vector<3x892xf32>
    %c15 = arith.constant 15 : index
    %c0_19 = arith.constant 0 : index
    %17 = vector.load %arg14[%c15, %c0_19] : memref<75x892xf32, #tpu.memory_space<vmem>>, vector<3x892xf32>
    tpu.vector_store %arg14[%c15, %c0_19], %16 {strides = array<i32>} : memref<75x892xf32, #tpu.memory_space<vmem>>, vector<3x892xf32>,
    %c0_20 = arith.constant 0 : index
    %c0_21 = arith.constant 0 : index
    %c33 = arith.constant 33 : index
    %18 = vector.load %arg1[%c0_20, %c0_21, %c33] : memref<1x3x1024xf32, #tpu.memory_space<vmem>>, vector<1x3x892xf32>
    %19 = vector.shape_cast %18 : vector<1x3x892xf32> to vector<3x892xf32>
    %c18 = arith.constant 18 : index
    %c0_22 = arith.constant 0 : index
    %20 = vector.load %arg14[%c18, %c0_22] : memref<75x892xf32, #tpu.memory_space<vmem>>, vector<3x892xf32>
    tpu.vector_store %arg14[%c18, %c0_22], %19 {strides = array<i32>} : memref<75x892xf32, #tpu.memory_space<vmem>>, vector<3x892xf32>,
    %c0_23 = arith.constant 0 : index
    %c0_24 = arith.constant 0 : index
    %c34 = arith.constant 34 : index
    %21 = vector.load %arg1[%c0_23, %c0_24, %c34] : memref<1x3x1024xf32, #tpu.memory_space<vmem>>, vector<1x3x892xf32>
    %22 = vector.shape_cast %21 : vector<1x3x892xf32> to vector<3x892xf32>
    %c21 = arith.constant 21 : index
    %c0_25 = arith.constant 0 : index
    %23 = vector.load %arg14[%c21, %c0_25] : memref<75x892xf32, #tpu.memory_space<vmem>>, vector<3x892xf32>
    tpu.vector_store %arg14[%c21, %c0_25], %22 {strides = array<i32>} : memref<75x892xf32, #tpu.memory_space<vmem>>, vector<3x892xf32>,
    %c0_26 = arith.constant 0 : index
    %c0_27 = arith.constant 0 : index
    %c35 = arith.constant 35 : index
    %24 = vector.load %arg1[%c0_26, %c0_27, %c35] : memref<1x3x1024xf32, #tpu.memory_space<vmem>>, vector<1x3x892xf32>
    %25 = vector.shape_cast %24 : vector<1x3x892xf32> to vector<3x892xf32>
    %c24 = arith.constant 24 : index
    %c0_28 = arith.constant 0 : index
    %26 = vector.load %arg14[%c24, %c0_28] : memref<75x892xf32, #tpu.memory_space<vmem>>, vector<3x892xf32>
    tpu.vector_store %arg14[%c24, %c0_28], %25 {strides = array<i32>} : memref<75x892xf32, #tpu.memory_space<vmem>>, vector<3x892xf32>,
    %c0_29 = arith.constant 0 : index
    %c0_30 = arith.constant 0 : index
    %c36 = arith.constant 36 : index
    %27 = vector.load %arg1[%c0_29, %c0_30, %c36] : memref<1x3x1024xf32, #tpu.memory_space<vmem>>, vector<1x3x892xf32>
    %28 = vector.shape_cast %27 : vector<1x3x892xf32> to vector<3x892xf32>
    %c27 = arith.constant 27 : index
    %c0_31 = arith.constant 0 : index
    %29 = vector.load %arg14[%c27, %c0_31] : memref<75x892xf32, #tpu.memory_space<vmem>>, vector<3x892xf32>
    tpu.vector_store %arg14[%c27, %c0_31], %28 {strides = array<i32>} : memref<75x892xf32, #tpu.memory_space<vmem>>, vector<3x892xf32>,
    %c0_32 = arith.constant 0 : index
    %c0_33 = arith.constant 0 : index
    %c64 = arith.constant 64 : index
    %30 = vector.load %arg1[%c0_32, %c0_33, %c64] : memref<1x3x1024xf32, #tpu.memory_space<vmem>>, vector<1x3x892xf32>
    %31 = vector.shape_cast %30 : vector<1x3x892xf32> to vector<3x892xf32>
    %c30 = arith.constant 30 : index
    %c0_34 = arith.constant 0 : index
    %32 = vector.load %arg14[%c30, %c0_34] : memref<75x892xf32, #tpu.memory_space<vmem>>, vector<3x892xf32>
    tpu.vector_store %arg14[%c30, %c0_34], %31 {strides = array<i32>} : memref<75x892xf32, #tpu.memory_space<vmem>>, vector<3x892xf32>,
    %c0_35 = arith.constant 0 : index
    %c0_36 = arith.constant 0 : index
    %c65 = arith.constant 65 : index
    %33 = vector.load %arg1[%c0_35, %c0_36, %c65] : memref<1x3x1024xf32, #tpu.memory_space<vmem>>, vector<1x3x892xf32>
    %34 = vector.shape_cast %33 : vector<1x3x892xf32> to vector<3x892xf32>
    %c33_37 = arith.constant 33 : index
    %c0_38 = arith.constant 0 : index
    %35 = vector.load %arg14[%c33_37, %c0_38] : memref<75x892xf32, #tpu.memory_space<vmem>>, vector<3x892xf32>
    tpu.vector_store %arg14[%c33_37, %c0_38], %34 {strides = array<i32>} : memref<75x892xf32, #tpu.memory_space<vmem>>, vector<3x892xf32>,
    %c0_39 = arith.constant 0 : index
    %c0_40 = arith.constant 0 : index
    %c66 = arith.constant 66 : index
    %36 = vector.load %arg1[%c0_39, %c0_40, %c66] : memref<1x3x1024xf32, #tpu.memory_space<vmem>>, vector<1x3x892xf32>
    %37 = vector.shape_cast %36 : vector<1x3x892xf32> to vector<3x892xf32>
    %c36_41 = arith.constant 36 : index
    %c0_42 = arith.constant 0 : index
    %38 = vector.load %arg14[%c36_41, %c0_42] : memref<75x892xf32, #tpu.memory_space<vmem>>, vector<3x892xf32>
    tpu.vector_store %arg14[%c36_41, %c0_42], %37 {strides = array<i32>} : memref<75x892xf32, #tpu.memory_space<vmem>>, vector<3x892xf32>,
    %c0_43 = arith.constant 0 : index
    %c0_44 = arith.constant 0 : index
    %c67 = arith.constant 67 : index
    %39 = vector.load %arg1[%c0_43, %c0_44, %c67] : memref<1x3x1024xf32, #tpu.memory_space<vmem>>, vector<1x3x892xf32>
    %40 = vector.shape_cast %39 : vector<1x3x892xf32> to vector<3x892xf32>
    %c39 = arith.constant 39 : index
    %c0_45 = arith.constant 0 : index
    %41 = vector.load %arg14[%c39, %c0_45] : memref<75x892xf32, #tpu.memory_space<vmem>>, vector<3x892xf32>
    tpu.vector_store %arg14[%c39, %c0_45], %40 {strides = array<i32>} : memref<75x892xf32, #tpu.memory_space<vmem>>, vector<3x892xf32>,
    %c0_46 = arith.constant 0 : index
    %c0_47 = arith.constant 0 : index
    %c68 = arith.constant 68 : index
    %42 = vector.load %arg1[%c0_46, %c0_47, %c68] : memref<1x3x1024xf32, #tpu.memory_space<vmem>>, vector<1x3x892xf32>
    %43 = vector.shape_cast %42 : vector<1x3x892xf32> to vector<3x892xf32>
    %c42 = arith.constant 42 : index
    %c0_48 = arith.constant 0 : index
    %44 = vector.load %arg14[%c42, %c0_48] : memref<75x892xf32, #tpu.memory_space<vmem>>, vector<3x892xf32>
    tpu.vector_store %arg14[%c42, %c0_48], %43 {strides = array<i32>} : memref<75x892xf32, #tpu.memory_space<vmem>>, vector<3x892xf32>,
    %c0_49 = arith.constant 0 : index
    %c0_50 = arith.constant 0 : index
    %c96 = arith.constant 96 : index
    %45 = vector.load %arg1[%c0_49, %c0_50, %c96] : memref<1x3x1024xf32, #tpu.memory_space<vmem>>, vector<1x3x892xf32>
    %46 = vector.shape_cast %45 : vector<1x3x892xf32> to vector<3x892xf32>
    %c45 = arith.constant 45 : index
    %c0_51 = arith.constant 0 : index
    %47 = vector.load %arg14[%c45, %c0_51] : memref<75x892xf32, #tpu.memory_space<vmem>>, vector<3x892xf32>
    tpu.vector_store %arg14[%c45, %c0_51], %46 {strides = array<i32>} : memref<75x892xf32, #tpu.memory_space<vmem>>, vector<3x892xf32>,
    %c0_52 = arith.constant 0 : index
    %c0_53 = arith.constant 0 : index
    %c97 = arith.constant 97 : index
    %48 = vector.load %arg1[%c0_52, %c0_53, %c97] : memref<1x3x1024xf32, #tpu.memory_space<vmem>>, vector<1x3x892xf32>
    %49 = vector.shape_cast %48 : vector<1x3x892xf32> to vector<3x892xf32>
    %c48 = arith.constant 48 : index
    %c0_54 = arith.constant 0 : index
    %50 = vector.load %arg14[%c48, %c0_54] : memref<75x892xf32, #tpu.memory_space<vmem>>, vector<3x892xf32>
    tpu.vector_store %arg14[%c48, %c0_54], %49 {strides = array<i32>} : memref<75x892xf32, #tpu.memory_space<vmem>>, vector<3x892xf32>,
    %c0_55 = arith.constant 0 : index
    %c0_56 = arith.constant 0 : index
    %c98 = arith.constant 98 : index
    %51 = vector.load %arg1[%c0_55, %c0_56, %c98] : memref<1x3x1024xf32, #tpu.memory_space<vmem>>, vector<1x3x892xf32>
    %52 = vector.shape_cast %51 : vector<1x3x892xf32> to vector<3x892xf32>
    %c51 = arith.constant 51 : index
    %c0_57 = arith.constant 0 : index
    %53 = vector.load %arg14[%c51, %c0_57] : memref<75x892xf32, #tpu.memory_space<vmem>>, vector<3x892xf32>
    tpu.vector_store %arg14[%c51, %c0_57], %52 {strides = array<i32>} : memref<75x892xf32, #tpu.memory_space<vmem>>, vector<3x892xf32>,
    %c0_58 = arith.constant 0 : index
    %c0_59 = arith.constant 0 : index
    %c99 = arith.constant 99 : index
    %54 = vector.load %arg1[%c0_58, %c0_59, %c99] : memref<1x3x1024xf32, #tpu.memory_space<vmem>>, vector<1x3x892xf32>
    %55 = vector.shape_cast %54 : vector<1x3x892xf32> to vector<3x892xf32>
    %c54 = arith.constant 54 : index
    %c0_60 = arith.constant 0 : index
    %56 = vector.load %arg14[%c54, %c0_60] : memref<75x892xf32, #tpu.memory_space<vmem>>, vector<3x892xf32>
    tpu.vector_store %arg14[%c54, %c0_60], %55 {strides = array<i32>} : memref<75x892xf32, #tpu.memory_space<vmem>>, vector<3x892xf32>,
    %c0_61 = arith.constant 0 : index
    %c0_62 = arith.constant 0 : index
    %c100 = arith.constant 100 : index
    %57 = vector.load %arg1[%c0_61, %c0_62, %c100] : memref<1x3x1024xf32, #tpu.memory_space<vmem>>, vector<1x3x892xf32>
    %58 = vector.shape_cast %57 : vector<1x3x892xf32> to vector<3x892xf32>
    %c57 = arith.constant 57 : index
    %c0_63 = arith.constant 0 : index
    %59 = vector.load %arg14[%c57, %c0_63] : memref<75x892xf32, #tpu.memory_space<vmem>>, vector<3x892xf32>
    tpu.vector_store %arg14[%c57, %c0_63], %58 {strides = array<i32>} : memref<75x892xf32, #tpu.memory_space<vmem>>, vector<3x892xf32>,
    %c0_64 = arith.constant 0 : index
    %c0_65 = arith.constant 0 : index
    %c128 = arith.constant 128 : index
    %60 = vector.load %arg1[%c0_64, %c0_65, %c128] : memref<1x3x1024xf32, #tpu.memory_space<vmem>>, vector<1x3x892xf32>
    %61 = vector.shape_cast %60 : vector<1x3x892xf32> to vector<3x892xf32>
    %c60 = arith.constant 60 : index
    %c0_66 = arith.constant 0 : index
    %62 = vector.load %arg14[%c60, %c0_66] : memref<75x892xf32, #tpu.memory_space<vmem>>, vector<3x892xf32>
    tpu.vector_store %arg14[%c60, %c0_66], %61 {strides = array<i32>} : memref<75x892xf32, #tpu.memory_space<vmem>>, vector<3x892xf32>,
    %c0_67 = arith.constant 0 : index
    %c0_68 = arith.constant 0 : index
    %c129 = arith.constant 129 : index
    %63 = vector.load %arg1[%c0_67, %c0_68, %c129] : memref<1x3x1024xf32, #tpu.memory_space<vmem>>, vector<1x3x892xf32>
    %64 = vector.shape_cast %63 : vector<1x3x892xf32> to vector<3x892xf32>
    %c63 = arith.constant 63 : index
    %c0_69 = arith.constant 0 : index
    %65 = vector.load %arg14[%c63, %c0_69] : memref<75x892xf32, #tpu.memory_space<vmem>>, vector<3x892xf32>
    tpu.vector_store %arg14[%c63, %c0_69], %64 {strides = array<i32>} : memref<75x892xf32, #tpu.memory_space<vmem>>, vector<3x892xf32>,
    %c0_70 = arith.constant 0 : index
    %c0_71 = arith.constant 0 : index
    %c130 = arith.constant 130 : index
    %66 = vector.load %arg1[%c0_70, %c0_71, %c130] : memref<1x3x1024xf32, #tpu.memory_space<vmem>>, vector<1x3x892xf32>
    %67 = vector.shape_cast %66 : vector<1x3x892xf32> to vector<3x892xf32>
    %c66_72 = arith.constant 66 : index
    %c0_73 = arith.constant 0 : index
    %68 = vector.load %arg14[%c66_72, %c0_73] : memref<75x892xf32, #tpu.memory_space<vmem>>, vector<3x892xf32>
    tpu.vector_store %arg14[%c66_72, %c0_73], %67 {strides = array<i32>} : memref<75x892xf32, #tpu.memory_space<vmem>>, vector<3x892xf32>,
    %c0_74 = arith.constant 0 : index
    %c0_75 = arith.constant 0 : index
    %c131 = arith.constant 131 : index
    %69 = vector.load %arg1[%c0_74, %c0_75, %c131] : memref<1x3x1024xf32, #tpu.memory_space<vmem>>, vector<1x3x892xf32>
    %70 = vector.shape_cast %69 : vector<1x3x892xf32> to vector<3x892xf32>
    %c69 = arith.constant 69 : index
    %c0_76 = arith.constant 0 : index
    %71 = vector.load %arg14[%c69, %c0_76] : memref<75x892xf32, #tpu.memory_space<vmem>>, vector<3x892xf32>
    tpu.vector_store %arg14[%c69, %c0_76], %70 {strides = array<i32>} : memref<75x892xf32, #tpu.memory_space<vmem>>, vector<3x892xf32>,
    %c0_77 = arith.constant 0 : index
    %c0_78 = arith.constant 0 : index
    %c132 = arith.constant 132 : index
    %72 = vector.load %arg1[%c0_77, %c0_78, %c132] : memref<1x3x1024xf32, #tpu.memory_space<vmem>>, vector<1x3x892xf32>
    %73 = vector.shape_cast %72 : vector<1x3x892xf32> to vector<3x892xf32>
    %c72 = arith.constant 72 : index
    %c0_79 = arith.constant 0 : index
    %74 = vector.load %arg14[%c72, %c0_79] : memref<75x892xf32, #tpu.memory_space<vmem>>, vector<3x892xf32>
    tpu.vector_store %arg14[%c72, %c0_79], %73 {strides = array<i32>} : memref<75x892xf32, #tpu.memory_space<vmem>>, vector<3x892xf32>,
    %c0_80 = arith.constant 0 : index
    %c0_81 = arith.constant 0 : index
    %75 = vector.load %arg2[%c0_80, %c0_81] : memref<6x75xf32, #tpu.memory_space<vmem>>, vector<6x75xf32>
    %c0_82 = arith.constant 0 : index
    %c0_83 = arith.constant 0 : index
    %76 = vector.load %arg14[%c0_82, %c0_83] : memref<75x892xf32, #tpu.memory_space<vmem>>, vector<75x892xf32>
    %cst = arith.constant dense<0.000000e+00> : vector<6x892xf32>
    %77 = tpu.matmul %75, %76, %cst {dimension_numbers = #tpu.dot_dimension_numbers<[1], [0], [0], [1], [0, 0, 1, 1], [], []>} : vector<6x75xf32>, vector<75x892xf32>, vector<6x892xf32> -> vector<6x892xf32>
    %c0_84 = arith.constant 0 : index
    %c0_85 = arith.constant 0 : index
    %78 = vector.load %arg3[%c0_84, %c0_85] : memref<6x1xf32, #tpu.memory_space<vmem>>, vector<6x1xf32>
    %79 = vector.broadcast %78 : vector<6x1xf32> to vector<6x892xf32>
    %80 = arith.addf %77, %79 : vector<6x892xf32>
    %cst_86 = arith.constant 0.000000e+00 : f32
    %81 = vector.broadcast %cst_86 : f32 to vector<6x892xf32>
    %82 = arith.maximumf %80, %81 : vector<6x892xf32>
    %83 = vector.extract_strided_slice %82 {offsets = [0, 0], sizes = [6, 891], strides = [1, 1]} : vector<6x892xf32> to vector<6x891xf32>
    %84 = vector.extract_strided_slice %82 {offsets = [0, 1], sizes = [6, 891], strides = [1, 1]} : vector<6x892xf32> to vector<6x891xf32>
    %85 = arith.maximumf %83, %84 : vector<6x891xf32>
    %86 = vector.extract_strided_slice %85 {offsets = [0, 0], sizes = [6, 859], strides = [1, 1]} : vector<6x891xf32> to vector<6x859xf32>
    %87 = vector.extract_strided_slice %85 {offsets = [0, 32], sizes = [6, 859], strides = [1, 1]} : vector<6x891xf32> to vector<6x859xf32>
    %88 = arith.maximumf %86, %87 : vector<6x859xf32>
    %89 = vector.extract_strided_slice %88 {offsets = [0, 0], sizes = [6, 595], strides = [1, 1]} : vector<6x859xf32> to vector<6x595xf32>
    %c0_87 = arith.constant 0 : index
    %c0_88 = arith.constant 0 : index
    %90 = vector.load %arg15[%c0_87, %c0_88] : memref<150x595xf32, #tpu.memory_space<vmem>>, vector<6x595xf32>
    tpu.vector_store %arg15[%c0_87, %c0_88], %89 {strides = array<i32>} : memref<150x595xf32, #tpu.memory_space<vmem>>, vector<6x595xf32>,
    %91 = vector.extract_strided_slice %88 {offsets = [0, 2], sizes = [6, 595], strides = [1, 1]} : vector<6x859xf32> to vector<6x595xf32>
    %c6_89 = arith.constant 6 : index
    %c0_90 = arith.constant 0 : index
    %92 = vector.load %arg15[%c6_89, %c0_90] : memref<150x595xf32, #tpu.memory_space<vmem>>, vector<6x595xf32>
    tpu.vector_store %arg15[%c6_89, %c0_90], %91 {strides = array<i32>} : memref<150x595xf32, #tpu.memory_space<vmem>>, vector<6x595xf32>,
    %93 = vector.extract_strided_slice %88 {offsets = [0, 4], sizes = [6, 595], strides = [1, 1]} : vector<6x859xf32> to vector<6x595xf32>
    %c12_91 = arith.constant 12 : index
    %c0_92 = arith.constant 0 : index
    %94 = vector.load %arg15[%c12_91, %c0_92] : memref<150x595xf32, #tpu.memory_space<vmem>>, vector<6x595xf32>
    tpu.vector_store %arg15[%c12_91, %c0_92], %93 {strides = array<i32>} : memref<150x595xf32, #tpu.memory_space<vmem>>, vector<6x595xf32>,
    %95 = vector.extract_strided_slice %88 {offsets = [0, 6], sizes = [6, 595], strides = [1, 1]} : vector<6x859xf32> to vector<6x595xf32>
    %c18_93 = arith.constant 18 : index
    %c0_94 = arith.constant 0 : index
    %96 = vector.load %arg15[%c18_93, %c0_94] : memref<150x595xf32, #tpu.memory_space<vmem>>, vector<6x595xf32>
    tpu.vector_store %arg15[%c18_93, %c0_94], %95 {strides = array<i32>} : memref<150x595xf32, #tpu.memory_space<vmem>>, vector<6x595xf32>,
    %97 = vector.extract_strided_slice %88 {offsets = [0, 8], sizes = [6, 595], strides = [1, 1]} : vector<6x859xf32> to vector<6x595xf32>
    %c24_95 = arith.constant 24 : index
    %c0_96 = arith.constant 0 : index
    %98 = vector.load %arg15[%c24_95, %c0_96] : memref<150x595xf32, #tpu.memory_space<vmem>>, vector<6x595xf32>
    tpu.vector_store %arg15[%c24_95, %c0_96], %97 {strides = array<i32>} : memref<150x595xf32, #tpu.memory_space<vmem>>, vector<6x595xf32>,
    %99 = vector.extract_strided_slice %88 {offsets = [0, 64], sizes = [6, 595], strides = [1, 1]} : vector<6x859xf32> to vector<6x595xf32>
    %c30_97 = arith.constant 30 : index
    %c0_98 = arith.constant 0 : index
    %100 = vector.load %arg15[%c30_97, %c0_98] : memref<150x595xf32, #tpu.memory_space<vmem>>, vector<6x595xf32>
    tpu.vector_store %arg15[%c30_97, %c0_98], %99 {strides = array<i32>} : memref<150x595xf32, #tpu.memory_space<vmem>>, vector<6x595xf32>,
    %101 = vector.extract_strided_slice %88 {offsets = [0, 66], sizes = [6, 595], strides = [1, 1]} : vector<6x859xf32> to vector<6x595xf32>
    %c36_99 = arith.constant 36 : index
    %c0_100 = arith.constant 0 : index
    %102 = vector.load %arg15[%c36_99, %c0_100] : memref<150x595xf32, #tpu.memory_space<vmem>>, vector<6x595xf32>
    tpu.vector_store %arg15[%c36_99, %c0_100], %101 {strides = array<i32>} : memref<150x595xf32, #tpu.memory_space<vmem>>, vector<6x595xf32>,
    %103 = vector.extract_strided_slice %88 {offsets = [0, 68], sizes = [6, 595], strides = [1, 1]} : vector<6x859xf32> to vector<6x595xf32>
    %c42_101 = arith.constant 42 : index
    %c0_102 = arith.constant 0 : index
    %104 = vector.load %arg15[%c42_101, %c0_102] : memref<150x595xf32, #tpu.memory_space<vmem>>, vector<6x595xf32>
    tpu.vector_store %arg15[%c42_101, %c0_102], %103 {strides = array<i32>} : memref<150x595xf32, #tpu.memory_space<vmem>>, vector<6x595xf32>,
    %105 = vector.extract_strided_slice %88 {offsets = [0, 70], sizes = [6, 595], strides = [1, 1]} : vector<6x859xf32> to vector<6x595xf32>
    %c48_103 = arith.constant 48 : index
    %c0_104 = arith.constant 0 : index
    %106 = vector.load %arg15[%c48_103, %c0_104] : memref<150x595xf32, #tpu.memory_space<vmem>>, vector<6x595xf32>
    tpu.vector_store %arg15[%c48_103, %c0_104], %105 {strides = array<i32>} : memref<150x595xf32, #tpu.memory_space<vmem>>, vector<6x595xf32>,
    %107 = vector.extract_strided_slice %88 {offsets = [0, 72], sizes = [6, 595], strides = [1, 1]} : vector<6x859xf32> to vector<6x595xf32>
    %c54_105 = arith.constant 54 : index
    %c0_106 = arith.constant 0 : index
    %108 = vector.load %arg15[%c54_105, %c0_106] : memref<150x595xf32, #tpu.memory_space<vmem>>, vector<6x595xf32>
    tpu.vector_store %arg15[%c54_105, %c0_106], %107 {strides = array<i32>} : memref<150x595xf32, #tpu.memory_space<vmem>>, vector<6x595xf32>,
    %109 = vector.extract_strided_slice %88 {offsets = [0, 128], sizes = [6, 595], strides = [1, 1]} : vector<6x859xf32> to vector<6x595xf32>
    %c60_107 = arith.constant 60 : index
    %c0_108 = arith.constant 0 : index
    %110 = vector.load %arg15[%c60_107, %c0_108] : memref<150x595xf32, #tpu.memory_space<vmem>>, vector<6x595xf32>
    tpu.vector_store %arg15[%c60_107, %c0_108], %109 {strides = array<i32>} : memref<150x595xf32, #tpu.memory_space<vmem>>, vector<6x595xf32>,
    %111 = vector.extract_strided_slice %88 {offsets = [0, 130], sizes = [6, 595], strides = [1, 1]} : vector<6x859xf32> to vector<6x595xf32>
    %c66_109 = arith.constant 66 : index
    %c0_110 = arith.constant 0 : index
    %112 = vector.load %arg15[%c66_109, %c0_110] : memref<150x595xf32, #tpu.memory_space<vmem>>, vector<6x595xf32>
    tpu.vector_store %arg15[%c66_109, %c0_110], %111 {strides = array<i32>} : memref<150x595xf32, #tpu.memory_space<vmem>>, vector<6x595xf32>,
    %113 = vector.extract_strided_slice %88 {offsets = [0, 132], sizes = [6, 595], strides = [1, 1]} : vector<6x859xf32> to vector<6x595xf32>
    %c72_111 = arith.constant 72 : index
    %c0_112 = arith.constant 0 : index
    %114 = vector.load %arg15[%c72_111, %c0_112] : memref<150x595xf32, #tpu.memory_space<vmem>>, vector<6x595xf32>
    tpu.vector_store %arg15[%c72_111, %c0_112], %113 {strides = array<i32>} : memref<150x595xf32, #tpu.memory_space<vmem>>, vector<6x595xf32>,
    %115 = vector.extract_strided_slice %88 {offsets = [0, 134], sizes = [6, 595], strides = [1, 1]} : vector<6x859xf32> to vector<6x595xf32>
    %c78 = arith.constant 78 : index
    %c0_113 = arith.constant 0 : index
    %116 = vector.load %arg15[%c78, %c0_113] : memref<150x595xf32, #tpu.memory_space<vmem>>, vector<6x595xf32>
    tpu.vector_store %arg15[%c78, %c0_113], %115 {strides = array<i32>} : memref<150x595xf32, #tpu.memory_space<vmem>>, vector<6x595xf32>,
    %117 = vector.extract_strided_slice %88 {offsets = [0, 136], sizes = [6, 595], strides = [1, 1]} : vector<6x859xf32> to vector<6x595xf32>
    %c84 = arith.constant 84 : index
    %c0_114 = arith.constant 0 : index
    %118 = vector.load %arg15[%c84, %c0_114] : memref<150x595xf32, #tpu.memory_space<vmem>>, vector<6x595xf32>
    tpu.vector_store %arg15[%c84, %c0_114], %117 {strides = array<i32>} : memref<150x595xf32, #tpu.memory_space<vmem>>, vector<6x595xf32>,
    %119 = vector.extract_strided_slice %88 {offsets = [0, 192], sizes = [6, 595], strides = [1, 1]} : vector<6x859xf32> to vector<6x595xf32>
    %c90 = arith.constant 90 : index
    %c0_115 = arith.constant 0 : index
    %120 = vector.load %arg15[%c90, %c0_115] : memref<150x595xf32, #tpu.memory_space<vmem>>, vector<6x595xf32>
    tpu.vector_store %arg15[%c90, %c0_115], %119 {strides = array<i32>} : memref<150x595xf32, #tpu.memory_space<vmem>>, vector<6x595xf32>,
    %121 = vector.extract_strided_slice %88 {offsets = [0, 194], sizes = [6, 595], strides = [1, 1]} : vector<6x859xf32> to vector<6x595xf32>
    %c96_116 = arith.constant 96 : index
    %c0_117 = arith.constant 0 : index
    %122 = vector.load %arg15[%c96_116, %c0_117] : memref<150x595xf32, #tpu.memory_space<vmem>>, vector<6x595xf32>
    tpu.vector_store %arg15[%c96_116, %c0_117], %121 {strides = array<i32>} : memref<150x595xf32, #tpu.memory_space<vmem>>, vector<6x595xf32>,
    %123 = vector.extract_strided_slice %88 {offsets = [0, 196], sizes = [6, 595], strides = [1, 1]} : vector<6x859xf32> to vector<6x595xf32>
    %c102 = arith.constant 102 : index
    %c0_118 = arith.constant 0 : index
    %124 = vector.load %arg15[%c102, %c0_118] : memref<150x595xf32, #tpu.memory_space<vmem>>, vector<6x595xf32>
    tpu.vector_store %arg15[%c102, %c0_118], %123 {strides = array<i32>} : memref<150x595xf32, #tpu.memory_space<vmem>>, vector<6x595xf32>,
    %125 = vector.extract_strided_slice %88 {offsets = [0, 198], sizes = [6, 595], strides = [1, 1]} : vector<6x859xf32> to vector<6x595xf32>
    %c108 = arith.constant 108 : index
    %c0_119 = arith.constant 0 : index
    %126 = vector.load %arg15[%c108, %c0_119] : memref<150x595xf32, #tpu.memory_space<vmem>>, vector<6x595xf32>
    tpu.vector_store %arg15[%c108, %c0_119], %125 {strides = array<i32>} : memref<150x595xf32, #tpu.memory_space<vmem>>, vector<6x595xf32>,
    %127 = vector.extract_strided_slice %88 {offsets = [0, 200], sizes = [6, 595], strides = [1, 1]} : vector<6x859xf32> to vector<6x595xf32>
    %c114 = arith.constant 114 : index
    %c0_120 = arith.constant 0 : index
    %128 = vector.load %arg15[%c114, %c0_120] : memref<150x595xf32, #tpu.memory_space<vmem>>, vector<6x595xf32>
    tpu.vector_store %arg15[%c114, %c0_120], %127 {strides = array<i32>} : memref<150x595xf32, #tpu.memory_space<vmem>>, vector<6x595xf32>,
    %129 = vector.extract_strided_slice %88 {offsets = [0, 256], sizes = [6, 595], strides = [1, 1]} : vector<6x859xf32> to vector<6x595xf32>
    %c120 = arith.constant 120 : index
    %c0_121 = arith.constant 0 : index
    %130 = vector.load %arg15[%c120, %c0_121] : memref<150x595xf32, #tpu.memory_space<vmem>>, vector<6x595xf32>
    tpu.vector_store %arg15[%c120, %c0_121], %129 {strides = array<i32>} : memref<150x595xf32, #tpu.memory_space<vmem>>, vector<6x595xf32>,
    %131 = vector.extract_strided_slice %88 {offsets = [0, 258], sizes = [6, 595], strides = [1, 1]} : vector<6x859xf32> to vector<6x595xf32>
    %c126 = arith.constant 126 : index
    %c0_122 = arith.constant 0 : index
    %132 = vector.load %arg15[%c126, %c0_122] : memref<150x595xf32, #tpu.memory_space<vmem>>, vector<6x595xf32>
    tpu.vector_store %arg15[%c126, %c0_122], %131 {strides = array<i32>} : memref<150x595xf32, #tpu.memory_space<vmem>>, vector<6x595xf32>,
    %133 = vector.extract_strided_slice %88 {offsets = [0, 260], sizes = [6, 595], strides = [1, 1]} : vector<6x859xf32> to vector<6x595xf32>
    %c132_123 = arith.constant 132 : index
    %c0_124 = arith.constant 0 : index
    %134 = vector.load %arg15[%c132_123, %c0_124] : memref<150x595xf32, #tpu.memory_space<vmem>>, vector<6x595xf32>
    tpu.vector_store %arg15[%c132_123, %c0_124], %133 {strides = array<i32>} : memref<150x595xf32, #tpu.memory_space<vmem>>, vector<6x595xf32>,
    %135 = vector.extract_strided_slice %88 {offsets = [0, 262], sizes = [6, 595], strides = [1, 1]} : vector<6x859xf32> to vector<6x595xf32>
    %c138 = arith.constant 138 : index
    %c0_125 = arith.constant 0 : index
    %136 = vector.load %arg15[%c138, %c0_125] : memref<150x595xf32, #tpu.memory_space<vmem>>, vector<6x595xf32>
    tpu.vector_store %arg15[%c138, %c0_125], %135 {strides = array<i32>} : memref<150x595xf32, #tpu.memory_space<vmem>>, vector<6x595xf32>,
    %137 = vector.extract_strided_slice %88 {offsets = [0, 264], sizes = [6, 595], strides = [1, 1]} : vector<6x859xf32> to vector<6x595xf32>
    %c144 = arith.constant 144 : index
    %c0_126 = arith.constant 0 : index
    %138 = vector.load %arg15[%c144, %c0_126] : memref<150x595xf32, #tpu.memory_space<vmem>>, vector<6x595xf32>
    tpu.vector_store %arg15[%c144, %c0_126], %137 {strides = array<i32>} : memref<150x595xf32, #tpu.memory_space<vmem>>, vector<6x595xf32>,
    %c0_127 = arith.constant 0 : index
    %c0_128 = arith.constant 0 : index
    %139 = vector.load %arg4[%c0_127, %c0_128] : memref<16x150xf32, #tpu.memory_space<vmem>>, vector<16x150xf32>
    %c0_129 = arith.constant 0 : index
    %c0_130 = arith.constant 0 : index
    %140 = vector.load %arg15[%c0_129, %c0_130] : memref<150x595xf32, #tpu.memory_space<vmem>>, vector<150x595xf32>
    %cst_131 = arith.constant dense<0.000000e+00> : vector<16x595xf32>
    %141 = tpu.matmul %139, %140, %cst_131 {dimension_numbers = #tpu.dot_dimension_numbers<[1], [0], [0], [1], [0, 0, 1, 1], [], []>} : vector<16x150xf32>, vector<150x595xf32>, vector<16x595xf32> -> vector<16x595xf32>
    %c0_132 = arith.constant 0 : index
    %c0_133 = arith.constant 0 : index
    %142 = vector.load %arg5[%c0_132, %c0_133] : memref<16x1xf32, #tpu.memory_space<vmem>>, vector<16x1xf32>
    %143 = vector.broadcast %142 : vector<16x1xf32> to vector<16x595xf32>
    %144 = arith.addf %141, %143 : vector<16x595xf32>
    %cst_134 = arith.constant 0.000000e+00 : f32
    %145 = vector.broadcast %cst_134 : f32 to vector<16x595xf32>
    %146 = arith.maximumf %144, %145 : vector<16x595xf32>
    %147 = vector.extract_strided_slice %146 {offsets = [0, 0], sizes = [16, 593], strides = [1, 1]} : vector<16x595xf32> to vector<16x593xf32>
    %148 = vector.extract_strided_slice %146 {offsets = [0, 2], sizes = [16, 593], strides = [1, 1]} : vector<16x595xf32> to vector<16x593xf32>
    %149 = arith.maximumf %147, %148 : vector<16x593xf32>
    %150 = vector.extract_strided_slice %149 {offsets = [0, 0], sizes = [16, 529], strides = [1, 1]} : vector<16x593xf32> to vector<16x529xf32>
    %151 = vector.extract_strided_slice %149 {offsets = [0, 64], sizes = [16, 529], strides = [1, 1]} : vector<16x593xf32> to vector<16x529xf32>
    %152 = arith.maximumf %150, %151 : vector<16x529xf32>
    %c0_135 = arith.constant 0 : index
    %c0_136 = arith.constant 0 : index
    %153 = vector.load %arg6[%c0_135, %c0_136] : memref<529x25xf32, #tpu.memory_space<vmem>>, vector<529x25xf32>
    %cst_137 = arith.constant dense<0.000000e+00> : vector<16x25xf32>
    %154 = tpu.matmul %152, %153, %cst_137 {dimension_numbers = #tpu.dot_dimension_numbers<[1], [0], [0], [1], [0, 0, 1, 1], [], []>} : vector<16x529xf32>, vector<529x25xf32>, vector<16x25xf32> -> vector<16x25xf32>
    %155 = vector.extract_strided_slice %154 {offsets = [0, 0], sizes = [1, 25], strides = [1, 1]} : vector<16x25xf32> to vector<1x25xf32>
    %c0_138 = arith.constant 0 : index
    %c0_139 = arith.constant 0 : index
    %156 = vector.load %arg16[%c0_138, %c0_139] : memref<1x400xf32, #tpu.memory_space<vmem>>, vector<1x25xf32>
    tpu.vector_store %arg16[%c0_138, %c0_139], %155 {strides = array<i32>} : memref<1x400xf32, #tpu.memory_space<vmem>>, vector<1x25xf32>,
    %157 = vector.extract_strided_slice %154 {offsets = [1, 0], sizes = [1, 25], strides = [1, 1]} : vector<16x25xf32> to vector<1x25xf32>
    %c0_140 = arith.constant 0 : index
    %c25 = arith.constant 25 : index
    %158 = vector.load %arg16[%c0_140, %c25] : memref<1x400xf32, #tpu.memory_space<vmem>>, vector<1x25xf32>
    tpu.vector_store %arg16[%c0_140, %c25], %157 {strides = array<i32>} : memref<1x400xf32, #tpu.memory_space<vmem>>, vector<1x25xf32>,
    %159 = vector.extract_strided_slice %154 {offsets = [2, 0], sizes = [1, 25], strides = [1, 1]} : vector<16x25xf32> to vector<1x25xf32>
    %c0_141 = arith.constant 0 : index
    %c50 = arith.constant 50 : index
    %160 = vector.load %arg16[%c0_141, %c50] : memref<1x400xf32, #tpu.memory_space<vmem>>, vector<1x25xf32>
    tpu.vector_store %arg16[%c0_141, %c50], %159 {strides = array<i32>} : memref<1x400xf32, #tpu.memory_space<vmem>>, vector<1x25xf32>,
    %161 = vector.extract_strided_slice %154 {offsets = [3, 0], sizes = [1, 25], strides = [1, 1]} : vector<16x25xf32> to vector<1x25xf32>
    %c0_142 = arith.constant 0 : index
    %c75 = arith.constant 75 : index
    %162 = vector.load %arg16[%c0_142, %c75] : memref<1x400xf32, #tpu.memory_space<vmem>>, vector<1x25xf32>
    tpu.vector_store %arg16[%c0_142, %c75], %161 {strides = array<i32>} : memref<1x400xf32, #tpu.memory_space<vmem>>, vector<1x25xf32>,
    %163 = vector.extract_strided_slice %154 {offsets = [4, 0], sizes = [1, 25], strides = [1, 1]} : vector<16x25xf32> to vector<1x25xf32>
    %c0_143 = arith.constant 0 : index
    %c100_144 = arith.constant 100 : index
    %164 = vector.load %arg16[%c0_143, %c100_144] : memref<1x400xf32, #tpu.memory_space<vmem>>, vector<1x25xf32>
    tpu.vector_store %arg16[%c0_143, %c100_144], %163 {strides = array<i32>} : memref<1x400xf32, #tpu.memory_space<vmem>>, vector<1x25xf32>,
    %165 = vector.extract_strided_slice %154 {offsets = [5, 0], sizes = [1, 25], strides = [1, 1]} : vector<16x25xf32> to vector<1x25xf32>
    %c0_145 = arith.constant 0 : index
    %c125 = arith.constant 125 : index
    %166 = vector.load %arg16[%c0_145, %c125] : memref<1x400xf32, #tpu.memory_space<vmem>>, vector<1x25xf32>
    tpu.vector_store %arg16[%c0_145, %c125], %165 {strides = array<i32>} : memref<1x400xf32, #tpu.memory_space<vmem>>, vector<1x25xf32>,
    %167 = vector.extract_strided_slice %154 {offsets = [6, 0], sizes = [1, 25], strides = [1, 1]} : vector<16x25xf32> to vector<1x25xf32>
    %c0_146 = arith.constant 0 : index
    %c150 = arith.constant 150 : index
    %168 = vector.load %arg16[%c0_146, %c150] : memref<1x400xf32, #tpu.memory_space<vmem>>, vector<1x25xf32>
    tpu.vector_store %arg16[%c0_146, %c150], %167 {strides = array<i32>} : memref<1x400xf32, #tpu.memory_space<vmem>>, vector<1x25xf32>,
    %169 = vector.extract_strided_slice %154 {offsets = [7, 0], sizes = [1, 25], strides = [1, 1]} : vector<16x25xf32> to vector<1x25xf32>
    %c0_147 = arith.constant 0 : index
    %c175 = arith.constant 175 : index
    %170 = vector.load %arg16[%c0_147, %c175] : memref<1x400xf32, #tpu.memory_space<vmem>>, vector<1x25xf32>
    tpu.vector_store %arg16[%c0_147, %c175], %169 {strides = array<i32>} : memref<1x400xf32, #tpu.memory_space<vmem>>, vector<1x25xf32>,
    %171 = vector.extract_strided_slice %154 {offsets = [8, 0], sizes = [1, 25], strides = [1, 1]} : vector<16x25xf32> to vector<1x25xf32>
    %c0_148 = arith.constant 0 : index
    %c200 = arith.constant 200 : index
    %172 = vector.load %arg16[%c0_148, %c200] : memref<1x400xf32, #tpu.memory_space<vmem>>, vector<1x25xf32>
    tpu.vector_store %arg16[%c0_148, %c200], %171 {strides = array<i32>} : memref<1x400xf32, #tpu.memory_space<vmem>>, vector<1x25xf32>,
    %173 = vector.extract_strided_slice %154 {offsets = [9, 0], sizes = [1, 25], strides = [1, 1]} : vector<16x25xf32> to vector<1x25xf32>
    %c0_149 = arith.constant 0 : index
    %c225 = arith.constant 225 : index
    %174 = vector.load %arg16[%c0_149, %c225] : memref<1x400xf32, #tpu.memory_space<vmem>>, vector<1x25xf32>
    tpu.vector_store %arg16[%c0_149, %c225], %173 {strides = array<i32>} : memref<1x400xf32, #tpu.memory_space<vmem>>, vector<1x25xf32>,
    %175 = vector.extract_strided_slice %154 {offsets = [10, 0], sizes = [1, 25], strides = [1, 1]} : vector<16x25xf32> to vector<1x25xf32>
    %c0_150 = arith.constant 0 : index
    %c250 = arith.constant 250 : index
    %176 = vector.load %arg16[%c0_150, %c250] : memref<1x400xf32, #tpu.memory_space<vmem>>, vector<1x25xf32>
    tpu.vector_store %arg16[%c0_150, %c250], %175 {strides = array<i32>} : memref<1x400xf32, #tpu.memory_space<vmem>>, vector<1x25xf32>,
    %177 = vector.extract_strided_slice %154 {offsets = [11, 0], sizes = [1, 25], strides = [1, 1]} : vector<16x25xf32> to vector<1x25xf32>
    %c0_151 = arith.constant 0 : index
    %c275 = arith.constant 275 : index
    %178 = vector.load %arg16[%c0_151, %c275] : memref<1x400xf32, #tpu.memory_space<vmem>>, vector<1x25xf32>
    tpu.vector_store %arg16[%c0_151, %c275], %177 {strides = array<i32>} : memref<1x400xf32, #tpu.memory_space<vmem>>, vector<1x25xf32>,
    %179 = vector.extract_strided_slice %154 {offsets = [12, 0], sizes = [1, 25], strides = [1, 1]} : vector<16x25xf32> to vector<1x25xf32>
    %c0_152 = arith.constant 0 : index
    %c300 = arith.constant 300 : index
    %180 = vector.load %arg16[%c0_152, %c300] : memref<1x400xf32, #tpu.memory_space<vmem>>, vector<1x25xf32>
    tpu.vector_store %arg16[%c0_152, %c300], %179 {strides = array<i32>} : memref<1x400xf32, #tpu.memory_space<vmem>>, vector<1x25xf32>,
    %181 = vector.extract_strided_slice %154 {offsets = [13, 0], sizes = [1, 25], strides = [1, 1]} : vector<16x25xf32> to vector<1x25xf32>
    %c0_153 = arith.constant 0 : index
    %c325 = arith.constant 325 : index
    %182 = vector.load %arg16[%c0_153, %c325] : memref<1x400xf32, #tpu.memory_space<vmem>>, vector<1x25xf32>
    tpu.vector_store %arg16[%c0_153, %c325], %181 {strides = array<i32>} : memref<1x400xf32, #tpu.memory_space<vmem>>, vector<1x25xf32>,
    %183 = vector.extract_strided_slice %154 {offsets = [14, 0], sizes = [1, 25], strides = [1, 1]} : vector<16x25xf32> to vector<1x25xf32>
    %c0_154 = arith.constant 0 : index
    %c350 = arith.constant 350 : index
    %184 = vector.load %arg16[%c0_154, %c350] : memref<1x400xf32, #tpu.memory_space<vmem>>, vector<1x25xf32>
    tpu.vector_store %arg16[%c0_154, %c350], %183 {strides = array<i32>} : memref<1x400xf32, #tpu.memory_space<vmem>>, vector<1x25xf32>,
    %185 = vector.extract_strided_slice %154 {offsets = [15, 0], sizes = [1, 25], strides = [1, 1]} : vector<16x25xf32> to vector<1x25xf32>
    %c0_155 = arith.constant 0 : index
    %c375 = arith.constant 375 : index
    %186 = vector.load %arg16[%c0_155, %c375] : memref<1x400xf32, #tpu.memory_space<vmem>>, vector<1x25xf32>
    tpu.vector_store %arg16[%c0_155, %c375], %185 {strides = array<i32>} : memref<1x400xf32, #tpu.memory_space<vmem>>, vector<1x25xf32>,
    %c0_156 = arith.constant 0 : index
    %c0_157 = arith.constant 0 : index
    %187 = vector.load %arg16[%c0_156, %c0_157] : memref<1x400xf32, #tpu.memory_space<vmem>>, vector<1x400xf32>
    %c0_158 = arith.constant 0 : index
    %c0_159 = arith.constant 0 : index
    %188 = vector.load %arg7[%c0_158, %c0_159] : memref<400x100xf32, #tpu.memory_space<vmem>>, vector<400x100xf32>
    %cst_160 = arith.constant dense<0.000000e+00> : vector<1x100xf32>
    %189 = tpu.matmul %187, %188, %cst_160 {dimension_numbers = #tpu.dot_dimension_numbers<[1], [0], [0], [1], [0, 0, 1, 1], [], []>} : vector<1x400xf32>, vector<400x100xf32>, vector<1x100xf32> -> vector<1x100xf32>
    %c0_161 = arith.constant 0 : index
    %c0_162 = arith.constant 0 : index
    %190 = vector.load %arg8[%c0_161, %c0_162] : memref<1x100xf32, #tpu.memory_space<vmem>>, vector<1x100xf32>
    %191 = arith.addf %189, %190 : vector<1x100xf32>
    %cst_163 = arith.constant 0.000000e+00 : f32
    %192 = vector.broadcast %cst_163 : f32 to vector<1x100xf32>
    %193 = arith.maximumf %191, %192 : vector<1x100xf32>
    %c0_164 = arith.constant 0 : index
    %c0_165 = arith.constant 0 : index
    %194 = vector.load %arg9[%c0_164, %c0_165] : memref<100x100xf32, #tpu.memory_space<vmem>>, vector<100x100xf32>
    %cst_166 = arith.constant dense<0.000000e+00> : vector<1x100xf32>
    %195 = tpu.matmul %193, %194, %cst_166 {dimension_numbers = #tpu.dot_dimension_numbers<[1], [0], [0], [1], [0, 0, 1, 1], [], []>} : vector<1x100xf32>, vector<100x100xf32>, vector<1x100xf32> -> vector<1x100xf32>
    %c0_167 = arith.constant 0 : index
    %c0_168 = arith.constant 0 : index
    %196 = vector.load %arg10[%c0_167, %c0_168] : memref<1x100xf32, #tpu.memory_space<vmem>>, vector<1x100xf32>
    %197 = arith.addf %195, %196 : vector<1x100xf32>
    %cst_169 = arith.constant 0.000000e+00 : f32
    %198 = vector.broadcast %cst_169 : f32 to vector<1x100xf32>
    %199 = arith.maximumf %197, %198 : vector<1x100xf32>
    %c0_170 = arith.constant 0 : index
    %c0_171 = arith.constant 0 : index
    %200 = vector.load %arg11[%c0_170, %c0_171] : memref<100x10xf32, #tpu.memory_space<vmem>>, vector<100x10xf32>
    %cst_172 = arith.constant dense<0.000000e+00> : vector<1x10xf32>
    %201 = tpu.matmul %199, %200, %cst_172 {dimension_numbers = #tpu.dot_dimension_numbers<[1], [0], [0], [1], [0, 0, 1, 1], [], []>} : vector<1x100xf32>, vector<100x10xf32>, vector<1x10xf32> -> vector<1x10xf32>
    %c0_173 = arith.constant 0 : index
    %c0_174 = arith.constant 0 : index
    %202 = vector.load %arg12[%c0_173, %c0_174] : memref<1x10xf32, #tpu.memory_space<vmem>>, vector<1x10xf32>
    %203 = arith.addf %201, %202 : vector<1x10xf32>
    %c0_175 = arith.constant 0 : index
    %c0_176 = arith.constant 0 : index
    %c0_177 = arith.constant 0 : index
    %204 = vector.load %arg13[%c0_175, %c0_176, %c0_177] : memref<1x1x10xf32, #tpu.memory_space<vmem>>, vector<1x1x10xf32>
    %205 = vector.shape_cast %204 : vector<1x1x10xf32> to vector<1x10xf32>
    %206 = vector.shape_cast %203 : vector<1x10xf32> to vector<1x1x10xf32>
    tpu.vector_store %arg13[%c0_175, %c0_176, %c0_177], %206 {strides = array<i32>} : memref<1x1x10xf32, #tpu.memory_space<vmem>>, vector<1x1x10xf32>,
    return
  }
  func.func @transform_0(%arg0: i32) -> (i32, i32, i32) {
    %c0_i32 = arith.constant 0 : i32
    %c0_i32_0 = arith.constant 0 : i32
    %c0_i32_1 = arith.constant 0 : i32
    return %arg0, %c0_i32, %c0_i32_0 : i32, i32, i32
  }
  func.func @transform_1(%arg0: i32) -> (i32, i32) {
    %c0_i32 = arith.constant 0 : i32
    %c0_i32_0 = arith.constant 0 : i32
    %c0_i32_1 = arith.constant 0 : i32
    return %c0_i32, %c0_i32_0 : i32, i32
  }
  func.func @transform_2(%arg0: i32) -> (i32, i32) {
    %c0_i32 = arith.constant 0 : i32
    %c0_i32_0 = arith.constant 0 : i32
    %c0_i32_1 = arith.constant 0 : i32
    return %c0_i32, %c0_i32_0 : i32, i32
  }
  func.func @transform_3(%arg0: i32) -> (i32, i32) {
    %c0_i32 = arith.constant 0 : i32
    %c0_i32_0 = arith.constant 0 : i32
    %c0_i32_1 = arith.constant 0 : i32
    return %c0_i32, %c0_i32_0 : i32, i32
  }
  func.func @transform_4(%arg0: i32) -> (i32, i32) {
    %c0_i32 = arith.constant 0 : i32
    %c0_i32_0 = arith.constant 0 : i32
    %c0_i32_1 = arith.constant 0 : i32
    return %c0_i32, %c0_i32_0 : i32, i32
  }
  func.func @transform_5(%arg0: i32) -> (i32, i32) {
    %c0_i32 = arith.constant 0 : i32
    %c0_i32_0 = arith.constant 0 : i32
    %c0_i32_1 = arith.constant 0 : i32
    return %c0_i32, %c0_i32_0 : i32, i32
  }
  func.func @transform_6(%arg0: i32) -> (i32, i32) {
    %c0_i32 = arith.constant 0 : i32
    %c0_i32_0 = arith.constant 0 : i32
    %c0_i32_1 = arith.constant 0 : i32
    return %c0_i32, %c0_i32_0 : i32, i32
  }
  func.func @transform_7(%arg0: i32) -> (i32, i32) {
    %c0_i32 = arith.constant 0 : i32
    %c0_i32_0 = arith.constant 0 : i32
    %c0_i32_1 = arith.constant 0 : i32
    return %c0_i32, %c0_i32_0 : i32, i32
  }
  func.func @transform_8(%arg0: i32) -> (i32, i32) {
    %c0_i32 = arith.constant 0 : i32
    %c0_i32_0 = arith.constant 0 : i32
    %c0_i32_1 = arith.constant 0 : i32
    return %c0_i32, %c0_i32_0 : i32, i32
  }
  func.func @transform_9(%arg0: i32) -> (i32, i32) {
    %c0_i32 = arith.constant 0 : i32
    %c0_i32_0 = arith.constant 0 : i32
    %c0_i32_1 = arith.constant 0 : i32
    return %c0_i32, %c0_i32_0 : i32, i32
  }
  func.func @transform_10(%arg0: i32) -> (i32, i32) {
    %c0_i32 = arith.constant 0 : i32
    %c0_i32_0 = arith.constant 0 : i32
    %c0_i32_1 = arith.constant 0 : i32
    return %c0_i32, %c0_i32_0 : i32, i32
  }
  func.func @transform_11(%arg0: i32) -> (i32, i32) {
    %c0_i32 = arith.constant 0 : i32
    %c0_i32_0 = arith.constant 0 : i32
    %c0_i32_1 = arith.constant 0 : i32
    return %c0_i32, %c0_i32_0 : i32, i32
  }
  func.func @transform_12(%arg0: i32) -> (i32, i32, i32) {
    %c0_i32 = arith.constant 0 : i32
    %c0_i32_0 = arith.constant 0 : i32
    %c0_i32_1 = arith.constant 0 : i32
    return %arg0, %c0_i32, %c0_i32_0 : i32, i32, i32
  }
}

</mosaic_0001>

<llo_original>
// kernel: convnet_forward.1
$region0: #{convnet_forward.1}
  #allocation0 [shape = 'u32[]', space=smem, size = 0x4, offset = 0x4, fixed_abs, tag = 'smem constant byte address 0x4 - core index']
  #allocation1 [shape = 'u32[144,128]{1,0:T(1,128)}', space=vmem, size = 0x12000, scoped, tag = 'internal scratch']
  #allocation2 [shape = 'f32[75,892]{1,0:T(8,128)}', space=vmem, size = 0x46000, scoped, tag = 'scratch operand']
  #allocation3 [shape = 'f32[150,595]{1,0:T(8,128)}', space=vmem, size = 0x5f000, scoped, tag = 'scratch operand']
  #allocation4 [shape = 'f32[1,400]{1,0:T(1,128)}', space=vmem, size = 0x800, scoped, tag = 'scratch operand']
  %s0 = inlined_call_operand.vmem [shape: f32[2,3,1024], index: 0, kind: input, shape index: {}]
  %s1 = inlined_call_operand.vmem [shape: f32[6,75], index: 1, kind: input, shape index: {}]
  %s2 = inlined_call_operand.vmem [shape: f32[6,1], index: 2, kind: input, shape index: {}]
  %s3 = inlined_call_operand.vmem [shape: f32[16,150], index: 3, kind: input, shape index: {}]
  %s4 = inlined_call_operand.vmem [shape: f32[16,1], index: 4, kind: input, shape index: {}]
  %s5 = inlined_call_operand.vmem [shape: f32[529,25], index: 5, kind: input, shape index: {}]
  %s6 = inlined_call_operand.vmem [shape: f32[400,100], index: 6, kind: input, shape index: {}]
  %s7 = inlined_call_operand.vmem [shape: f32[1,100], index: 7, kind: input, shape index: {}]
  %s8 = inlined_call_operand.hbm [shape: f32[100,100], index: 8, kind: input, shape index: {}]
  %s9 = inlined_call_operand.vmem [shape: f32[1,100], index: 9, kind: input, shape index: {}]
  %s10 = inlined_call_operand.vmem [shape: f32[100,10], index: 10, kind: input, shape index: {}]
  %s11 = inlined_call_operand.vmem [shape: f32[1,10], index: 11, kind: input, shape index: {}]
  %s12 = inlined_call_operand.hbm [shape: f32[2,1,10], index: 12, kind: output, shape index: {}]
  %s13 = sld [smem:[#allocation0]]
  $region85: #{convnet_forward.1} parent=0
    _
  %s15 = ssub.s32 1, %s13
  %s16 = scalar_select 0, %s15, %s13
  $region1: #{convnet_forward.1} parent=0
    #allocation5 [shape = 'u8[53248]{0}', space=vmem, size = 0xd000, scoped, tag = 'input window, operand 8, single buffered']
    #allocation6 [shape = 's32[2]{0}', space=sflag, size = 0x8, scoped, tag = 'scoped memory for convnet_forward.1']
    #allocation7 [shape = 's32[2]{0}', space=sflag, size = 0x8, scoped, tag = 'scoped memory for convnet_forward.1']
    #allocation8 [shape = 'u8[1024]{0}', space=vmem, size = 0x400, scoped, tag = 'output window, operand 0']
    %17 = vsyncpa [#allocation6], 0
    %18 = vsyncpa [#allocation7], 0
    %s19 = scalar_lea.sflag [#allocation7], 1
    %20 = vsyncpa %s19, 0
    loop: start=0, step=1, limit=4
    $region2: #{convnet_forward.1} parent=1 // loop_pre_header
      _
    $region3: #{convnet_forward.1} parent=1 // loop_header
      %s22 = sphi 0, %s26
      %p23 = scmp.ge.s32.totalorder %s22, 4
      %s32 = sphi 0, %s34
      %s35 = sphi 0, %s32
      %s36 = sphi 0, %s35
      %s52 = sphi 0, %s36
      %s56 = sphi 0, %s56
      %s58 = sphi 0, %s56
      %s59 = sphi 0, %s58
      %s73 = sphi 0, %s59
      %s77 = sphi 0, %s77
      %s79 = sphi 0, %s77
      %s80 = sphi 0, %s79
      %s94 = sphi 0, %s80
      %s98 = sphi 0, %s98
      %s100 = sphi 0, %s98
      %s101 = sphi 0, %s100
      %s115 = sphi 0, %s101
      %s119 = sphi 0, %s119
      %s121 = sphi 0, %s119
      %s122 = sphi 0, %s121
      %s136 = sphi 0, %s122
      %s140 = sphi 0, %s140
      %s142 = sphi 0, %s140
      %s143 = sphi 0, %s142
      %s157 = sphi 0, %s143
      %s161 = sphi 0, %s161
      %s163 = sphi 0, %s161
      %s164 = sphi 0, %s163
      %s178 = sphi 0, %s164
      %s182 = sphi 0, %s182
      %s184 = sphi 0, %s182
      %s185 = sphi 0, %s184
      %s199 = sphi 0, %s185
      %s203 = sphi 0, %s203
      %s205 = sphi 0, %s203
      %s206 = sphi 0, %s205
      %s220 = sphi 0, %s206
      %s224 = sphi 0, %s224
      %s226 = sphi 0, %s224
      %s227 = sphi 0, %s226
      %s241 = sphi 0, %s227
      %s245 = sphi 0, %s245
      %s247 = sphi 0, %s245
      %s248 = sphi 0, %s247
      %s262 = sphi 0, %s248
      %s266 = sphi 0, %s266
      %s268 = sphi 0, %s266
      %s269 = sphi 0, %s268
      %s283 = sphi 0, %s269
      %s289 = sphi 0, %s291
      %s292 = sphi 0, %s289
      %s293 = sphi 0, %s292
      %s309 = sphi 0, %s293
    $region4: #{convnet_forward.1} parent=1 // loop_header_branch
      %25 = sbr.rel (%p23) target = $region8
    $region5: #{convnet_forward.1} parent=1 // loop_body
      %s27 = ssub.s32 %s22, 1
      %s28 = ssub.s32 %s22, 2
      %s29 = sadd.s32 %s22, 1
      %s30 = ssub.s32 %s22, %s29
      %p31 = scmp.eq.s32.totalorder %s30, 0
      %s33 = sadd.s32 %s32, 1
      %s34 = scalar_select %p31, %s32, %s33
      %p37 = pneg %p31
      %p38 = scmp.eq.s32.totalorder %s22, 1
      %p39 = por %p37, %p38
      %p40 = scmp.ne.s32.totalorder %s32, %s35
      %p41 = scmp.eq.s32.totalorder %s22, 0
      %p42 = por %p40, %p41
      %p43 = scmp.ne.s32.totalorder %s32, %s35
      %p44 = scmp.eq.s32.totalorder %s27, 1
      %p45 = por %p43, %p44
      %p46 = scmp.ne.s32.totalorder %s35, %s36
      %p47 = scmp.eq.s32.totalorder %s27, 0
      %p48 = por %p46, %p47
      %p49 = scmp.ne.s32.totalorder %s35, %s36
      %p50 = scmp.eq.s32.totalorder %s28, 1
      %p51 = por %p49, %p50
      %p53 = scmp.ne.s32.totalorder %s36, %s52
      %p54 = scmp.eq.s32.totalorder %s28, 0
      %p55 = por %p53, %p54
      %s57 = sadd.s32 %s56, 1
      %p60 = scmp.eq.s32.totalorder %s22, 1
      %p61 = scmp.ne.s32.totalorder %s56, %s58
      %p62 = scmp.eq.s32.totalorder %s22, 0
      %p63 = por %p61, %p62
      %p64 = scmp.ne.s32.totalorder %s56, %s58
      %p65 = scmp.eq.s32.totalorder %s27, 1
      %p66 = por %p64, %p65
      %p67 = scmp.ne.s32.totalorder %s58, %s59
      %p68 = scmp.eq.s32.totalorder %s27, 0
      %p69 = por %p67, %p68
      %p70 = scmp.ne.s32.totalorder %s58, %s59
      %p71 = scmp.eq.s32.totalorder %s28, 1
      %p72 = por %p70, %p71
      %p74 = scmp.ne.s32.totalorder %s59, %s73
      %p75 = scmp.eq.s32.totalorder %s28, 0
      %p76 = por %p74, %p75
      %s78 = sadd.s32 %s77, 1
      %p81 = scmp.eq.s32.totalorder %s22, 1
      %p82 = scmp.ne.s32.totalorder %s77, %s79
      %p83 = scmp.eq.s32.totalorder %s22, 0
      %p84 = por %p82, %p83
      %p85 = scmp.ne.s32.totalorder %s77, %s79
      %p86 = scmp.eq.s32.totalorder %s27, 1
      %p87 = por %p85, %p86
      %p88 = scmp.ne.s32.totalorder %s79, %s80
      %p89 = scmp.eq.s32.totalorder %s27, 0
      %p90 = por %p88, %p89
      %p91 = scmp.ne.s32.totalorder %s79, %s80
      %p92 = scmp.eq.s32.totalorder %s28, 1
      %p93 = por %p91, %p92
      %p95 = scmp.ne.s32.totalorder %s80, %s94
      %p96 = scmp.eq.s32.totalorder %s28, 0
      %p97 = por %p95, %p96
      %s99 = sadd.s32 %s98, 1
      %p102 = scmp.eq.s32.totalorder %s22, 1
      %p103 = scmp.ne.s32.totalorder %s98, %s100
      %p104 = scmp.eq.s32.totalorder %s22, 0
      %p105 = por %p103, %p104
      %p106 = scmp.ne.s32.totalorder %s98, %s100
      %p107 = scmp.eq.s32.totalorder %s27, 1
      %p108 = por %p106, %p107
      %p109 = scmp.ne.s32.totalorder %s100, %s101
      %p110 = scmp.eq.s32.totalorder %s27, 0
      %p111 = por %p109, %p110
      %p112 = scmp.ne.s32.totalorder %s100, %s101
      %p113 = scmp.eq.s32.totalorder %s28, 1
      %p114 = por %p112, %p113
      %p116 = scmp.ne.s32.totalorder %s101, %s115
      %p117 = scmp.eq.s32.totalorder %s28, 0
      %p118 = por %p116, %p117
      %s120 = sadd.s32 %s119, 1
      %p123 = scmp.eq.s32.totalorder %s22, 1
      %p124 = scmp.ne.s32.totalorder %s119, %s121
      %p125 = scmp.eq.s32.totalorder %s22, 0
      %p126 = por %p124, %p125
      %p127 = scmp.ne.s32.totalorder %s119, %s121
      %p128 = scmp.eq.s32.totalorder %s27, 1
      %p129 = por %p127, %p128
      %p130 = scmp.ne.s32.totalorder %s121, %s122
      %p131 = scmp.eq.s32.totalorder %s27, 0
      %p132 = por %p130, %p131
      %p133 = scmp.ne.s32.totalorder %s121, %s122
      %p134 = scmp.eq.s32.totalorder %s28, 1
      %p135 = por %p133, %p134
      %p137 = scmp.ne.s32.totalorder %s122, %s136
      %p138 = scmp.eq.s32.totalorder %s28, 0
      %p139 = por %p137, %p138
      %s141 = sadd.s32 %s140, 1
      %p144 = scmp.eq.s32.totalorder %s22, 1
      %p145 = scmp.ne.s32.totalorder %s140, %s142
      %p146 = scmp.eq.s32.totalorder %s22, 0
      %p147 = por %p145, %p146
      %p148 = scmp.ne.s32.totalorder %s140, %s142
      %p149 = scmp.eq.s32.totalorder %s27, 1
      %p150 = por %p148, %p149
      %p151 = scmp.ne.s32.totalorder %s142, %s143
      %p152 = scmp.eq.s32.totalorder %s27, 0
      %p153 = por %p151, %p152
      %p154 = scmp.ne.s32.totalorder %s142, %s143
      %p155 = scmp.eq.s32.totalorder %s28, 1
      %p156 = por %p154, %p155
      %p158 = scmp.ne.s32.totalorder %s143, %s157
      %p159 = scmp.eq.s32.totalorder %s28, 0
      %p160 = por %p158, %p159
      %s162 = sadd.s32 %s161, 1
      %p165 = scmp.eq.s32.totalorder %s22, 1
      %p166 = scmp.ne.s32.totalorder %s161, %s163
      %p167 = scmp.eq.s32.totalorder %s22, 0
      %p168 = por %p166, %p167
      %p169 = scmp.ne.s32.totalorder %s161, %s163
      %p170 = scmp.eq.s32.totalorder %s27, 1
      %p171 = por %p169, %p170
      %p172 = scmp.ne.s32.totalorder %s163, %s164
      %p173 = scmp.eq.s32.totalorder %s27, 0
      %p174 = por %p172, %p173
      %p175 = scmp.ne.s32.totalorder %s163, %s164
      %p176 = scmp.eq.s32.totalorder %s28, 1
      %p177 = por %p175, %p176
      %p179 = scmp.ne.s32.totalorder %s164, %s178
      %p180 = scmp.eq.s32.totalorder %s28, 0
      %p181 = por %p179, %p180
      %s183 = sadd.s32 %s182, 1
      %p186 = scmp.eq.s32.totalorder %s22, 1
      %p187 = scmp.ne.s32.totalorder %s182, %s184
      %p188 = scmp.eq.s32.totalorder %s22, 0
      %p189 = por %p187, %p188
      %p190 = scmp.ne.s32.totalorder %s182, %s184
      %p191 = scmp.eq.s32.totalorder %s27, 1
      %p192 = por %p190, %p191
      %p193 = scmp.ne.s32.totalorder %s184, %s185
      %p194 = scmp.eq.s32.totalorder %s27, 0
      %p195 = por %p193, %p194
      %p196 = scmp.ne.s32.totalorder %s184, %s185
      %p197 = scmp.eq.s32.totalorder %s28, 1
      %p198 = por %p196, %p197
      %p200 = scmp.ne.s32.totalorder %s185, %s199
      %p201 = scmp.eq.s32.totalorder %s28, 0
      %p202 = por %p200, %p201
      %s204 = sadd.s32 %s203, 1
      %p207 = scmp.eq.s32.totalorder %s22, 1
      %p208 = scmp.ne.s32.totalorder %s203, %s205
      %p209 = scmp.eq.s32.totalorder %s22, 0
      %p210 = por %p208, %p209
      %p211 = scmp.ne.s32.totalorder %s203, %s205
      %p212 = scmp.eq.s32.totalorder %s27, 1
      %p213 = por %p211, %p212
      %p214 = scmp.ne.s32.totalorder %s205, %s206
      %p215 = scmp.eq.s32.totalorder %s27, 0
      %p216 = por %p214, %p215
      %p217 = scmp.ne.s32.totalorder %s205, %s206
      %p218 = scmp.eq.s32.totalorder %s28, 1
      %p219 = por %p217, %p218
      %p221 = scmp.ne.s32.totalorder %s206, %s220
      %p222 = scmp.eq.s32.totalorder %s28, 0
      %p223 = por %p221, %p222
      %s225 = sadd.s32 %s224, 1
      %p228 = scmp.eq.s32.totalorder %s22, 1
      %p229 = scmp.ne.s32.totalorder %s224, %s226
      %p230 = scmp.eq.s32.totalorder %s22, 0
      %p231 = por %p229, %p230
      %p232 = scmp.ne.s32.totalorder %s224, %s226
      %p233 = scmp.eq.s32.totalorder %s27, 1
      %p234 = por %p232, %p233
      %p235 = scmp.ne.s32.totalorder %s226, %s227
      %p236 = scmp.eq.s32.totalorder %s27, 0
      %p237 = por %p235, %p236
      %p238 = scmp.ne.s32.totalorder %s226, %s227
      %p239 = scmp.eq.s32.totalorder %s28, 1
      %p240 = por %p238, %p239
      %p242 = scmp.ne.s32.totalorder %s227, %s241
      %p243 = scmp.eq.s32.totalorder %s28, 0
      %p244 = por %p242, %p243
      %s246 = sadd.s32 %s245, 1
      %p249 = scmp.eq.s32.totalorder %s22, 1
      %p250 = scmp.ne.s32.totalorder %s245, %s247
      %p251 = scmp.eq.s32.totalorder %s22, 0
      %p252 = por %p250, %p251
      %p253 = scmp.ne.s32.totalorder %s245, %s247
      %p254 = scmp.eq.s32.totalorder %s27, 1
      %p255 = por %p253, %p254
      %p256 = scmp.ne.s32.totalorder %s247, %s248
      %p257 = scmp.eq.s32.totalorder %s27, 0
      %p258 = por %p256, %p257
      %p259 = scmp.ne.s32.totalorder %s247, %s248
      %p260 = scmp.eq.s32.totalorder %s28, 1
      %p261 = por %p259, %p260
      %p263 = scmp.ne.s32.totalorder %s248, %s262
      %p264 = scmp.eq.s32.totalorder %s28, 0
      %p265 = por %p263, %p264
      %s267 = sadd.s32 %s266, 1
      %p270 = scmp.eq.s32.totalorder %s22, 1
      %p271 = scmp.ne.s32.totalorder %s266, %s268
      %p272 = scmp.eq.s32.totalorder %s22, 0
      %p273 = por %p271, %p272
      %p274 = scmp.ne.s32.totalorder %s266, %s268
      %p275 = scmp.eq.s32.totalorder %s27, 1
      %p276 = por %p274, %p275
      %p277 = scmp.ne.s32.totalorder %s268, %s269
      %p278 = scmp.eq.s32.totalorder %s27, 0
      %p279 = por %p277, %p278
      %p280 = scmp.ne.s32.totalorder %s268, %s269
      %p281 = scmp.eq.s32.totalorder %s28, 1
      %p282 = por %p280, %p281
      %p284 = scmp.ne.s32.totalorder %s269, %s283
      %p285 = scmp.eq.s32.totalorder %s28, 0
      %p286 = por %p284, %p285
      %s287 = ssub.s32 %s22, %s29
      %p288 = scmp.eq.s32.totalorder %s287, 0
      %s290 = sadd.s32 %s289, 1
      %s291 = scalar_select %p288, %s289, %s290
      %p294 = pneg %p288
      %p295 = scmp.eq.s32.totalorder %s22, 1
      %p296 = por %p294, %p295
      %p297 = scmp.ne.s32.totalorder %s289, %s292
      %p298 = scmp.eq.s32.totalorder %s22, 0
      %p299 = por %p297, %p298
      %p300 = scmp.ne.s32.totalorder %s289, %s292
      %p301 = scmp.eq.s32.totalorder %s27, 1
      %p302 = por %p300, %p301
      %p303 = scmp.ne.s32.totalorder %s292, %s293
      %p304 = scmp.eq.s32.totalorder %s27, 0
      %p305 = por %p303, %p304
      %p306 = scmp.ne.s32.totalorder %s292, %s293
      %p307 = scmp.eq.s32.totalorder %s28, 1
      %p308 = por %p306, %p307
      %p310 = scmp.ne.s32.totalorder %s293, %s309
      %p311 = scmp.eq.s32.totalorder %s28, 0
      %p312 = por %p310, %p311
      %p313 = scmp.le.s32.totalorder 1, %s22
      %p314 = scmp.lt.s32.totalorder %s22, 3
      %p315 = pnand %p313, %p314
      %p316 = pneg %p315
      // Predicated region
      $region9: #{convnet_forward.1} parent=5 // pred_check
        _
      $region10: #{convnet_forward.1} parent=5 // pred_check_branch
        %318 = sbr.rel (%p315) target = $region12
      $region11: #{convnet_forward.1} parent=5 // pred_region
        %s319 = ssub.s32 %s22, 1
        // Predicated region
        $region13: #{convnet_forward.1} parent=11 // pred_check
          %p320 = pneg %p69
        $region14: #{convnet_forward.1} parent=11 // pred_check_branch
          %322 = sbr.rel (%p320) target = $region16
        $region15: #{convnet_forward.1} parent=11 // pred_region
          _
        $region16: #{convnet_forward.1} parent=11 // pred_fallthru
          _
        // Predicated region
        $region17: #{convnet_forward.1} parent=11 // pred_check
          %p323 = pneg %p90
        $region18: #{convnet_forward.1} parent=11 // pred_check_branch
          %325 = sbr.rel (%p323) target = $region20
        $region19: #{convnet_forward.1} parent=11 // pred_region
          _
        $region20: #{convnet_forward.1} parent=11 // pred_fallthru
          _
        // Predicated region
        $region21: #{convnet_forward.1} parent=11 // pred_check
          %p326 = pneg %p111
        $region22: #{convnet_forward.1} parent=11 // pred_check_branch
          %328 = sbr.rel (%p326) target = $region24
        $region23: #{convnet_forward.1} parent=11 // pred_region
          _
        $region24: #{convnet_forward.1} parent=11 // pred_fallthru
          _
        // Predicated region
        $region25: #{convnet_forward.1} parent=11 // pred_check
          %p329 = pneg %p132
        $region26: #{convnet_forward.1} parent=11 // pred_check_branch
          %331 = sbr.rel (%p329) target = $region28
        $region27: #{convnet_forward.1} parent=11 // pred_region
          _
        $region28: #{convnet_forward.1} parent=11 // pred_fallthru
          _
        // Predicated region
        $region29: #{convnet_forward.1} parent=11 // pred_check
          %p332 = pneg %p153
        $region30: #{convnet_forward.1} parent=11 // pred_check_branch
          %334 = sbr.rel (%p332) target = $region32
        $region31: #{convnet_forward.1} parent=11 // pred_region
          _
        $region32: #{convnet_forward.1} parent=11 // pred_fallthru
          _
        // Predicated region
        $region33: #{convnet_forward.1} parent=11 // pred_check
          %p335 = pneg %p174
        $region34: #{convnet_forward.1} parent=11 // pred_check_branch
          %337 = sbr.rel (%p335) target = $region36
        $region35: #{convnet_forward.1} parent=11 // pred_region
          _
        $region36: #{convnet_forward.1} parent=11 // pred_fallthru
          _
        // Predicated region
        $region37: #{convnet_forward.1} parent=11 // pred_check
          %p338 = pneg %p195
        $region38: #{convnet_forward.1} parent=11 // pred_check_branch
          %340 = sbr.rel (%p338) target = $region40
        $region39: #{convnet_forward.1} parent=11 // pred_region
          _
        $region40: #{convnet_forward.1} parent=11 // pred_fallthru
          _
        // Predicated region
        $region41: #{convnet_forward.1} parent=11 // pred_check
          %p341 = pneg %p216
        $region42: #{convnet_forward.1} parent=11 // pred_check_branch
          %343 = sbr.rel (%p341) target = $region44
        $region43: #{convnet_forward.1} parent=11 // pred_region
          %s345 = ssub.s32 1664, 1664
          %346 = vsyncadd [#allocation6], %s345
          %s347 = sshll.u32 [#allocation5], 4
          %s348 = int_to_ptr.vmem [resolvable:$true] %s347
          %353 = dma.hbm_to_vmem [thread:$0]  %s8, 1664, %s348, [#allocation6], 128, 128, 8
        $region44: #{convnet_forward.1} parent=11 // pred_fallthru
          _
        // Predicated region
        $region45: #{convnet_forward.1} parent=11 // pred_check
          %p354 = pneg %p237
        $region46: #{convnet_forward.1} parent=11 // pred_check_branch
          %356 = sbr.rel (%p354) target = $region48
        $region47: #{convnet_forward.1} parent=11 // pred_region
          _
        $region48: #{convnet_forward.1} parent=11 // pred_fallthru
          _
        // Predicated region
        $region49: #{convnet_forward.1} parent=11 // pred_check
          %p357 = pneg %p258
        $region50: #{convnet_forward.1} parent=11 // pred_check_branch
          %359 = sbr.rel (%p357) target = $region52
        $region51: #{convnet_forward.1} parent=11 // pred_region
          _
        $region52: #{convnet_forward.1} parent=11 // pred_fallthru
          _
        // Predicated region
        $region53: #{convnet_forward.1} parent=11 // pred_check
          %p360 = pneg %p279
        $region54: #{convnet_forward.1} parent=11 // pred_check_branch
          %362 = sbr.rel (%p360) target = $region56
        $region55: #{convnet_forward.1} parent=11 // pred_region
          _
        $region56: #{convnet_forward.1} parent=11 // pred_fallthru
          _
      $region12: #{convnet_forward.1} parent=5 // pred_fallthru
        _
      %p363 = scmp.lt.s32.totalorder %s22, 2
      // Predicated region
      $region57: #{convnet_forward.1} parent=5 // pred_check
        %p364 = pneg %p363
      $region58: #{convnet_forward.1} parent=5 // pred_check_branch
        %366 = sbr.rel (%p364) target = $region60
      $region59: #{convnet_forward.1} parent=5 // pred_region
        // Predicated region
        $region61: #{convnet_forward.1} parent=59 // pred_check
          %p367 = pneg %p42
        $region62: #{convnet_forward.1} parent=59 // pred_check_branch
          %369 = sbr.rel (%p367) target = $region64
        $region63: #{convnet_forward.1} parent=59 // pred_region
          %p370 = scmp.lt.s32.totalorder %s22, 1
          %s371 = scalar_select %p370, %s22, 1
          %s372 = smul.addr %s371, 8
          %s373 = smul.addr %s372, 4
          %s374 = scalar_lea.vmem %s0, %s373
        $region64: #{convnet_forward.1} parent=59 // pred_fallthru
          _
      $region60: #{convnet_forward.1} parent=5 // pred_fallthru
        _
      %p375 = scmp.le.s32.totalorder 1, %s22
      %p376 = scmp.lt.s32.totalorder %s22, 3
      %p377 = pnand %p375, %p376
      %p378 = pneg %p377
      // Predicated region
      $region65: #{convnet_forward.1} parent=5 // pred_check
        _
      $region66: #{convnet_forward.1} parent=5 // pred_check_branch
        %380 = sbr.rel (%p377) target = $region68
      $region67: #{convnet_forward.1} parent=5 // pred_region
        %s381 = ssub.s32 %s22, 1
        // Predicated region
        $region69: #{convnet_forward.1} parent=67 // pred_check
          %p382 = pneg %p216
        $region70: #{convnet_forward.1} parent=67 // pred_check_branch
          %384 = sbr.rel (%p382) target = $region72
        $region71: #{convnet_forward.1} parent=67 // pred_region
          %385 = dma.done [#allocation6], 1664
        $region72: #{convnet_forward.1} parent=67 // pred_fallthru
          _
        %p386 = scmp.lt.s32.totalorder %s27, 1
        %s387 = scalar_select %p386, %s27, 1
        %s388 = smul.addr %s387, 8
        %s389 = smul.addr %s388, 4
        %s390 = scalar_lea.vmem %s0, %s389
        %p391 = pneg %p48
        %p392 = pneg %p45
        %p393 = pneg %p69
        %p394 = pneg %p66
        %p395 = pneg %p90
        %p396 = pneg %p87
        %p397 = pneg %p111
        %p398 = pneg %p108
        %p399 = pneg %p132
        %p400 = pneg %p129
        %p401 = pneg %p153
        %p402 = pneg %p150
        %p403 = pneg %p174
        %p404 = pneg %p171
        %p405 = pneg %p195
        %p406 = pneg %p192
        %p407 = pneg %p216
        %p408 = pneg %p213
        %p409 = pneg %p237
        %p410 = pneg %p234
        %p411 = pneg %p258
        %p412 = pneg %p255
        %p413 = pneg %p279
        %p414 = pneg %p276
        %p415 = pneg %p305
        %p416 = pneg %p302
        %s417 = sand.u32 %s292, 1
        %s418 = scalar_lea.sflag [#allocation7], %s417
        %s419 = sand.u32 %s292, 1
        %s420 = scalar_lea.vmem [#allocation8], %s419
        %p421 = scmp.lt.s32.totalorder %s27, 1
        %s422 = scalar_select %p421, %s27, 1
        %s423 = smul.addr %s422, 8
        %s424 = smul.addr %s423, 4
        %s425 = scalar_lea.vmem %s0, %s424
        %v426 = vld [vmem:[%s425] sm:$0x77]
        %v427 = vld [vmem:[%s425 + $0x8] sm:$0x77]
        %v428 = vld [vmem:[%s425 + $0x10] sm:$0x77]
        %v429 = vld [vmem:[%s425 + $0x18] sm:$0x7]
        %v433 = vcombine.high %v426, %v426
        %v434 = vcombine.high %v427, %v427
        %v435 = vcombine.high %v428, %v428
        %439 = vst [vmem:[#allocation2] sm:$0x7] %v426
        %440 = vst [vmem:[#allocation2 + $0x8] sm:$0x7] %v433
        %441 = vst [vmem:[#allocation2 + $0x10] sm:$0x7] %v427
        %442 = vst [vmem:[#allocation2 + $0x18] sm:$0x7] %v434
        %443 = vst [vmem:[#allocation2 + $0x20] sm:$0x7] %v428
        %444 = vst [vmem:[#allocation2 + $0x28] sm:$0x7] %v435
        %vm445 = vcmask 1009664
        %446 = vst.msk [vmem:[#allocation2 + $0x30] sm:$0x7] %vm445, %v429
        %v447 = vld [vmem:[%s425] sm:$0x77]
        %v448 = vld [vmem:[%s425 + $0x8] sm:$0x77]
        %v449 = vld [vmem:[%s425 + $0x10] sm:$0x77]
        %v450 = vld [vmem:[%s425 + $0x18] sm:$0x7]
        %v455 = vcombine.high %v447, %v447
        %v456 = vcombine.high %v448, %v448
        %v457 = vcombine.high %v449, %v449
        %v458 = vrot.slane %v447, 5
        %v459 = vrot.slane %v455, 5
        %v460 = vrot.slane %v448, 5
        %v461 = vrot.slane %v456, 5
        %v462 = vrot.slane %v449, 5
        %v463 = vrot.slane %v457, 5
        %v464 = vrot.slane %v450, 5
        %465 = vrot.lane.b32.xlu0 %v458, 127
        %v466 = vpop.permute.xlu0 %465
        %467 = vrot.lane.b32.xlu0 %v459, 127
        %v468 = vpop.permute.xlu0 %467
        %469 = vrot.lane.b32.xlu0 %v460, 127
        %v470 = vpop.permute.xlu0 %469
        %471 = vrot.lane.b32.xlu0 %v461, 127
        %v472 = vpop.permute.xlu0 %471
        %473 = vrot.lane.b32.xlu0 %v462, 127
        %v474 = vpop.permute.xlu0 %473
        %475 = vrot.lane.b32.xlu0 %v463, 127
        %v476 = vpop.permute.xlu0 %475
        %477 = vrot.lane.b32.xlu0 %v464, 127
        %v478 = vpop.permute.xlu0 %477
        %vm479 = vcmask 1039360
        %v480 = vsel %vm479, %v466, %v468
        %v481 = vsel %vm479, %v468, %v470
        %v482 = vsel %vm479, %v470, %v472
        %v483 = vsel %vm479, %v472, %v474
        %v484 = vsel %vm479, %v474, %v476
        %v485 = vsel %vm479, %v476, %v478
        %493 = vst [vmem:[#allocation2] sm:$0x38] %v480
        %494 = vst [vmem:[#allocation2 + $0x8] sm:$0x38] %v481
        %495 = vst [vmem:[#allocation2 + $0x10] sm:$0x38] %v482
        %496 = vst [vmem:[#allocation2 + $0x18] sm:$0x38] %v483
        %497 = vst [vmem:[#allocation2 + $0x20] sm:$0x38] %v484
        %498 = vst [vmem:[#allocation2 + $0x28] sm:$0x38] %v485
        %vm499 = vcmask 1012739
        %500 = vst.msk [vmem:[#allocation2 + $0x30] sm:$0x38] %vm499, %v478
        %v501 = vld [vmem:[%s425] sm:$0x77]
        %v502 = vld [vmem:[%s425 + $0x8] sm:$0x77]
        %v503 = vld [vmem:[%s425 + $0x10] sm:$0x77]
        %v504 = vld [vmem:[%s425 + $0x18] sm:$0x7]
        %v509 = vcombine.high %v501, %v501
        %v510 = vcombine.high %v502, %v502
        %v511 = vcombine.high %v503, %v503
        %v512 = vrot.slane %v501, 2
        %v513 = vrot.slane %v509, 2
        %v514 = vrot.slane %v502, 2
        %v515 = vrot.slane %v510, 2
        %v516 = vrot.slane %v503, 2
        %v517 = vrot.slane %v511, 2
        %v518 = vrot.slane %v504, 2
        %519 = vrot.lane.b32.xlu0 %v512, 126
        %v520 = vpop.permute.xlu0 %519
        %521 = vrot.lane.b32.xlu0 %v513, 126
        %v522 = vpop.permute.xlu0 %521
        %523 = vrot.lane.b32.xlu0 %v514, 126
        %v524 = vpop.permute.xlu0 %523
        %525 = vrot.lane.b32.xlu0 %v515, 126
        %v526 = vpop.permute.xlu0 %525
        %527 = vrot.lane.b32.xlu0 %v516, 126
        %v528 = vpop.permute.xlu0 %527
        %529 = vrot.lane.b32.xlu0 %v517, 126
        %v530 = vpop.permute.xlu0 %529
        %531 = vrot.lane.b32.xlu0 %v518, 126
        %v532 = vpop.permute.xlu0 %531
        %vm533 = vcmask 1031168
        %v534 = vsel %vm533, %v520, %v522
        %v535 = vsel %vm533, %v522, %v524
        %v536 = vsel %vm533, %v524, %v526
        %v537 = vsel %vm533, %v526, %v528
        %v538 = vsel %vm533, %v528, %v530
        %v539 = vsel %vm533, %v530, %v532
        %547 = vst [vmem:[#allocation2] sm:$0xc0] %v534
        %548 = vst [vmem:[#allocation2 + $0x8] sm:$0xc0] %v535
        %549 = vst [vmem:[#allocation2 + $0x10] sm:$0xc0] %v536
        %550 = vst [vmem:[#allocation2 + $0x18] sm:$0xc0] %v537
        %551 = vst [vmem:[#allocation2 + $0x20] sm:$0xc0] %v538
        %552 = vst [vmem:[#allocation2 + $0x28] sm:$0xc0] %v539
        %vm553 = vcmask 1014790
        %554 = vst.msk [vmem:[#allocation2 + $0x30] sm:$0xc0] %vm553, %v532
        %555 = vst [vmem:[#allocation2 + $0x38] sm:$0x1] %v534
        %556 = vst [vmem:[#allocation2 + $0x40] sm:$0x1] %v535
        %557 = vst [vmem:[#allocation2 + $0x48] sm:$0x1] %v536
        %558 = vst [vmem:[#allocation2 + $0x50] sm:$0x1] %v537
        %559 = vst [vmem:[#allocation2 + $0x58] sm:$0x1] %v538
        %560 = vst [vmem:[#allocation2 + $0x60] sm:$0x1] %v539
        %vm561 = vcmask 1007616
        %562 = vst.msk [vmem:[#allocation2 + $0x68] sm:$0x1] %vm561, %v532
        %v563 = vld [vmem:[%s425] sm:$0x77]
        %v564 = vld [vmem:[%s425 + $0x8] sm:$0x77]
        %v565 = vld [vmem:[%s425 + $0x10] sm:$0x77]
        %v566 = vld [vmem:[%s425 + $0x18] sm:$0x7]
        %v571 = vcombine.high %v563, %v563
        %v572 = vcombine.high %v564, %v564
        %v573 = vcombine.high %v565, %v565
        %v574 = vrot.slane %v563, 7
        %v575 = vrot.slane %v571, 7
        %v576 = vrot.slane %v564, 7
        %v577 = vrot.slane %v572, 7
        %v578 = vrot.slane %v565, 7
        %v579 = vrot.slane %v573, 7
        %v580 = vrot.slane %v566, 7
        %581 = vrot.lane.b32.xlu0 %v574, 125
        %v582 = vpop.permute.xlu0 %581
        %583 = vrot.lane.b32.xlu0 %v575, 125
        %v584 = vpop.permute.xlu0 %583
        %585 = vrot.lane.b32.xlu0 %v576, 125
        %v586 = vpop.permute.xlu0 %585
        %587 = vrot.lane.b32.xlu0 %v577, 125
        %v588 = vpop.permute.xlu0 %587
        %589 = vrot.lane.b32.xlu0 %v578, 125
        %v590 = vpop.permute.xlu0 %589
        %591 = vrot.lane.b32.xlu0 %v579, 125
        %v592 = vpop.permute.xlu0 %591
        %593 = vrot.lane.b32.xlu0 %v580, 125
        %v594 = vpop.permute.xlu0 %593
        %vm595 = vcmask 1022976
        %v596 = vsel %vm595, %v582, %v584
        %v597 = vsel %vm595, %v584, %v586
        %v598 = vsel %vm595, %v586, %v588
        %v599 = vsel %vm595, %v588, %v590
        %v600 = vsel %vm595, %v590, %v592
        %v601 = vsel %vm595, %v592, %v594
        %609 = vst [vmem:[#allocation2 + $0x38] sm:$0xe] %v596
        %610 = vst [vmem:[#allocation2 + $0x40] sm:$0xe] %v597
        %611 = vst [vmem:[#allocation2 + $0x48] sm:$0xe] %v598
        %612 = vst [vmem:[#allocation2 + $0x50] sm:$0xe] %v599
        %613 = vst [vmem:[#allocation2 + $0x58] sm:$0xe] %v600
        %614 = vst [vmem:[#allocation2 + $0x60] sm:$0xe] %v601
        %vm615 = vcmask 1010689
        %616 = vst.msk [vmem:[#allocation2 + $0x68] sm:$0xe] %vm615, %v594
        %v617 = vld [vmem:[%s425] sm:$0x77]
        %v618 = vld [vmem:[%s425 + $0x8] sm:$0x77]
        %v619 = vld [vmem:[%s425 + $0x10] sm:$0x77]
        %v620 = vld [vmem:[%s425 + $0x18] sm:$0x7]
        %v625 = vcombine.low %v617, %v617
        %v626 = vcombine.low %v618, %v618
        %v627 = vcombine.low %v619, %v619
        %v628 = vcombine.low %v620, %v620
        %629 = vrot.lane.b32.xlu0 %v625, 124
        %v630 = vpop.permute.xlu0 %629
        %631 = vrot.lane.b32.xlu0 %v617, 124
        %v632 = vpop.permute.xlu0 %631
        %633 = vrot.lane.b32.xlu0 %v626, 124
        %v634 = vpop.permute.xlu0 %633
        %635 = vrot.lane.b32.xlu0 %v618, 124
        %v636 = vpop.permute.xlu0 %635
        %637 = vrot.lane.b32.xlu0 %v627, 124
        %v638 = vpop.permute.xlu0 %637
        %639 = vrot.lane.b32.xlu0 %v619, 124
        %v640 = vpop.permute.xlu0 %639
        %641 = vrot.lane.b32.xlu0 %v628, 124
        %v642 = vpop.permute.xlu0 %641
        %vm643 = vcmask 1014784
        %v644 = vsel %vm643, %v630, %v632
        %v645 = vsel %vm643, %v632, %v634
        %v646 = vsel %vm643, %v634, %v636
        %v647 = vsel %vm643, %v636, %v638
        %v648 = vsel %vm643, %v638, %v640
        %v649 = vsel %vm643, %v640, %v642
        %657 = vst [vmem:[#allocation2 + $0x38] sm:$0x70] %v644
        %658 = vst [vmem:[#allocation2 + $0x40] sm:$0x70] %v645
        %659 = vst [vmem:[#allocation2 + $0x48] sm:$0x70] %v646
        %660 = vst [vmem:[#allocation2 + $0x50] sm:$0x70] %v647
        %661 = vst [vmem:[#allocation2 + $0x58] sm:$0x70] %v648
        %662 = vst [vmem:[#allocation2 + $0x60] sm:$0x70] %v649
        %vm663 = vcmask 1013764
        %664 = vst.msk [vmem:[#allocation2 + $0x68] sm:$0x70] %vm663, %v642
        %v665 = vld [vmem:[%s425] sm:$0x77]
        %v666 = vld [vmem:[%s425 + $0x8] sm:$0x77]
        %v667 = vld [vmem:[%s425 + $0x10] sm:$0x77]
        %v668 = vld [vmem:[%s425 + $0x18] sm:$0x77]
        %v673 = vcombine.high %v665, %v665
        %v674 = vcombine.high %v666, %v666
        %v675 = vcombine.high %v667, %v667
        %v676 = vcombine.high %v668, %v668
        %v677 = vrot.slane %v665, 1
        %v678 = vrot.slane %v673, 1
        %v679 = vrot.slane %v666, 1
        %v680 = vrot.slane %v674, 1
        %v681 = vrot.slane %v667, 1
        %v682 = vrot.slane %v675, 1
        %v683 = vrot.slane %v668, 1
        %v684 = vrot.slane %v676, 1
        %685 = vrot.lane.b32.xlu0 %v677, 96
        %v686 = vpop.permute.xlu0 %685
        %687 = vrot.lane.b32.xlu0 %v678, 96
        %v688 = vpop.permute.xlu0 %687
        %689 = vrot.lane.b32.xlu0 %v679, 96
        %v690 = vpop.permute.xlu0 %689
        %691 = vrot.lane.b32.xlu0 %v680, 96
        %v692 = vpop.permute.xlu0 %691
        %693 = vrot.lane.b32.xlu0 %v681, 96
        %v694 = vpop.permute.xlu0 %693
        %695 = vrot.lane.b32.xlu0 %v682, 96
        %v696 = vpop.permute.xlu0 %695
        %697 = vrot.lane.b32.xlu0 %v683, 96
        %v698 = vpop.permute.xlu0 %697
        %699 = vrot.lane.b32.xlu0 %v684, 96
        %v700 = vpop.permute.xlu0 %699
        %vm701 = vcmask 785408
        %v702 = vsel %vm701, %v686, %v688
        %v703 = vsel %vm701, %v688, %v690
        %v704 = vsel %vm701, %v690, %v692
        %v705 = vsel %vm701, %v692, %v694
        %v706 = vsel %vm701, %v694, %v696
        %v707 = vsel %vm701, %v696, %v698
        %v708 = vsel %vm701, %v698, %v700
        %716 = vst [vmem:[#allocation2 + $0x38] sm:$0x80] %v702
        %717 = vst [vmem:[#allocation2 + $0x40] sm:$0x80] %v703
        %718 = vst [vmem:[#allocation2 + $0x48] sm:$0x80] %v704
        %719 = vst [vmem:[#allocation2 + $0x50] sm:$0x80] %v705
        %720 = vst [vmem:[#allocation2 + $0x58] sm:$0x80] %v706
        %721 = vst [vmem:[#allocation2 + $0x60] sm:$0x80] %v707
        %vm722 = vcmask 1014791
        %723 = vst.msk [vmem:[#allocation2 + $0x68] sm:$0x80] %vm722, %v708
        %724 = vst [vmem:[#allocation2 + $0x70] sm:$0x3] %v702
        %725 = vst [vmem:[#allocation2 + $0x78] sm:$0x3] %v703
        %726 = vst [vmem:[#allocation2 + $0x80] sm:$0x3] %v704
        %727 = vst [vmem:[#allocation2 + $0x88] sm:$0x3] %v705
        %728 = vst [vmem:[#allocation2 + $0x90] sm:$0x3] %v706
        %729 = vst [vmem:[#allocation2 + $0x98] sm:$0x3] %v707
        %vm730 = vcmask 1008640
        %731 = vst.msk [vmem:[#allocation2 + $0xa0] sm:$0x3] %vm730, %v708
        %v732 = vld [vmem:[%s425] sm:$0x77]
        %v733 = vld [vmem:[%s425 + $0x8] sm:$0x77]
        %v734 = vld [vmem:[%s425 + $0x10] sm:$0x77]
        %v735 = vld [vmem:[%s425 + $0x18] sm:$0x77]
        %v740 = vcombine.high %v732, %v732
        %v741 = vcombine.high %v733, %v733
        %v742 = vcombine.high %v734, %v734
        %v743 = vcombine.high %v735, %v735
        %v744 = vrot.slane %v732, 6
        %v745 = vrot.slane %v740, 6
        %v746 = vrot.slane %v733, 6
        %v747 = vrot.slane %v741, 6
        %v748 = vrot.slane %v734, 6
        %v749 = vrot.slane %v742, 6
        %v750 = vrot.slane %v735, 6
        %v751 = vrot.slane %v743, 6
        %752 = vrot.lane.b32.xlu0 %v744, 95
        %v753 = vpop.permute.xlu0 %752
        %754 = vrot.lane.b32.xlu0 %v745, 95
        %v755 = vpop.permute.xlu0 %754
        %756 = vrot.lane.b32.xlu0 %v746, 95
        %v757 = vpop.permute.xlu0 %756
        %758 = vrot.lane.b32.xlu0 %v747, 95
        %v759 = vpop.permute.xlu0 %758
        %760 = vrot.lane.b32.xlu0 %v748, 95
        %v761 = vpop.permute.xlu0 %760
        %762 = vrot.lane.b32.xlu0 %v749, 95
        %v763 = vpop.permute.xlu0 %762
        %764 = vrot.lane.b32.xlu0 %v750, 95
        %v765 = vpop.permute.xlu0 %764
        %766 = vrot.lane.b32.xlu0 %v751, 95
        %v767 = vpop.permute.xlu0 %766
        %vm768 = vcmask 777216
        %v769 = vsel %vm768, %v753, %v755
        %v770 = vsel %vm768, %v755, %v757
        %v771 = vsel %vm768, %v757, %v759
        %v772 = vsel %vm768, %v759, %v761
        %v773 = vsel %vm768, %v761, %v763
        %v774 = vsel %vm768, %v763, %v765
        %v775 = vsel %vm768, %v765, %v767
        %783 = vst [vmem:[#allocation2 + $0x70] sm:$0x1c] %v769
        %784 = vst [vmem:[#allocation2 + $0x78] sm:$0x1c] %v770
        %785 = vst [vmem:[#allocation2 + $0x80] sm:$0x1c] %v771
        %786 = vst [vmem:[#allocation2 + $0x88] sm:$0x1c] %v772
        %787 = vst [vmem:[#allocation2 + $0x90] sm:$0x1c] %v773
        %788 = vst [vmem:[#allocation2 + $0x98] sm:$0x1c] %v774
        %vm789 = vcmask 1011714
        %790 = vst.msk [vmem:[#allocation2 + $0xa0] sm:$0x1c] %vm789, %v775
        %v791 = vld [vmem:[%s425] sm:$0x77]
        %v792 = vld [vmem:[%s425 + $0x8] sm:$0x77]
        %v793 = vld [vmem:[%s425 + $0x10] sm:$0x77]
        %v794 = vld [vmem:[%s425 + $0x18] sm:$0x77]
        %v799 = vcombine.high %v791, %v791
        %v800 = vcombine.high %v792, %v792
        %v801 = vcombine.high %v793, %v793
        %v802 = vcombine.high %v794, %v794
        %v803 = vrot.slane %v791, 3
        %v804 = vrot.slane %v799, 3
        %v805 = vrot.slane %v792, 3
        %v806 = vrot.slane %v800, 3
        %v807 = vrot.slane %v793, 3
        %v808 = vrot.slane %v801, 3
        %v809 = vrot.slane %v794, 3
        %v810 = vrot.slane %v802, 3
        %811 = vrot.lane.b32.xlu0 %v803, 94
        %v812 = vpop.permute.xlu0 %811
        %813 = vrot.lane.b32.xlu0 %v804, 94
        %v814 = vpop.permute.xlu0 %813
        %815 = vrot.lane.b32.xlu0 %v805, 94
        %v816 = vpop.permute.xlu0 %815
        %817 = vrot.lane.b32.xlu0 %v806, 94
        %v818 = vpop.permute.xlu0 %817
        %819 = vrot.lane.b32.xlu0 %v807, 94
        %v820 = vpop.permute.xlu0 %819
        %821 = vrot.lane.b32.xlu0 %v808, 94
        %v822 = vpop.permute.xlu0 %821
        %823 = vrot.lane.b32.xlu0 %v809, 94
        %v824 = vpop.permute.xlu0 %823
        %825 = vrot.lane.b32.xlu0 %v810, 94
        %v826 = vpop.permute.xlu0 %825
        %vm827 = vcmask 769024
        %v828 = vsel %vm827, %v812, %v814
        %v829 = vsel %vm827, %v814, %v816
        %v830 = vsel %vm827, %v816, %v818
        %v831 = vsel %vm827, %v818, %v820
        %v832 = vsel %vm827, %v820, %v822
        %v833 = vsel %vm827, %v822, %v824
        %v834 = vsel %vm827, %v824, %v826
        %842 = vst [vmem:[#allocation2 + $0x70] sm:$0xe0] %v828
        %843 = vst [vmem:[#allocation2 + $0x78] sm:$0xe0] %v829
        %844 = vst [vmem:[#allocation2 + $0x80] sm:$0xe0] %v830
        %845 = vst [vmem:[#allocation2 + $0x88] sm:$0xe0] %v831
        %846 = vst [vmem:[#allocation2 + $0x90] sm:$0xe0] %v832
        %847 = vst [vmem:[#allocation2 + $0x98] sm:$0xe0] %v833
        %vm848 = vcmask 1014789
        %849 = vst.msk [vmem:[#allocation2 + $0xa0] sm:$0xe0] %vm848, %v834
        %v850 = vld [vmem:[%s425] sm:$0x77]
        %v851 = vld [vmem:[%s425 + $0x8] sm:$0x77]
        %v852 = vld [vmem:[%s425 + $0x10] sm:$0x77]
        %v853 = vld [vmem:[%s425 + $0x18] sm:$0x77]
        %v858 = vcombine.high %v850, %v850
        %v859 = vcombine.high %v851, %v851
        %v860 = vcombine.high %v852, %v852
        %v861 = vcombine.high %v853, %v853
        %862 = vrot.lane.b32.xlu0 %v850, 93
        %v863 = vpop.permute.xlu0 %862
        %864 = vrot.lane.b32.xlu0 %v858, 93
        %v865 = vpop.permute.xlu0 %864
        %866 = vrot.lane.b32.xlu0 %v851, 93
        %v867 = vpop.permute.xlu0 %866
        %868 = vrot.lane.b32.xlu0 %v859, 93
        %v869 = vpop.permute.xlu0 %868
        %870 = vrot.lane.b32.xlu0 %v852, 93
        %v871 = vpop.permute.xlu0 %870
        %872 = vrot.lane.b32.xlu0 %v860, 93
        %v873 = vpop.permute.xlu0 %872
        %874 = vrot.lane.b32.xlu0 %v853, 93
        %v875 = vpop.permute.xlu0 %874
        %876 = vrot.lane.b32.xlu0 %v861, 93
        %v877 = vpop.permute.xlu0 %876
        %vm878 = vcmask 760832
        %v879 = vsel %vm878, %v863, %v865
        %v880 = vsel %vm878, %v865, %v867
        %v881 = vsel %vm878, %v867, %v869
        %v882 = vsel %vm878, %v869, %v871
        %v883 = vsel %vm878, %v871, %v873
        %v884 = vsel %vm878, %v873, %v875
        %v885 = vsel %vm878, %v875, %v877
        %893 = vst [vmem:[#allocation2 + $0xa8] sm:$0x7] %v879
        %894 = vst [vmem:[#allocation2 + $0xb0] sm:$0x7] %v880
        %895 = vst [vmem:[#allocation2 + $0xb8] sm:$0x7] %v881
        %896 = vst [vmem:[#allocation2 + $0xc0] sm:$0x7] %v882
        %897 = vst [vmem:[#allocation2 + $0xc8] sm:$0x7] %v883
        %898 = vst [vmem:[#allocation2 + $0xd0] sm:$0x7] %v884
        %899 = vst.msk [vmem:[#allocation2 + $0xd8] sm:$0x7] %vm445, %v885
        %v900 = vld [vmem:[%s425] sm:$0x77]
        %v901 = vld [vmem:[%s425 + $0x8] sm:$0x77]
        %v902 = vld [vmem:[%s425 + $0x10] sm:$0x77]
        %v903 = vld [vmem:[%s425 + $0x18] sm:$0x77]
        %v908 = vcombine.high %v900, %v900
        %v909 = vcombine.high %v901, %v901
        %v910 = vcombine.high %v902, %v902
        %v911 = vcombine.high %v903, %v903
        %v912 = vrot.slane %v900, 5
        %v913 = vrot.slane %v908, 5
        %v914 = vrot.slane %v901, 5
        %v915 = vrot.slane %v909, 5
        %v916 = vrot.slane %v902, 5
        %v917 = vrot.slane %v910, 5
        %v918 = vrot.slane %v903, 5
        %v919 = vrot.slane %v911, 5
        %920 = vrot.lane.b32.xlu0 %v912, 92
        %v921 = vpop.permute.xlu0 %920
        %922 = vrot.lane.b32.xlu0 %v913, 92
        %v923 = vpop.permute.xlu0 %922
        %924 = vrot.lane.b32.xlu0 %v914, 92
        %v925 = vpop.permute.xlu0 %924
        %926 = vrot.lane.b32.xlu0 %v915, 92
        %v927 = vpop.permute.xlu0 %926
        %928 = vrot.lane.b32.xlu0 %v916, 92
        %v929 = vpop.permute.xlu0 %928
        %930 = vrot.lane.b32.xlu0 %v917, 92
        %v931 = vpop.permute.xlu0 %930
        %932 = vrot.lane.b32.xlu0 %v918, 92
        %v933 = vpop.permute.xlu0 %932
        %934 = vrot.lane.b32.xlu0 %v919, 92
        %v935 = vpop.permute.xlu0 %934
        %vm936 = vcmask 752640
        %v937 = vsel %vm936, %v921, %v923
        %v938 = vsel %vm936, %v923, %v925
        %v939 = vsel %vm936, %v925, %v927
        %v940 = vsel %vm936, %v927, %v929
        %v941 = vsel %vm936, %v929, %v931
        %v942 = vsel %vm936, %v931, %v933
        %v943 = vsel %vm936, %v933, %v935
        %951 = vst [vmem:[#allocation2 + $0xa8] sm:$0x38] %v937
        %952 = vst [vmem:[#allocation2 + $0xb0] sm:$0x38] %v938
        %953 = vst [vmem:[#allocation2 + $0xb8] sm:$0x38] %v939
        %954 = vst [vmem:[#allocation2 + $0xc0] sm:$0x38] %v940
        %955 = vst [vmem:[#allocation2 + $0xc8] sm:$0x38] %v941
        %956 = vst [vmem:[#allocation2 + $0xd0] sm:$0x38] %v942
        %957 = vst.msk [vmem:[#allocation2 + $0xd8] sm:$0x38] %vm499, %v943
        %v958 = vld [vmem:[%s425] sm:$0x77]
        %v959 = vld [vmem:[%s425 + $0x8] sm:$0x77]
        %v960 = vld [vmem:[%s425 + $0x10] sm:$0x77]
        %v961 = vld [vmem:[%s425 + $0x18] sm:$0x77]
        %v966 = vcombine.high %v958, %v958
        %v967 = vcombine.high %v959, %v959
        %v968 = vcombine.high %v960, %v960
        %v969 = vcombine.high %v961, %v961
        %v970 = vrot.slane %v958, 2
        %v971 = vrot.slane %v966, 2
        %v972 = vrot.slane %v959, 2
        %v973 = vrot.slane %v967, 2
        %v974 = vrot.slane %v960, 2
        %v975 = vrot.slane %v968, 2
        %v976 = vrot.slane %v961, 2
        %v977 = vrot.slane %v969, 2
        %978 = vrot.lane.b32.xlu0 %v970, 64
        %v979 = vpop.permute.xlu0 %978
        %980 = vrot.lane.b32.xlu0 %v971, 64
        %v981 = vpop.permute.xlu0 %980
        %982 = vrot.lane.b32.xlu0 %v972, 64
        %v983 = vpop.permute.xlu0 %982
        %984 = vrot.lane.b32.xlu0 %v973, 64
        %v985 = vpop.permute.xlu0 %984
        %986 = vrot.lane.b32.xlu0 %v974, 64
        %v987 = vpop.permute.xlu0 %986
        %988 = vrot.lane.b32.xlu0 %v975, 64
        %v989 = vpop.permute.xlu0 %988
        %990 = vrot.lane.b32.xlu0 %v976, 64
        %v991 = vpop.permute.xlu0 %990
        %992 = vrot.lane.b32.xlu0 %v977, 64
        %v993 = vpop.permute.xlu0 %992
        %vm994 = vcmask 523264
        %v995 = vsel %vm994, %v979, %v981
        %v996 = vsel %vm994, %v981, %v983
        %v997 = vsel %vm994, %v983, %v985
        %v998 = vsel %vm994, %v985, %v987
        %v999 = vsel %vm994, %v987, %v989
        %v1000 = vsel %vm994, %v989, %v991
        %v1001 = vsel %vm994, %v991, %v993
        %1009 = vst [vmem:[#allocation2 + $0xa8] sm:$0xc0] %v995
        %1010 = vst [vmem:[#allocation2 + $0xb0] sm:$0xc0] %v996
        %1011 = vst [vmem:[#allocation2 + $0xb8] sm:$0xc0] %v997
        %1012 = vst [vmem:[#allocation2 + $0xc0] sm:$0xc0] %v998
        %1013 = vst [vmem:[#allocation2 + $0xc8] sm:$0xc0] %v999
        %1014 = vst [vmem:[#allocation2 + $0xd0] sm:$0xc0] %v1000
        %1015 = vst.msk [vmem:[#allocation2 + $0xd8] sm:$0xc0] %vm553, %v1001
        %1016 = vst [vmem:[#allocation2 + $0xe0] sm:$0x1] %v995
        %1017 = vst [vmem:[#allocation2 + $0xe8] sm:$0x1] %v996
        %1018 = vst [vmem:[#allocation2 + $0xf0] sm:$0x1] %v997
        %1019 = vst [vmem:[#allocation2 + $0xf8] sm:$0x1] %v998
        %1020 = vst [vmem:[#allocation2 + $0x100] sm:$0x1] %v999
        %1021 = vst [vmem:[#allocation2 + $0x108] sm:$0x1] %v1000
        %1022 = vst.msk [vmem:[#allocation2 + $0x110] sm:$0x1] %vm561, %v1001
        %v1023 = vld [vmem:[%s425] sm:$0x77]
        %v1024 = vld [vmem:[%s425 + $0x8] sm:$0x77]
        %v1025 = vld [vmem:[%s425 + $0x10] sm:$0x77]
        %v1026 = vld [vmem:[%s425 + $0x18] sm:$0x77]
        %v1031 = vcombine.high %v1023, %v1023
        %v1032 = vcombine.high %v1024, %v1024
        %v1033 = vcombine.high %v1025, %v1025
        %v1034 = vcombine.high %v1026, %v1026
        %v1035 = vrot.slane %v1023, 7
        %v1036 = vrot.slane %v1031, 7
        %v1037 = vrot.slane %v1024, 7
        %v1038 = vrot.slane %v1032, 7
        %v1039 = vrot.slane %v1025, 7
        %v1040 = vrot.slane %v1033, 7
        %v1041 = vrot.slane %v1026, 7
        %v1042 = vrot.slane %v1034, 7
        %1043 = vrot.lane.b32.xlu0 %v1035, 63
        %v1044 = vpop.permute.xlu0 %1043
        %1045 = vrot.lane.b32.xlu0 %v1036, 63
        %v1046 = vpop.permute.xlu0 %1045
        %1047 = vrot.lane.b32.xlu0 %v1037, 63
        %v1048 = vpop.permute.xlu0 %1047
        %1049 = vrot.lane.b32.xlu0 %v1038, 63
        %v1050 = vpop.permute.xlu0 %1049
        %1051 = vrot.lane.b32.xlu0 %v1039, 63
        %v1052 = vpop.permute.xlu0 %1051
        %1053 = vrot.lane.b32.xlu0 %v1040, 63
        %v1054 = vpop.permute.xlu0 %1053
        %1055 = vrot.lane.b32.xlu0 %v1041, 63
        %v1056 = vpop.permute.xlu0 %1055
        %1057 = vrot.lane.b32.xlu0 %v1042, 63
        %v1058 = vpop.permute.xlu0 %1057
        %vm1059 = vcmask 515072
        %v1060 = vsel %vm1059, %v1044, %v1046
        %v1061 = vsel %vm1059, %v1046, %v1048
        %v1062 = vsel %vm1059, %v1048, %v1050
        %v1063 = vsel %vm1059, %v1050, %v1052
        %v1064 = vsel %vm1059, %v1052, %v1054
        %v1065 = vsel %vm1059, %v1054, %v1056
        %v1066 = vsel %vm1059, %v1056, %v1058
        %1074 = vst [vmem:[#allocation2 + $0xe0] sm:$0xe] %v1060
        %1075 = vst [vmem:[#allocation2 + $0xe8] sm:$0xe] %v1061
        %1076 = vst [vmem:[#allocation2 + $0xf0] sm:$0xe] %v1062
        %1077 = vst [vmem:[#allocation2 + $0xf8] sm:$0xe] %v1063
        %1078 = vst [vmem:[#allocation2 + $0x100] sm:$0xe] %v1064
        %1079 = vst [vmem:[#allocation2 + $0x108] sm:$0xe] %v1065
        %1080 = vst.msk [vmem:[#allocation2 + $0x110] sm:$0xe] %vm615, %v1066
        %v1081 = vld [vmem:[%s425] sm:$0x77]
        %v1082 = vld [vmem:[%s425 + $0x8] sm:$0x77]
        %v1083 = vld [vmem:[%s425 + $0x10] sm:$0x77]
        %v1084 = vld [vmem:[%s425 + $0x18] sm:$0x77]
        %v1089 = vcombine.low %v1081, %v1081
        %v1090 = vcombine.low %v1082, %v1082
        %v1091 = vcombine.low %v1083, %v1083
        %v1092 = vcombine.low %v1084, %v1084
        %1093 = vrot.lane.b32.xlu0 %v1089, 62
        %v1094 = vpop.permute.xlu0 %1093
        %1095 = vrot.lane.b32.xlu0 %v1081, 62
        %v1096 = vpop.permute.xlu0 %1095
        %1097 = vrot.lane.b32.xlu0 %v1090, 62
        %v1098 = vpop.permute.xlu0 %1097
        %1099 = vrot.lane.b32.xlu0 %v1082, 62
        %v1100 = vpop.permute.xlu0 %1099
        %1101 = vrot.lane.b32.xlu0 %v1091, 62
        %v1102 = vpop.permute.xlu0 %1101
        %1103 = vrot.lane.b32.xlu0 %v1083, 62
        %v1104 = vpop.permute.xlu0 %1103
        %1105 = vrot.lane.b32.xlu0 %v1092, 62
        %v1106 = vpop.permute.xlu0 %1105
        %1107 = vrot.lane.b32.xlu0 %v1084, 62
        %v1108 = vpop.permute.xlu0 %1107
        %vm1109 = vcmask 506880
        %v1110 = vsel %vm1109, %v1094, %v1096
        %v1111 = vsel %vm1109, %v1096, %v1098
        %v1112 = vsel %vm1109, %v1098, %v1100
        %v1113 = vsel %vm1109, %v1100, %v1102
        %v1114 = vsel %vm1109, %v1102, %v1104
        %v1115 = vsel %vm1109, %v1104, %v1106
        %v1116 = vsel %vm1109, %v1106, %v1108
        %1124 = vst [vmem:[#allocation2 + $0xe0] sm:$0x70] %v1110
        %1125 = vst [vmem:[#allocation2 + $0xe8] sm:$0x70] %v1111
        %1126 = vst [vmem:[#allocation2 + $0xf0] sm:$0x70] %v1112
        %1127 = vst [vmem:[#allocation2 + $0xf8] sm:$0x70] %v1113
        %1128 = vst [vmem:[#allocation2 + $0x100] sm:$0x70] %v1114
        %1129 = vst [vmem:[#allocation2 + $0x108] sm:$0x70] %v1115
        %1130 = vst.msk [vmem:[#allocation2 + $0x110] sm:$0x70] %vm663, %v1116
        %v1131 = vld [vmem:[%s425] sm:$0x77]
        %v1132 = vld [vmem:[%s425 + $0x8] sm:$0x77]
        %v1133 = vld [vmem:[%s425 + $0x10] sm:$0x77]
        %v1134 = vld [vmem:[%s425 + $0x18] sm:$0x77]
        %v1139 = vcombine.high %v1131, %v1131
        %v1140 = vcombine.high %v1132, %v1132
        %v1141 = vcombine.high %v1133, %v1133
        %v1142 = vcombine.high %v1134, %v1134
        %v1143 = vrot.slane %v1131, 1
        %v1144 = vrot.slane %v1139, 1
        %v1145 = vrot.slane %v1132, 1
        %v1146 = vrot.slane %v1140, 1
        %v1147 = vrot.slane %v1133, 1
        %v1148 = vrot.slane %v1141, 1
        %v1149 = vrot.slane %v1134, 1
        %v1150 = vrot.slane %v1142, 1
        %1151 = vrot.lane.b32.xlu0 %v1143, 61
        %v1152 = vpop.permute.xlu0 %1151
        %1153 = vrot.lane.b32.xlu0 %v1144, 61
        %v1154 = vpop.permute.xlu0 %1153
        %1155 = vrot.lane.b32.xlu0 %v1145, 61
        %v1156 = vpop.permute.xlu0 %1155
        %1157 = vrot.lane.b32.xlu0 %v1146, 61
        %v1158 = vpop.permute.xlu0 %1157
        %1159 = vrot.lane.b32.xlu0 %v1147, 61
        %v1160 = vpop.permute.xlu0 %1159
        %1161 = vrot.lane.b32.xlu0 %v1148, 61
        %v1162 = vpop.permute.xlu0 %1161
        %1163 = vrot.lane.b32.xlu0 %v1149, 61
        %v1164 = vpop.permute.xlu0 %1163
        %1165 = vrot.lane.b32.xlu0 %v1150, 61
        %v1166 = vpop.permute.xlu0 %1165
        %vm1167 = vcmask 498688
        %v1168 = vsel %vm1167, %v1152, %v1154
        %v1169 = vsel %vm1167, %v1154, %v1156
        %v1170 = vsel %vm1167, %v1156, %v1158
        %v1171 = vsel %vm1167, %v1158, %v1160
        %v1172 = vsel %vm1167, %v1160, %v1162
        %v1173 = vsel %vm1167, %v1162, %v1164
        %v1174 = vsel %vm1167, %v1164, %v1166
        %1182 = vst [vmem:[#allocation2 + $0xe0] sm:$0x80] %v1168
        %1183 = vst [vmem:[#allocation2 + $0xe8] sm:$0x80] %v1169
        %1184 = vst [vmem:[#allocation2 + $0xf0] sm:$0x80] %v1170
        %1185 = vst [vmem:[#allocation2 + $0xf8] sm:$0x80] %v1171
        %1186 = vst [vmem:[#allocation2 + $0x100] sm:$0x80] %v1172
        %1187 = vst [vmem:[#allocation2 + $0x108] sm:$0x80] %v1173
        %1188 = vst.msk [vmem:[#allocation2 + $0x110] sm:$0x80] %vm722, %v1174
        %1189 = vst [vmem:[#allocation2 + $0x118] sm:$0x3] %v1168
        %1190 = vst [vmem:[#allocation2 + $0x120] sm:$0x3] %v1169
        %1191 = vst [vmem:[#allocation2 + $0x128] sm:$0x3] %v1170
        %1192 = vst [vmem:[#allocation2 + $0x130] sm:$0x3] %v1171
        %1193 = vst [vmem:[#allocation2 + $0x138] sm:$0x3] %v1172
        %1194 = vst [vmem:[#allocation2 + $0x140] sm:$0x3] %v1173
        %1195 = vst.msk [vmem:[#allocation2 + $0x148] sm:$0x3] %vm730, %v1174
        %v1196 = vld [vmem:[%s425] sm:$0x77]
        %v1197 = vld [vmem:[%s425 + $0x8] sm:$0x77]
        %v1198 = vld [vmem:[%s425 + $0x10] sm:$0x77]
        %v1199 = vld [vmem:[%s425 + $0x18] sm:$0x77]
        %v1204 = vcombine.high %v1196, %v1196
        %v1205 = vcombine.high %v1197, %v1197
        %v1206 = vcombine.high %v1198, %v1198
        %v1207 = vcombine.high %v1199, %v1199
        %v1208 = vrot.slane %v1196, 6
        %v1209 = vrot.slane %v1204, 6
        %v1210 = vrot.slane %v1197, 6
        %v1211 = vrot.slane %v1205, 6
        %v1212 = vrot.slane %v1198, 6
        %v1213 = vrot.slane %v1206, 6
        %v1214 = vrot.slane %v1199, 6
        %v1215 = vrot.slane %v1207, 6
        %1216 = vrot.lane.b32.xlu0 %v1208, 60
        %v1217 = vpop.permute.xlu0 %1216
        %1218 = vrot.lane.b32.xlu0 %v1209, 60
        %v1219 = vpop.permute.xlu0 %1218
        %1220 = vrot.lane.b32.xlu0 %v1210, 60
        %v1221 = vpop.permute.xlu0 %1220
        %1222 = vrot.lane.b32.xlu0 %v1211, 60
        %v1223 = vpop.permute.xlu0 %1222
        %1224 = vrot.lane.b32.xlu0 %v1212, 60
        %v1225 = vpop.permute.xlu0 %1224
        %1226 = vrot.lane.b32.xlu0 %v1213, 60
        %v1227 = vpop.permute.xlu0 %1226
        %1228 = vrot.lane.b32.xlu0 %v1214, 60
        %v1229 = vpop.permute.xlu0 %1228
        %1230 = vrot.lane.b32.xlu0 %v1215, 60
        %v1231 = vpop.permute.xlu0 %1230
        %vm1232 = vcmask 490496
        %v1233 = vsel %vm1232, %v1217, %v1219
        %v1234 = vsel %vm1232, %v1219, %v1221
        %v1235 = vsel %vm1232, %v1221, %v1223
        %v1236 = vsel %vm1232, %v1223, %v1225
        %v1237 = vsel %vm1232, %v1225, %v1227
        %v1238 = vsel %vm1232, %v1227, %v1229
        %v1239 = vsel %vm1232, %v1229, %v1231
        %1247 = vst [vmem:[#allocation2 + $0x118] sm:$0x1c] %v1233
        %1248 = vst [vmem:[#allocation2 + $0x120] sm:$0x1c] %v1234
        %1249 = vst [vmem:[#allocation2 + $0x128] sm:$0x1c] %v1235
        %1250 = vst [vmem:[#allocation2 + $0x130] sm:$0x1c] %v1236
        %1251 = vst [vmem:[#allocation2 + $0x138] sm:$0x1c] %v1237
        %1252 = vst [vmem:[#allocation2 + $0x140] sm:$0x1c] %v1238
        %1253 = vst.msk [vmem:[#allocation2 + $0x148] sm:$0x1c] %vm789, %v1239
        %v1254 = vld [vmem:[%s425] sm:$0x77]
        %v1255 = vld [vmem:[%s425 + $0x8] sm:$0x77]
        %v1256 = vld [vmem:[%s425 + $0x10] sm:$0x77]
        %v1257 = vld [vmem:[%s425 + $0x18] sm:$0x77]
        %v1262 = vcombine.high %v1254, %v1254
        %v1263 = vcombine.high %v1255, %v1255
        %v1264 = vcombine.high %v1256, %v1256
        %v1265 = vcombine.high %v1257, %v1257
        %v1266 = vrot.slane %v1254, 3
        %v1267 = vrot.slane %v1262, 3
        %v1268 = vrot.slane %v1255, 3
        %v1269 = vrot.slane %v1263, 3
        %v1270 = vrot.slane %v1256, 3
        %v1271 = vrot.slane %v1264, 3
        %v1272 = vrot.slane %v1257, 3
        %v1273 = vrot.slane %v1265, 3
        %1274 = vrot.lane.b32.xlu0 %v1266, 32
        %v1275 = vpop.permute.xlu0 %1274
        %1276 = vrot.lane.b32.xlu0 %v1267, 32
        %v1277 = vpop.permute.xlu0 %1276
        %1278 = vrot.lane.b32.xlu0 %v1268, 32
        %v1279 = vpop.permute.xlu0 %1278
        %1280 = vrot.lane.b32.xlu0 %v1269, 32
        %v1281 = vpop.permute.xlu0 %1280
        %1282 = vrot.lane.b32.xlu0 %v1270, 32
        %v1283 = vpop.permute.xlu0 %1282
        %1284 = vrot.lane.b32.xlu0 %v1271, 32
        %v1285 = vpop.permute.xlu0 %1284
        %1286 = vrot.lane.b32.xlu0 %v1272, 32
        %v1287 = vpop.permute.xlu0 %1286
        %1288 = vrot.lane.b32.xlu0 %v1273, 32
        %v1289 = vpop.permute.xlu0 %1288
        %vm1290 = vcmask 261120
        %v1291 = vsel %vm1290, %v1275, %v1277
        %v1292 = vsel %vm1290, %v1277, %v1279
        %v1293 = vsel %vm1290, %v1279, %v1281
        %v1294 = vsel %vm1290, %v1281, %v1283
        %v1295 = vsel %vm1290, %v1283, %v1285
        %v1296 = vsel %vm1290, %v1285, %v1287
        %v1297 = vsel %vm1290, %v1287, %v1289
        %1305 = vst [vmem:[#allocation2 + $0x118] sm:$0xe0] %v1291
        %1306 = vst [vmem:[#allocation2 + $0x120] sm:$0xe0] %v1292
        %1307 = vst [vmem:[#allocation2 + $0x128] sm:$0xe0] %v1293
        %1308 = vst [vmem:[#allocation2 + $0x130] sm:$0xe0] %v1294
        %1309 = vst [vmem:[#allocation2 + $0x138] sm:$0xe0] %v1295
        %1310 = vst [vmem:[#allocation2 + $0x140] sm:$0xe0] %v1296
        %1311 = vst.msk [vmem:[#allocation2 + $0x148] sm:$0xe0] %vm848, %v1297
        %v1312 = vld [vmem:[%s425] sm:$0x77]
        %v1313 = vld [vmem:[%s425 + $0x8] sm:$0x77]
        %v1314 = vld [vmem:[%s425 + $0x10] sm:$0x77]
        %v1315 = vld [vmem:[%s425 + $0x18] sm:$0x77]
        %v1320 = vcombine.high %v1312, %v1312
        %v1321 = vcombine.high %v1313, %v1313
        %v1322 = vcombine.high %v1314, %v1314
        %v1323 = vcombine.high %v1315, %v1315
        %1324 = vrot.lane.b32.xlu0 %v1312, 31
        %v1325 = vpop.permute.xlu0 %1324
        %1326 = vrot.lane.b32.xlu0 %v1320, 31
        %v1327 = vpop.permute.xlu0 %1326
        %1328 = vrot.lane.b32.xlu0 %v1313, 31
        %v1329 = vpop.permute.xlu0 %1328
        %1330 = vrot.lane.b32.xlu0 %v1321, 31
        %v1331 = vpop.permute.xlu0 %1330
        %1332 = vrot.lane.b32.xlu0 %v1314, 31
        %v1333 = vpop.permute.xlu0 %1332
        %1334 = vrot.lane.b32.xlu0 %v1322, 31
        %v1335 = vpop.permute.xlu0 %1334
        %1336 = vrot.lane.b32.xlu0 %v1315, 31
        %v1337 = vpop.permute.xlu0 %1336
        %1338 = vrot.lane.b32.xlu0 %v1323, 31
        %v1339 = vpop.permute.xlu0 %1338
        %vm1340 = vcmask 252928
        %v1341 = vsel %vm1340, %v1325, %v1327
        %v1342 = vsel %vm1340, %v1327, %v1329
        %v1343 = vsel %vm1340, %v1329, %v1331
        %v1344 = vsel %vm1340, %v1331, %v1333
        %v1345 = vsel %vm1340, %v1333, %v1335
        %v1346 = vsel %vm1340, %v1335, %v1337
        %v1347 = vsel %vm1340, %v1337, %v1339
        %1355 = vst [vmem:[#allocation2 + $0x150] sm:$0x7] %v1341
        %1356 = vst [vmem:[#allocation2 + $0x158] sm:$0x7] %v1342
        %1357 = vst [vmem:[#allocation2 + $0x160] sm:$0x7] %v1343
        %1358 = vst [vmem:[#allocation2 + $0x168] sm:$0x7] %v1344
        %1359 = vst [vmem:[#allocation2 + $0x170] sm:$0x7] %v1345
        %1360 = vst [vmem:[#allocation2 + $0x178] sm:$0x7] %v1346
        %1361 = vst.msk [vmem:[#allocation2 + $0x180] sm:$0x7] %vm445, %v1347
        %v1362 = vld [vmem:[%s425] sm:$0x77]
        %v1363 = vld [vmem:[%s425 + $0x8] sm:$0x77]
        %v1364 = vld [vmem:[%s425 + $0x10] sm:$0x77]
        %v1365 = vld [vmem:[%s425 + $0x18] sm:$0x77]
        %v1370 = vcombine.high %v1362, %v1362
        %v1371 = vcombine.high %v1363, %v1363
        %v1372 = vcombine.high %v1364, %v1364
        %v1373 = vcombine.high %v1365, %v1365
        %v1374 = vrot.slane %v1362, 5
        %v1375 = vrot.slane %v1370, 5
        %v1376 = vrot.slane %v1363, 5
        %v1377 = vrot.slane %v1371, 5
        %v1378 = vrot.slane %v1364, 5
        %v1379 = vrot.slane %v1372, 5
        %v1380 = vrot.slane %v1365, 5
        %v1381 = vrot.slane %v1373, 5
        %1382 = vrot.lane.b32.xlu0 %v1374, 30
        %v1383 = vpop.permute.xlu0 %1382
        %1384 = vrot.lane.b32.xlu0 %v1375, 30
        %v1385 = vpop.permute.xlu0 %1384
        %1386 = vrot.lane.b32.xlu0 %v1376, 30
        %v1387 = vpop.permute.xlu0 %1386
        %1388 = vrot.lane.b32.xlu0 %v1377, 30
        %v1389 = vpop.permute.xlu0 %1388
        %1390 = vrot.lane.b32.xlu0 %v1378, 30
        %v1391 = vpop.permute.xlu0 %1390
        %1392 = vrot.lane.b32.xlu0 %v1379, 30
        %v1393 = vpop.permute.xlu0 %1392
        %1394 = vrot.lane.b32.xlu0 %v1380, 30
        %v1395 = vpop.permute.xlu0 %1394
        %1396 = vrot.lane.b32.xlu0 %v1381, 30
        %v1397 = vpop.permute.xlu0 %1396
        %vm1398 = vcmask 244736
        %v1399 = vsel %vm1398, %v1383, %v1385
        %v1400 = vsel %vm1398, %v1385, %v1387
        %v1401 = vsel %vm1398, %v1387, %v1389
        %v1402 = vsel %vm1398, %v1389, %v1391
        %v1403 = vsel %vm1398, %v1391, %v1393
        %v1404 = vsel %vm1398, %v1393, %v1395
        %v1405 = vsel %vm1398, %v1395, %v1397
        %1413 = vst [vmem:[#allocation2 + $0x150] sm:$0x38] %v1399
        %1414 = vst [vmem:[#allocation2 + $0x158] sm:$0x38] %v1400
        %1415 = vst [vmem:[#allocation2 + $0x160] sm:$0x38] %v1401
        %1416 = vst [vmem:[#allocation2 + $0x168] sm:$0x38] %v1402
        %1417 = vst [vmem:[#allocation2 + $0x170] sm:$0x38] %v1403
        %1418 = vst [vmem:[#allocation2 + $0x178] sm:$0x38] %v1404
        %1419 = vst.msk [vmem:[#allocation2 + $0x180] sm:$0x38] %vm499, %v1405
        %v1420 = vld [vmem:[%s425] sm:$0x77]
        %v1421 = vld [vmem:[%s425 + $0x8] sm:$0x77]
        %v1422 = vld [vmem:[%s425 + $0x10] sm:$0x77]
        %v1423 = vld [vmem:[%s425 + $0x18] sm:$0x77]
        %v1428 = vcombine.high %v1420, %v1420
        %v1429 = vcombine.high %v1421, %v1421
        %v1430 = vcombine.high %v1422, %v1422
        %v1431 = vcombine.high %v1423, %v1423
        %v1432 = vrot.slane %v1420, 2
        %v1433 = vrot.slane %v1428, 2
        %v1434 = vrot.slane %v1421, 2
        %v1435 = vrot.slane %v1429, 2
        %v1436 = vrot.slane %v1422, 2
        %v1437 = vrot.slane %v1430, 2
        %v1438 = vrot.slane %v1423, 2
        %v1439 = vrot.slane %v1431, 2
        %1440 = vrot.lane.b32.xlu0 %v1432, 29
        %v1441 = vpop.permute.xlu0 %1440
        %1442 = vrot.lane.b32.xlu0 %v1433, 29
        %v1443 = vpop.permute.xlu0 %1442
        %1444 = vrot.lane.b32.xlu0 %v1434, 29
        %v1445 = vpop.permute.xlu0 %1444
        %1446 = vrot.lane.b32.xlu0 %v1435, 29
        %v1447 = vpop.permute.xlu0 %1446
        %1448 = vrot.lane.b32.xlu0 %v1436, 29
        %v1449 = vpop.permute.xlu0 %1448
        %1450 = vrot.lane.b32.xlu0 %v1437, 29
        %v1451 = vpop.permute.xlu0 %1450
        %1452 = vrot.lane.b32.xlu0 %v1438, 29
        %v1453 = vpop.permute.xlu0 %1452
        %1454 = vrot.lane.b32.xlu0 %v1439, 29
        %v1455 = vpop.permute.xlu0 %1454
        %vm1456 = vcmask 236544
        %v1457 = vsel %vm1456, %v1441, %v1443
        %v1458 = vsel %vm1456, %v1443, %v1445
        %v1459 = vsel %vm1456, %v1445, %v1447
        %v1460 = vsel %vm1456, %v1447, %v1449
        %v1461 = vsel %vm1456, %v1449, %v1451
        %v1462 = vsel %vm1456, %v1451, %v1453
        %v1463 = vsel %vm1456, %v1453, %v1455
        %1471 = vst [vmem:[#allocation2 + $0x150] sm:$0xc0] %v1457
        %1472 = vst [vmem:[#allocation2 + $0x158] sm:$0xc0] %v1458
        %1473 = vst [vmem:[#allocation2 + $0x160] sm:$0xc0] %v1459
        %1474 = vst [vmem:[#allocation2 + $0x168] sm:$0xc0] %v1460
        %1475 = vst [vmem:[#allocation2 + $0x170] sm:$0xc0] %v1461
        %1476 = vst [vmem:[#allocation2 + $0x178] sm:$0xc0] %v1462
        %1477 = vst.msk [vmem:[#allocation2 + $0x180] sm:$0xc0] %vm553, %v1463
        %1478 = vst [vmem:[#allocation2 + $0x188] sm:$0x1] %v1457
        %1479 = vst [vmem:[#allocation2 + $0x190] sm:$0x1] %v1458
        %1480 = vst [vmem:[#allocation2 + $0x198] sm:$0x1] %v1459
        %1481 = vst [vmem:[#allocation2 + $0x1a0] sm:$0x1] %v1460
        %1482 = vst [vmem:[#allocation2 + $0x1a8] sm:$0x1] %v1461
        %1483 = vst [vmem:[#allocation2 + $0x1b0] sm:$0x1] %v1462
        %1484 = vst.msk [vmem:[#allocation2 + $0x1b8] sm:$0x1] %vm561, %v1463
        %v1485 = vld [vmem:[%s425] sm:$0x77]
        %v1486 = vld [vmem:[%s425 + $0x8] sm:$0x77]
        %v1487 = vld [vmem:[%s425 + $0x10] sm:$0x77]
        %v1488 = vld [vmem:[%s425 + $0x18] sm:$0x77]
        %v1493 = vcombine.high %v1485, %v1485
        %v1494 = vcombine.high %v1486, %v1486
        %v1495 = vcombine.high %v1487, %v1487
        %v1496 = vcombine.high %v1488, %v1488
        %v1497 = vrot.slane %v1485, 7
        %v1498 = vrot.slane %v1493, 7
        %v1499 = vrot.slane %v1486, 7
        %v1500 = vrot.slane %v1494, 7
        %v1501 = vrot.slane %v1487, 7
        %v1502 = vrot.slane %v1495, 7
        %v1503 = vrot.slane %v1488, 7
        %v1504 = vrot.slane %v1496, 7
        %1505 = vrot.lane.b32.xlu0 %v1497, 28
        %v1506 = vpop.permute.xlu0 %1505
        %1507 = vrot.lane.b32.xlu0 %v1498, 28
        %v1508 = vpop.permute.xlu0 %1507
        %1509 = vrot.lane.b32.xlu0 %v1499, 28
        %v1510 = vpop.permute.xlu0 %1509
        %1511 = vrot.lane.b32.xlu0 %v1500, 28
        %v1512 = vpop.permute.xlu0 %1511
        %1513 = vrot.lane.b32.xlu0 %v1501, 28
        %v1514 = vpop.permute.xlu0 %1513
        %1515 = vrot.lane.b32.xlu0 %v1502, 28
        %v1516 = vpop.permute.xlu0 %1515
        %1517 = vrot.lane.b32.xlu0 %v1503, 28
        %v1518 = vpop.permute.xlu0 %1517
        %1519 = vrot.lane.b32.xlu0 %v1504, 28
        %v1520 = vpop.permute.xlu0 %1519
        %vm1521 = vcmask 228352
        %v1522 = vsel %vm1521, %v1506, %v1508
        %v1523 = vsel %vm1521, %v1508, %v1510
        %v1524 = vsel %vm1521, %v1510, %v1512
        %v1525 = vsel %vm1521, %v1512, %v1514
        %v1526 = vsel %vm1521, %v1514, %v1516
        %v1527 = vsel %vm1521, %v1516, %v1518
        %v1528 = vsel %vm1521, %v1518, %v1520
        %1536 = vst [vmem:[#allocation2 + $0x188] sm:$0xe] %v1522
        %1537 = vst [vmem:[#allocation2 + $0x190] sm:$0xe] %v1523
        %1538 = vst [vmem:[#allocation2 + $0x198] sm:$0xe] %v1524
        %1539 = vst [vmem:[#allocation2 + $0x1a0] sm:$0xe] %v1525
        %1540 = vst [vmem:[#allocation2 + $0x1a8] sm:$0xe] %v1526
        %1541 = vst [vmem:[#allocation2 + $0x1b0] sm:$0xe] %v1527
        %1542 = vst.msk [vmem:[#allocation2 + $0x1b8] sm:$0xe] %vm615, %v1528
        %v1543 = vld [vmem:[%s425 + $0x4] sm:$0x77]
        %v1544 = vld [vmem:[%s425 + $0xc] sm:$0x77]
        %v1545 = vld [vmem:[%s425 + $0x14] sm:$0x77]
        %v1546 = vld [vmem:[%s425 + $0x1c] sm:$0x7]
        %v1551 = vcombine.low %v1543, %v1543
        %v1552 = vcombine.low %v1544, %v1544
        %v1553 = vcombine.low %v1545, %v1545
        %v1554 = vcombine.low %v1546, %v1546
        %1559 = vst [vmem:[#allocation2 + $0x188] sm:$0x70] %v1551
        %1560 = vst [vmem:[#allocation2 + $0x190] sm:$0x70] %v1543
        %1561 = vst [vmem:[#allocation2 + $0x198] sm:$0x70] %v1552
        %1562 = vst [vmem:[#allocation2 + $0x1a0] sm:$0x70] %v1544
        %1563 = vst [vmem:[#allocation2 + $0x1a8] sm:$0x70] %v1553
        %1564 = vst [vmem:[#allocation2 + $0x1b0] sm:$0x70] %v1545
        %1565 = vst.msk [vmem:[#allocation2 + $0x1b8] sm:$0x70] %vm663, %v1554
        %v1566 = vld [vmem:[%s425 + $0x4] sm:$0x77]
        %v1567 = vld [vmem:[%s425 + $0xc] sm:$0x77]
        %v1568 = vld [vmem:[%s425 + $0x14] sm:$0x77]
        %v1569 = vld [vmem:[%s425 + $0x1c] sm:$0x7]
        %v1574 = vcombine.high %v1566, %v1566
        %v1575 = vcombine.high %v1567, %v1567
        %v1576 = vcombine.high %v1568, %v1568
        %v1577 = vrot.slane %v1566, 1
        %v1578 = vrot.slane %v1574, 1
        %v1579 = vrot.slane %v1567, 1
        %v1580 = vrot.slane %v1575, 1
        %v1581 = vrot.slane %v1568, 1
        %v1582 = vrot.slane %v1576, 1
        %v1583 = vrot.slane %v1569, 1
        %1584 = vrot.lane.b32.xlu0 %v1577, 127
        %v1585 = vpop.permute.xlu0 %1584
        %1586 = vrot.lane.b32.xlu0 %v1578, 127
        %v1587 = vpop.permute.xlu0 %1586
        %1588 = vrot.lane.b32.xlu0 %v1579, 127
        %v1589 = vpop.permute.xlu0 %1588
        %1590 = vrot.lane.b32.xlu0 %v1580, 127
        %v1591 = vpop.permute.xlu0 %1590
        %1592 = vrot.lane.b32.xlu0 %v1581, 127
        %v1593 = vpop.permute.xlu0 %1592
        %1594 = vrot.lane.b32.xlu0 %v1582, 127
        %v1595 = vpop.permute.xlu0 %1594
        %1596 = vrot.lane.b32.xlu0 %v1583, 127
        %v1597 = vpop.permute.xlu0 %1596
        %v1598 = vsel %vm479, %v1585, %v1587
        %v1599 = vsel %vm479, %v1587, %v1589
        %v1600 = vsel %vm479, %v1589, %v1591
        %v1601 = vsel %vm479, %v1591, %v1593
        %v1602 = vsel %vm479, %v1593, %v1595
        %v1603 = vsel %vm479, %v1595, %v1597
        %1611 = vst [vmem:[#allocation2 + $0x188] sm:$0x80] %v1598
        %1612 = vst [vmem:[#allocation2 + $0x190] sm:$0x80] %v1599
        %1613 = vst [vmem:[#allocation2 + $0x198] sm:$0x80] %v1600
        %1614 = vst [vmem:[#allocation2 + $0x1a0] sm:$0x80] %v1601
        %1615 = vst [vmem:[#allocation2 + $0x1a8] sm:$0x80] %v1602
        %1616 = vst [vmem:[#allocation2 + $0x1b0] sm:$0x80] %v1603
        %1617 = vst.msk [vmem:[#allocation2 + $0x1b8] sm:$0x80] %vm722, %v1597
        %1618 = vst [vmem:[#allocation2 + $0x1c0] sm:$0x3] %v1598
        %1619 = vst [vmem:[#allocation2 + $0x1c8] sm:$0x3] %v1599
        %1620 = vst [vmem:[#allocation2 + $0x1d0] sm:$0x3] %v1600
        %1621 = vst [vmem:[#allocation2 + $0x1d8] sm:$0x3] %v1601
        %1622 = vst [vmem:[#allocation2 + $0x1e0] sm:$0x3] %v1602
        %1623 = vst [vmem:[#allocation2 + $0x1e8] sm:$0x3] %v1603
        %1624 = vst.msk [vmem:[#allocation2 + $0x1f0] sm:$0x3] %vm730, %v1597
        %v1625 = vld [vmem:[%s425 + $0x4] sm:$0x77]
        %v1626 = vld [vmem:[%s425 + $0xc] sm:$0x77]
        %v1627 = vld [vmem:[%s425 + $0x14] sm:$0x77]
        %v1628 = vld [vmem:[%s425 + $0x1c] sm:$0x7]
        %v1633 = vcombine.high %v1625, %v1625
        %v1634 = vcombine.high %v1626, %v1626
        %v1635 = vcombine.high %v1627, %v1627
        %v1636 = vrot.slane %v1625, 6
        %v1637 = vrot.slane %v1633, 6
        %v1638 = vrot.slane %v1626, 6
        %v1639 = vrot.slane %v1634, 6
        %v1640 = vrot.slane %v1627, 6
        %v1641 = vrot.slane %v1635, 6
        %v1642 = vrot.slane %v1628, 6
        %1643 = vrot.lane.b32.xlu0 %v1636, 126
        %v1644 = vpop.permute.xlu0 %1643
        %1645 = vrot.lane.b32.xlu0 %v1637, 126
        %v1646 = vpop.permute.xlu0 %1645
        %1647 = vrot.lane.b32.xlu0 %v1638, 126
        %v1648 = vpop.permute.xlu0 %1647
        %1649 = vrot.lane.b32.xlu0 %v1639, 126
        %v1650 = vpop.permute.xlu0 %1649
        %1651 = vrot.lane.b32.xlu0 %v1640, 126
        %v1652 = vpop.permute.xlu0 %1651
        %1653 = vrot.lane.b32.xlu0 %v1641, 126
        %v1654 = vpop.permute.xlu0 %1653
        %1655 = vrot.lane.b32.xlu0 %v1642, 126
        %v1656 = vpop.permute.xlu0 %1655
        %v1657 = vsel %vm533, %v1644, %v1646
        %v1658 = vsel %vm533, %v1646, %v1648
        %v1659 = vsel %vm533, %v1648, %v1650
        %v1660 = vsel %vm533, %v1650, %v1652
        %v1661 = vsel %vm533, %v1652, %v1654
        %v1662 = vsel %vm533, %v1654, %v1656
        %1670 = vst [vmem:[#allocation2 + $0x1c0] sm:$0x1c] %v1657
        %1671 = vst [vmem:[#allocation2 + $0x1c8] sm:$0x1c] %v1658
        %1672 = vst [vmem:[#allocation2 + $0x1d0] sm:$0x1c] %v1659
        %1673 = vst [vmem:[#allocation2 + $0x1d8] sm:$0x1c] %v1660
        %1674 = vst [vmem:[#allocation2 + $0x1e0] sm:$0x1c] %v1661
        %1675 = vst [vmem:[#allocation2 + $0x1e8] sm:$0x1c] %v1662
        %1676 = vst.msk [vmem:[#allocation2 + $0x1f0] sm:$0x1c] %vm789, %v1656
        %v1677 = vld [vmem:[%s425 + $0x4] sm:$0x77]
        %v1678 = vld [vmem:[%s425 + $0xc] sm:$0x77]
        %v1679 = vld [vmem:[%s425 + $0x14] sm:$0x77]
        %v1680 = vld [vmem:[%s425 + $0x1c] sm:$0x7]
        %v1685 = vcombine.high %v1677, %v1677
        %v1686 = vcombine.high %v1678, %v1678
        %v1687 = vcombine.high %v1679, %v1679
        %v1688 = vrot.slane %v1677, 3
        %v1689 = vrot.slane %v1685, 3
        %v1690 = vrot.slane %v1678, 3
        %v1691 = vrot.slane %v1686, 3
        %v1692 = vrot.slane %v1679, 3
        %v1693 = vrot.slane %v1687, 3
        %v1694 = vrot.slane %v1680, 3
        %1695 = vrot.lane.b32.xlu0 %v1688, 125
        %v1696 = vpop.permute.xlu0 %1695
        %1697 = vrot.lane.b32.xlu0 %v1689, 125
        %v1698 = vpop.permute.xlu0 %1697
        %1699 = vrot.lane.b32.xlu0 %v1690, 125
        %v1700 = vpop.permute.xlu0 %1699
        %1701 = vrot.lane.b32.xlu0 %v1691, 125
        %v1702 = vpop.permute.xlu0 %1701
        %1703 = vrot.lane.b32.xlu0 %v1692, 125
        %v1704 = vpop.permute.xlu0 %1703
        %1705 = vrot.lane.b32.xlu0 %v1693, 125
        %v1706 = vpop.permute.xlu0 %1705
        %1707 = vrot.lane.b32.xlu0 %v1694, 125
        %v1708 = vpop.permute.xlu0 %1707
        %v1709 = vsel %vm595, %v1696, %v1698
        %v1710 = vsel %vm595, %v1698, %v1700
        %v1711 = vsel %vm595, %v1700, %v1702
        %v1712 = vsel %vm595, %v1702, %v1704
        %v1713 = vsel %vm595, %v1704, %v1706
        %v1714 = vsel %vm595, %v1706, %v1708
        %1722 = vst [vmem:[#allocation2 + $0x1c0] sm:$0xe0] %v1709
        %1723 = vst [vmem:[#allocation2 + $0x1c8] sm:$0xe0] %v1710
        %1724 = vst [vmem:[#allocation2 + $0x1d0] sm:$0xe0] %v1711
        %1725 = vst [vmem:[#allocation2 + $0x1d8] sm:$0xe0] %v1712
        %1726 = vst [vmem:[#allocation2 + $0x1e0] sm:$0xe0] %v1713
        %1727 = vst [vmem:[#allocation2 + $0x1e8] sm:$0xe0] %v1714
        %1728 = vst.msk [vmem:[#allocation2 + $0x1f0] sm:$0xe0] %vm848, %v1708
        %v1729 = vld [vmem:[%s425 + $0x4] sm:$0x77]
        %v1730 = vld [vmem:[%s425 + $0xc] sm:$0x77]
        %v1731 = vld [vmem:[%s425 + $0x14] sm:$0x77]
        %v1732 = vld [vmem:[%s425 + $0x1c] sm:$0x7]
        %v1737 = vcombine.high %v1729, %v1729
        %v1738 = vcombine.high %v1730, %v1730
        %v1739 = vcombine.high %v1731, %v1731
        %1740 = vrot.lane.b32.xlu0 %v1729, 124
        %v1741 = vpop.permute.xlu0 %1740
        %1742 = vrot.lane.b32.xlu0 %v1737, 124
        %v1743 = vpop.permute.xlu0 %1742
        %1744 = vrot.lane.b32.xlu0 %v1730, 124
        %v1745 = vpop.permute.xlu0 %1744
        %1746 = vrot.lane.b32.xlu0 %v1738, 124
        %v1747 = vpop.permute.xlu0 %1746
        %1748 = vrot.lane.b32.xlu0 %v1731, 124
        %v1749 = vpop.permute.xlu0 %1748
        %1750 = vrot.lane.b32.xlu0 %v1739, 124
        %v1751 = vpop.permute.xlu0 %1750
        %1752 = vrot.lane.b32.xlu0 %v1732, 124
        %v1753 = vpop.permute.xlu0 %1752
        %v1754 = vsel %vm643, %v1741, %v1743
        %v1755 = vsel %vm643, %v1743, %v1745
        %v1756 = vsel %vm643, %v1745, %v1747
        %v1757 = vsel %vm643, %v1747, %v1749
        %v1758 = vsel %vm643, %v1749, %v1751
        %v1759 = vsel %vm643, %v1751, %v1753
        %1767 = vst [vmem:[#allocation2 + $0x1f8] sm:$0x7] %v1754
        %1768 = vst [vmem:[#allocation2 + $0x200] sm:$0x7] %v1755
        %1769 = vst [vmem:[#allocation2 + $0x208] sm:$0x7] %v1756
        %1770 = vst [vmem:[#allocation2 + $0x210] sm:$0x7] %v1757
        %1771 = vst [vmem:[#allocation2 + $0x218] sm:$0x7] %v1758
        %1772 = vst [vmem:[#allocation2 + $0x220] sm:$0x7] %v1759
        %1773 = vst.msk [vmem:[#allocation2 + $0x228] sm:$0x7] %vm445, %v1753
        %v1774 = vld [vmem:[%s1] sm:$0x3f]
        %v1775 = vld [vmem:[#allocation2] sm:$0xff]
        %v1776 = vld [vmem:[#allocation2 + $0x8] sm:$0xff]
        %v1777 = vld [vmem:[#allocation2 + $0x10] sm:$0xff]
        %v1778 = vld [vmem:[#allocation2 + $0x18] sm:$0xff]
        %v1779 = vld [vmem:[#allocation2 + $0x20] sm:$0xff]
        %v1780 = vld [vmem:[#allocation2 + $0x28] sm:$0xff]
        %v1781 = vld [vmem:[#allocation2 + $0x30] sm:$0xff]
        %v1782 = vld [vmem:[#allocation2 + $0x38] sm:$0xff]
        %v1783 = vld [vmem:[#allocation2 + $0x40] sm:$0xff]
        %v1784 = vld [vmem:[#allocation2 + $0x48] sm:$0xff]
        %v1785 = vld [vmem:[#allocation2 + $0x50] sm:$0xff]
        %v1786 = vld [vmem:[#allocation2 + $0x58] sm:$0xff]
        %v1787 = vld [vmem:[#allocation2 + $0x60] sm:$0xff]
        %v1788 = vld [vmem:[#allocation2 + $0x68] sm:$0xff]
        %v1789 = vld [vmem:[#allocation2 + $0x70] sm:$0xff]
        %v1790 = vld [vmem:[#allocation2 + $0x78] sm:$0xff]
        %v1791 = vld [vmem:[#allocation2 + $0x80] sm:$0xff]
        %v1792 = vld [vmem:[#allocation2 + $0x88] sm:$0xff]
        %v1793 = vld [vmem:[#allocation2 + $0x90] sm:$0xff]
        %v1794 = vld [vmem:[#allocation2 + $0x98] sm:$0xff]
        %v1795 = vld [vmem:[#allocation2 + $0xa0] sm:$0xff]
        %v1796 = vld [vmem:[#allocation2 + $0xa8] sm:$0xff]
        %v1797 = vld [vmem:[#allocation2 + $0xb0] sm:$0xff]
        %v1798 = vld [vmem:[#allocation2 + $0xb8] sm:$0xff]
        %v1799 = vld [vmem:[#allocation2 + $0xc0] sm:$0xff]
        %v1800 = vld [vmem:[#allocation2 + $0xc8] sm:$0xff]
        %v1801 = vld [vmem:[#allocation2 + $0xd0] sm:$0xff]
        %v1802 = vld [vmem:[#allocation2 + $0xd8] sm:$0xff]
        %v1803 = vld [vmem:[#allocation2 + $0xe0] sm:$0xff]
        %v1804 = vld [vmem:[#allocation2 + $0xe8] sm:$0xff]
        %v1805 = vld [vmem:[#allocation2 + $0xf0] sm:$0xff]
        %v1806 = vld [vmem:[#allocation2 + $0xf8] sm:$0xff]
        %v1807 = vld [vmem:[#allocation2 + $0x100] sm:$0xff]
        %v1808 = vld [vmem:[#allocation2 + $0x108] sm:$0xff]
        %v1809 = vld [vmem:[#allocation2 + $0x110] sm:$0xff]
        %v1810 = vld [vmem:[#allocation2 + $0x118] sm:$0xff]
        %v1811 = vld [vmem:[#allocation2 + $0x120] sm:$0xff]
        %v1812 = vld [vmem:[#allocation2 + $0x128] sm:$0xff]
        %v1813 = vld [vmem:[#allocation2 + $0x130] sm:$0xff]
        %v1814 = vld [vmem:[#allocation2 + $0x138] sm:$0xff]
        %v1815 = vld [vmem:[#allocation2 + $0x140] sm:$0xff]
        %v1816 = vld [vmem:[#allocation2 + $0x148] sm:$0xff]
        %v1817 = vld [vmem:[#allocation2 + $0x150] sm:$0xff]
        %v1818 = vld [vmem:[#allocation2 + $0x158] sm:$0xff]
        %v1819 = vld [vmem:[#allocation2 + $0x160] sm:$0xff]
        %v1820 = vld [vmem:[#allocation2 + $0x168] sm:$0xff]
        %v1821 = vld [vmem:[#allocation2 + $0x170] sm:$0xff]
        %v1822 = vld [vmem:[#allocation2 + $0x178] sm:$0xff]
        %v1823 = vld [vmem:[#allocation2 + $0x180] sm:$0xff]
        %v1824 = vld [vmem:[#allocation2 + $0x188] sm:$0xff]
        %v1825 = vld [vmem:[#allocation2 + $0x190] sm:$0xff]
        %v1826 = vld [vmem:[#allocation2 + $0x198] sm:$0xff]
        %v1827 = vld [vmem:[#allocation2 + $0x1a0] sm:$0xff]
        %v1828 = vld [vmem:[#allocation2 + $0x1a8] sm:$0xff]
        %v1829 = vld [vmem:[#allocation2 + $0x1b0] sm:$0xff]
        %v1830 = vld [vmem:[#allocation2 + $0x1b8] sm:$0xff]
        %v1831 = vld [vmem:[#allocation2 + $0x1c0] sm:$0xff]
        %v1832 = vld [vmem:[#allocation2 + $0x1c8] sm:$0xff]
        %v1833 = vld [vmem:[#allocation2 + $0x1d0] sm:$0xff]
        %v1834 = vld [vmem:[#allocation2 + $0x1d8] sm:$0xff]
        %v1835 = vld [vmem:[#allocation2 + $0x1e0] sm:$0xff]
        %v1836 = vld [vmem:[#allocation2 + $0x1e8] sm:$0xff]
        %v1837 = vld [vmem:[#allocation2 + $0x1f0] sm:$0xff]
        %v1838 = vld [vmem:[#allocation2 + $0x1f8] sm:$0x7]
        %v1839 = vld [vmem:[#allocation2 + $0x200] sm:$0x7]
        %v1840 = vld [vmem:[#allocation2 + $0x208] sm:$0x7]
        %v1841 = vld [vmem:[#allocation2 + $0x210] sm:$0x7]
        %v1842 = vld [vmem:[#allocation2 + $0x218] sm:$0x7]
        %v1843 = vld [vmem:[#allocation2 + $0x220] sm:$0x7]
        %v1844 = vld [vmem:[#allocation2 + $0x228] sm:$0x7]
        %v1845 = vld [vmem:[%s2] sm:$0x3f]
        %1847 = vset.pattern.permute.xlu0 0
        %1848 = vperm.xlu0 %1847, %v1845
        %v1849 = vpop.permute.xlu0 %1848
        %vm1851 = vcmask 613376
        %v1853 = vsel %vm1851, %v1774, 0
        %vm1855 = vcmask 1042432
        %v1857 = vsel %vm1855, %v1838, 0
        %v1860 = vsel %vm1855, %v1839, 0
        %v1863 = vsel %vm1855, %v1840, 0
        %v1866 = vsel %vm1855, %v1841, 0
        %v1869 = vsel %vm1855, %v1842, 0
        %v1872 = vsel %vm1855, %v1843, 0
        %v1875 = vsel %vm1855, %v1844, 0
        %1877 = vmatprep.subr.mxu0 %v1776
        %1878 = vmatpush1.msra.mxu0 %v1775
        %1879 = vmatprep.subr.mxu0 %v1783
        %1880 = vmatpush1.msra.mxu0 %v1782
        %1881 = vmatprep.subr.mxu0 %v1790
        %1882 = vmatpush1.msra.mxu0 %v1789
        %1883 = vmatprep.subr.mxu0 %v1797
        %1884 = vmatpush1.msra.mxu0 %v1796
        %1885 = vmatprep.subr.mxu0 %v1804
        %1886 = vmatpush1.msra.mxu0 %v1803
        %1887 = vmatprep.subr.mxu0 %v1811
        %1888 = vmatpush1.msra.mxu0 %v1810
        %1889 = vmatprep.subr.mxu0 %v1818
        %1890 = vmatpush1.msra.mxu0 %v1817
        %1891 = vmatprep.subr.mxu0 %v1825
        %1892 = vmatpush1.msra.mxu0 %v1824
        %1893 = vmatprep.subr.mxu0 %v1832
        %1894 = vmatpush1.msra.mxu0 %v1831
        %1895 = vmatprep.subr.mxu0 %v1860
        %1896 = vmatpush1.msra.mxu0 %v1857
        %1897 = vmatprep.subr.mxu0 0.0
        %1898 = vmatpush1.msra.mxu0 0.0
        %1899 = vmatprep.subr.mxu0 0.0
        %1900 = vmatpush1.msra.mxu0 0.0
        %1901 = vmatprep.subr.mxu0 0.0
        %1902 = vmatpush1.msra.mxu0 0.0
        %1903 = vmatprep.subr.mxu0 0.0
        %1904 = vmatpush1.msra.mxu0 0.0
        %1905 = vmatprep.subr.mxu0 0.0
        %1906 = vmatpush1.msra.mxu0 0.0
        %1907 = vmatprep.subr.mxu0 0.0
        %1908 = vmatpush1.msra.mxu0 0.0
        %1909 = vmatprep.subr.mxu0 0.0
        %1910 = vmatpush1.msra.mxu0 0.0
        %1911 = vmatprep.subr.mxu0 0.0
        %1912 = vmatpush1.msra.mxu0 0.0
        %1913 = vmatprep.subr.mxu0 0.0
        %1914 = vmatpush1.msra.mxu0 0.0
        %1915 = vmatprep.subr.mxu0 0.0
        %1916 = vmatpush1.msra.mxu0 0.0
        %1917 = vmatprep.subr.mxu0 0.0
        %1918 = vmatpush1.msra.mxu0 0.0
        %1919 = vmatprep.subr.mxu0 0.0
        %1920 = vmatpush1.msra.mxu0 0.0
        %1921 = vmatprep.subr.mxu0 0.0
        %1922 = vmatpush1.msra.mxu0 0.0
        %1923 = vmatprep.subr.mxu0 0.0
        %1924 = vmatpush1.msra.mxu0 0.0
        %1925 = vmatprep.subr.mxu0 0.0
        %1926 = vmatpush1.msra.mxu0 0.0
        %1927 = vmatprep.subr.mxu0 0.0
        %1928 = vmatpush1.msra.mxu0 0.0
        %1929 = vmatprep.subr.mxu0 0.0
        %1930 = vmatpush1.msra.mxu0 0.0
        %1931 = vmatprep.subr.mxu0 0.0
        %1932 = vmatpush1.msra.mxu0 0.0
        %1933 = vmatprep.subr.mxu0 0.0
        %1934 = vmatpush1.msra.mxu0 0.0
        %1935 = vmatprep.subr.mxu0 0.0
        %1936 = vmatpush1.msra.mxu0 0.0
        %1937 = vmatprep.subr.mxu0 0.0
        %1938 = vmatpush1.msra.mxu0 0.0
        %1939 = vmatprep.subr.mxu0 0.0
        %1940 = vmatpush1.msra.mxu0 0.0
        %1941 = vmatprep.mubr.f32.mxu0 0.0
        %1942 = vmatmul.mubr.f32.gmra.mrb[0].mxu0 %v1853
        %v1943 = vpop.f32.mrb[0].mxu0
        %v1944 = vadd.f32 %v1849, %v1943
        %v1945 = vpop.f32.mrb[0].mxu0
        %v1946 = vadd.f32 %v1849, %v1945
        %1947 = vdwg.mxu0
        %1948 = vmatprep.subr.mxu0 %v1778
        %1949 = vmatpush1.msra.mxu0 %v1777
        %1950 = vmatprep.subr.mxu0 %v1785
        %1951 = vmatpush1.msra.mxu0 %v1784
        %1952 = vmatprep.subr.mxu0 %v1792
        %1953 = vmatpush1.msra.mxu0 %v1791
        %1954 = vmatprep.subr.mxu0 %v1799
        %1955 = vmatpush1.msra.mxu0 %v1798
        %1956 = vmatprep.subr.mxu0 %v1806
        %1957 = vmatpush1.msra.mxu0 %v1805
        %1958 = vmatprep.subr.mxu0 %v1813
        %1959 = vmatpush1.msra.mxu0 %v1812
        %1960 = vmatprep.subr.mxu0 %v1820
        %1961 = vmatpush1.msra.mxu0 %v1819
        %1962 = vmatprep.subr.mxu0 %v1827
        %1963 = vmatpush1.msra.mxu0 %v1826
        %1964 = vmatprep.subr.mxu0 %v1834
        %1965 = vmatpush1.msra.mxu0 %v1833
        %1966 = vmatprep.subr.mxu0 %v1866
        %1967 = vmatpush1.msra.mxu0 %v1863
        %1968 = vmatprep.subr.mxu0 0.0
        %1969 = vmatpush1.msra.mxu0 0.0
        %1970 = vmatprep.subr.mxu0 0.0
        %1971 = vmatpush1.msra.mxu0 0.0
        %1972 = vmatprep.subr.mxu0 0.0
        %1973 = vmatpush1.msra.mxu0 0.0
        %1974 = vmatprep.subr.mxu0 0.0
        %1975 = vmatpush1.msra.mxu0 0.0
        %1976 = vmatprep.subr.mxu0 0.0
        %1977 = vmatpush1.msra.mxu0 0.0
        %1978 = vmatprep.subr.mxu0 0.0
        %1979 = vmatpush1.msra.mxu0 0.0
        %1980 = vmatprep.subr.mxu0 0.0
        %1981 = vmatpush1.msra.mxu0 0.0
        %1982 = vmatprep.subr.mxu0 0.0
        %1983 = vmatpush1.msra.mxu0 0.0
        %1984 = vmatprep.subr.mxu0 0.0
        %1985 = vmatpush1.msra.mxu0 0.0
        %1986 = vmatprep.subr.mxu0 0.0
        %1987 = vmatpush1.msra.mxu0 0.0
        %1988 = vmatprep.subr.mxu0 0.0
        %1989 = vmatpush1.msra.mxu0 0.0
        %1990 = vmatprep.subr.mxu0 0.0
        %1991 = vmatpush1.msra.mxu0 0.0
        %1992 = vmatprep.subr.mxu0 0.0
        %1993 = vmatpush1.msra.mxu0 0.0
        %1994 = vmatprep.subr.mxu0 0.0
        %1995 = vmatpush1.msra.mxu0 0.0
        %1996 = vmatprep.subr.mxu0 0.0
        %1997 = vmatpush1.msra.mxu0 0.0
        %1998 = vmatprep.subr.mxu0 0.0
        %1999 = vmatpush1.msra.mxu0 0.0
        %2000 = vmatprep.subr.mxu0 0.0
        %2001 = vmatpush1.msra.mxu0 0.0
        %2002 = vmatprep.subr.mxu0 0.0
        %2003 = vmatpush1.msra.mxu0 0.0
        %2004 = vmatprep.subr.mxu0 0.0
        %2005 = vmatpush1.msra.mxu0 0.0
        %2006 = vmatprep.subr.mxu0 0.0
        %2007 = vmatpush1.msra.mxu0 0.0
        %2008 = vmatprep.subr.mxu0 0.0
        %2009 = vmatpush1.msra.mxu0 0.0
        %2010 = vmatprep.subr.mxu0 0.0
        %2011 = vmatpush1.msra.mxu0 0.0
        %2012 = vmatprep.mubr.f32.mxu0 0.0
        %2013 = vmatmul.mubr.f32.gmra.mrb[0].mxu0 %v1853
        %v2014 = vpop.f32.mrb[0].mxu0
        %v2015 = vadd.f32 %v1849, %v2014
        %v2016 = vpop.f32.mrb[0].mxu0
        %v2017 = vadd.f32 %v1849, %v2016
        %2018 = vdwg.mxu0
        %2019 = vmatprep.subr.mxu0 %v1780
        %2020 = vmatpush1.msra.mxu0 %v1779
        %2021 = vmatprep.subr.mxu0 %v1787
        %2022 = vmatpush1.msra.mxu0 %v1786
        %2023 = vmatprep.subr.mxu0 %v1794
        %2024 = vmatpush1.msra.mxu0 %v1793
        %2025 = vmatprep.subr.mxu0 %v1801
        %2026 = vmatpush1.msra.mxu0 %v1800
        %2027 = vmatprep.subr.mxu0 %v1808
        %2028 = vmatpush1.msra.mxu0 %v1807
        %2029 = vmatprep.subr.mxu0 %v1815
        %2030 = vmatpush1.msra.mxu0 %v1814
        %2031 = vmatprep.subr.mxu0 %v1822
        %2032 = vmatpush1.msra.mxu0 %v1821
        %2033 = vmatprep.subr.mxu0 %v1829
        %2034 = vmatpush1.msra.mxu0 %v1828
        %2035 = vmatprep.subr.mxu0 %v1836
        %2036 = vmatpush1.msra.mxu0 %v1835
        %2037 = vmatprep.subr.mxu0 %v1872
        %2038 = vmatpush1.msra.mxu0 %v1869
        %2039 = vmatprep.subr.mxu0 0.0
        %2040 = vmatpush1.msra.mxu0 0.0
        %2041 = vmatprep.subr.mxu0 0.0
        %2042 = vmatpush1.msra.mxu0 0.0
        %2043 = vmatprep.subr.mxu0 0.0
        %2044 = vmatpush1.msra.mxu0 0.0
        %2045 = vmatprep.subr.mxu0 0.0
        %2046 = vmatpush1.msra.mxu0 0.0
        %2047 = vmatprep.subr.mxu0 0.0
        %2048 = vmatpush1.msra.mxu0 0.0
        %2049 = vmatprep.subr.mxu0 0.0
        %2050 = vmatpush1.msra.mxu0 0.0
        %2051 = vmatprep.subr.mxu0 0.0
        %2052 = vmatpush1.msra.mxu0 0.0
        %2053 = vmatprep.subr.mxu0 0.0
        %2054 = vmatpush1.msra.mxu0 0.0
        %2055 = vmatprep.subr.mxu0 0.0
        %2056 = vmatpush1.msra.mxu0 0.0
        %2057 = vmatprep.subr.mxu0 0.0
        %2058 = vmatpush1.msra.mxu0 0.0
        %2059 = vmatprep.subr.mxu0 0.0
        %2060 = vmatpush1.msra.mxu0 0.0
        %2061 = vmatprep.subr.mxu0 0.0
        %2062 = vmatpush1.msra.mxu0 0.0
        %2063 = vmatprep.subr.mxu0 0.0
        %2064 = vmatpush1.msra.mxu0 0.0
        %2065 = vmatprep.subr.mxu0 0.0
        %2066 = vmatpush1.msra.mxu0 0.0
        %2067 = vmatprep.subr.mxu0 0.0
        %2068 = vmatpush1.msra.mxu0 0.0
        %2069 = vmatprep.subr.mxu0 0.0
        %2070 = vmatpush1.msra.mxu0 0.0
        %2071 = vmatprep.subr.mxu0 0.0
        %2072 = vmatpush1.msra.mxu0 0.0
        %2073 = vmatprep.subr.mxu0 0.0
        %2074 = vmatpush1.msra.mxu0 0.0
        %2075 = vmatprep.subr.mxu0 0.0
        %2076 = vmatpush1.msra.mxu0 0.0
        %2077 = vmatprep.subr.mxu0 0.0
        %2078 = vmatpush1.msra.mxu0 0.0
        %2079 = vmatprep.subr.mxu0 0.0
        %2080 = vmatpush1.msra.mxu0 0.0
        %2081 = vmatprep.subr.mxu0 0.0
        %2082 = vmatpush1.msra.mxu0 0.0
        %2083 = vmatprep.mubr.f32.mxu0 0.0
        %2084 = vmatmul.mubr.f32.gmra.mrb[0].mxu0 %v1853
        %v2085 = vpop.f32.mrb[0].mxu0
        %v2086 = vadd.f32 %v1849, %v2085
        %v2087 = vpop.f32.mrb[0].mxu0
        %v2088 = vadd.f32 %v1849, %v2087
        %2089 = vdwg.mxu0
        %2090 = vmatprep.subr.mxu0 0.0
        %2091 = vmatpush1.msra.mxu0 %v1781
        %2092 = vmatprep.subr.mxu0 0.0
        %2093 = vmatpush1.msra.mxu0 %v1788
        %2094 = vmatprep.subr.mxu0 0.0
        %2095 = vmatpush1.msra.mxu0 %v1795
        %2096 = vmatprep.subr.mxu0 0.0
        %2097 = vmatpush1.msra.mxu0 %v1802
        %2098 = vmatprep.subr.mxu0 0.0
        %2099 = vmatpush1.msra.mxu0 %v1809
        %2100 = vmatprep.subr.mxu0 0.0
        %2101 = vmatpush1.msra.mxu0 %v1816
        %2102 = vmatprep.subr.mxu0 0.0
        %2103 = vmatpush1.msra.mxu0 %v1823
        %2104 = vmatprep.subr.mxu0 0.0
        %2105 = vmatpush1.msra.mxu0 %v1830
        %2106 = vmatprep.subr.mxu0 0.0
        %2107 = vmatpush1.msra.mxu0 %v1837
        %2108 = vmatprep.subr.mxu0 0.0
        %2109 = vmatpush1.msra.mxu0 %v1875
        %2110 = vmatprep.subr.mxu0 0.0
        %2111 = vmatpush1.msra.mxu0 0.0
        %2112 = vmatprep.subr.mxu0 0.0
        %2113 = vmatpush1.msra.mxu0 0.0
        %2114 = vmatprep.subr.mxu0 0.0
        %2115 = vmatpush1.msra.mxu0 0.0
        %2116 = vmatprep.subr.mxu0 0.0
        %2117 = vmatpush1.msra.mxu0 0.0
        %2118 = vmatprep.subr.mxu0 0.0
        %2119 = vmatpush1.msra.mxu0 0.0
        %2120 = vmatprep.subr.mxu0 0.0
        %2121 = vmatpush1.msra.mxu0 0.0
        %2122 = vmatprep.subr.mxu0 0.0
        %2123 = vmatpush1.msra.mxu0 0.0
        %2124 = vmatprep.subr.mxu0 0.0
        %2125 = vmatpush1.msra.mxu0 0.0
        %2126 = vmatprep.subr.mxu0 0.0
        %2127 = vmatpush1.msra.mxu0 0.0
        %2128 = vmatprep.subr.mxu0 0.0
        %2129 = vmatpush1.msra.mxu0 0.0
        %2130 = vmatprep.subr.mxu0 0.0
        %2131 = vmatpush1.msra.mxu0 0.0
        %2132 = vmatprep.subr.mxu0 0.0
        %2133 = vmatpush1.msra.mxu0 0.0
        %2134 = vmatprep.subr.mxu0 0.0
        %2135 = vmatpush1.msra.mxu0 0.0
        %2136 = vmatprep.subr.mxu0 0.0
        %2137 = vmatpush1.msra.mxu0 0.0
        %2138 = vmatprep.subr.mxu0 0.0
        %2139 = vmatpush1.msra.mxu0 0.0
        %2140 = vmatprep.subr.mxu0 0.0
        %2141 = vmatpush1.msra.mxu0 0.0
        %2142 = vmatprep.subr.mxu0 0.0
        %2143 = vmatpush1.msra.mxu0 0.0
        %2144 = vmatprep.subr.mxu0 0.0
        %2145 = vmatpush1.msra.mxu0 0.0
        %2146 = vmatprep.subr.mxu0 0.0
        %2147 = vmatpush1.msra.mxu0 0.0
        %2148 = vmatprep.subr.mxu0 0.0
        %2149 = vmatpush1.msra.mxu0 0.0
        %2150 = vmatprep.subr.mxu0 0.0
        %2151 = vmatpush1.msra.mxu0 0.0
        %2152 = vmatprep.subr.mxu0 0.0
        %2153 = vmatpush1.msra.mxu0 0.0
        %2154 = vmatprep.mubr.f32.mxu0 0.0
        %2155 = vmatmul.mubr.f32.gmra.mrb[0].mxu0 %v1853
        %v2156 = vpop.f32.mrb[0].mxu0
        %v2157 = vadd.f32 %v1849, %v2156
        %v2158 = vpop.f32.mrb[0].mxu0
        %2159 = vdwg.mxu0
        %v2160 = vmax.f32 %v1944, 0.0
        %v2161 = vmax.f32 %v1946, 0.0
        %v2162 = vmax.f32 %v2015, 0.0
        %v2163 = vmax.f32 %v2017, 0.0
        %v2164 = vmax.f32 %v2086, 0.0
        %v2165 = vmax.f32 %v2088, 0.0
        %v2166 = vmax.f32 %v2157, 0.0
        %2174 = vrot.lane.b32.xlu0 %v2160, 127
        %v2175 = vpop.permute.xlu0 %2174
        %2176 = vrot.lane.b32.xlu0 %v2161, 127
        %v2177 = vpop.permute.xlu0 %2176
        %2178 = vrot.lane.b32.xlu0 %v2162, 127
        %v2179 = vpop.permute.xlu0 %2178
        %2180 = vrot.lane.b32.xlu0 %v2163, 127
        %v2181 = vpop.permute.xlu0 %2180
        %2182 = vrot.lane.b32.xlu0 %v2164, 127
        %v2183 = vpop.permute.xlu0 %2182
        %2184 = vrot.lane.b32.xlu0 %v2165, 127
        %v2185 = vpop.permute.xlu0 %2184
        %2186 = vrot.lane.b32.xlu0 %v2166, 127
        %v2187 = vpop.permute.xlu0 %2186
        %v2188 = vsel %vm479, %v2175, %v2177
        %v2189 = vsel %vm479, %v2177, %v2179
        %v2190 = vsel %vm479, %v2179, %v2181
        %v2191 = vsel %vm479, %v2181, %v2183
        %v2192 = vsel %vm479, %v2183, %v2185
        %v2193 = vsel %vm479, %v2185, %v2187
        %v2201 = vmax.f32 %v2160, %v2188
        %v2202 = vmax.f32 %v2161, %v2189
        %v2203 = vmax.f32 %v2162, %v2190
        %v2204 = vmax.f32 %v2163, %v2191
        %v2205 = vmax.f32 %v2164, %v2192
        %v2206 = vmax.f32 %v2165, %v2193
        %v2207 = vmax.f32 %v2166, %v2187
        %2215 = vrot.lane.b32.xlu0 %v2201, 96
        %v2216 = vpop.permute.xlu0 %2215
        %2217 = vrot.lane.b32.xlu0 %v2202, 96
        %v2218 = vpop.permute.xlu0 %2217
        %2219 = vrot.lane.b32.xlu0 %v2203, 96
        %v2220 = vpop.permute.xlu0 %2219
        %2221 = vrot.lane.b32.xlu0 %v2204, 96
        %v2222 = vpop.permute.xlu0 %2221
        %2223 = vrot.lane.b32.xlu0 %v2205, 96
        %v2224 = vpop.permute.xlu0 %2223
        %2225 = vrot.lane.b32.xlu0 %v2206, 96
        %v2226 = vpop.permute.xlu0 %2225
        %2227 = vrot.lane.b32.xlu0 %v2207, 96
        %v2228 = vpop.permute.xlu0 %2227
        %v2229 = vsel %vm701, %v2216, %v2218
        %v2230 = vsel %vm701, %v2218, %v2220
        %v2231 = vsel %vm701, %v2220, %v2222
        %v2232 = vsel %vm701, %v2222, %v2224
        %v2233 = vsel %vm701, %v2224, %v2226
        %v2234 = vsel %vm701, %v2226, %v2228
        %v2242 = vmax.f32 %v2201, %v2229
        %v2243 = vmax.f32 %v2202, %v2230
        %v2244 = vmax.f32 %v2203, %v2231
        %v2245 = vmax.f32 %v2204, %v2232
        %v2246 = vmax.f32 %v2205, %v2233
        %v2247 = vmax.f32 %v2206, %v2234
        %v2248 = vmax.f32 %v2207, %v2228
        %2249 = vst [vmem:[#allocation3] sm:$0x3f] %v2242
        %2250 = vst [vmem:[#allocation3 + $0x8] sm:$0x3f] %v2243
        %2251 = vst [vmem:[#allocation3 + $0x10] sm:$0x3f] %v2244
        %2252 = vst [vmem:[#allocation3 + $0x18] sm:$0x3f] %v2245
        %vm2253 = vcmask 676864
        %2254 = vst.msk [vmem:[#allocation3 + $0x20] sm:$0x3f] %vm2253, %v2246
        %v2260 = vrot.slane %v2242, 2
        %v2261 = vrot.slane %v2243, 2
        %v2262 = vrot.slane %v2244, 2
        %v2263 = vrot.slane %v2245, 2
        %v2264 = vrot.slane %v2246, 2
        %2265 = vrot.lane.b32.xlu0 %v2260, 126
        %v2266 = vpop.permute.xlu0 %2265
        %2267 = vrot.lane.b32.xlu0 %v2261, 126
        %v2268 = vpop.permute.xlu0 %2267
        %2269 = vrot.lane.b32.xlu0 %v2262, 126
        %v2270 = vpop.permute.xlu0 %2269
        %2271 = vrot.lane.b32.xlu0 %v2263, 126
        %v2272 = vpop.permute.xlu0 %2271
        %2273 = vrot.lane.b32.xlu0 %v2264, 126
        %v2274 = vpop.permute.xlu0 %2273
        %v2275 = vsel %vm533, %v2266, %v2268
        %v2276 = vsel %vm533, %v2268, %v2270
        %v2277 = vsel %vm533, %v2270, %v2272
        %v2278 = vsel %vm533, %v2272, %v2274
        %2284 = vst [vmem:[#allocation3] sm:$0xc0] %v2275
        %2285 = vst [vmem:[#allocation3 + $0x8] sm:$0xc0] %v2276
        %2286 = vst [vmem:[#allocation3 + $0x10] sm:$0xc0] %v2277
        %2287 = vst [vmem:[#allocation3 + $0x18] sm:$0xc0] %v2278
        %vm2288 = vcmask 678918
        %2289 = vst.msk [vmem:[#allocation3 + $0x20] sm:$0xc0] %vm2288, %v2274
        %2290 = vst [vmem:[#allocation3 + $0x28] sm:$0xf] %v2275
        %2291 = vst [vmem:[#allocation3 + $0x30] sm:$0xf] %v2276
        %2292 = vst [vmem:[#allocation3 + $0x38] sm:$0xf] %v2277
        %2293 = vst [vmem:[#allocation3 + $0x40] sm:$0xf] %v2278
        %vm2294 = vcmask 674816
        %2295 = vst.msk [vmem:[#allocation3 + $0x48] sm:$0xf] %vm2294, %v2274
        %v2296 = vrot.slane %v2242, 4
        %v2297 = vrot.slane %v2243, 4
        %v2298 = vrot.slane %v2244, 4
        %v2299 = vrot.slane %v2245, 4
        %v2300 = vrot.slane %v2246, 4
        %2301 = vrot.lane.b32.xlu0 %v2296, 124
        %v2302 = vpop.permute.xlu0 %2301
        %2303 = vrot.lane.b32.xlu0 %v2297, 124
        %v2304 = vpop.permute.xlu0 %2303
        %2305 = vrot.lane.b32.xlu0 %v2298, 124
        %v2306 = vpop.permute.xlu0 %2305
        %2307 = vrot.lane.b32.xlu0 %v2299, 124
        %v2308 = vpop.permute.xlu0 %2307
        %2309 = vrot.lane.b32.xlu0 %v2300, 124
        %v2310 = vpop.permute.xlu0 %2309
        %v2311 = vsel %vm643, %v2302, %v2304
        %v2312 = vsel %vm643, %v2304, %v2306
        %v2313 = vsel %vm643, %v2306, %v2308
        %v2314 = vsel %vm643, %v2308, %v2310
        %2320 = vst [vmem:[#allocation3 + $0x28] sm:$0xf0] %v2311
        %2321 = vst [vmem:[#allocation3 + $0x30] sm:$0xf0] %v2312
        %2322 = vst [vmem:[#allocation3 + $0x38] sm:$0xf0] %v2313
        %2323 = vst [vmem:[#allocation3 + $0x40] sm:$0xf0] %v2314
        %vm2324 = vcmask 678916
        %2325 = vst.msk [vmem:[#allocation3 + $0x48] sm:$0xf0] %vm2324, %v2310
        %2326 = vst [vmem:[#allocation3 + $0x50] sm:$0x3] %v2311
        %2327 = vst [vmem:[#allocation3 + $0x58] sm:$0x3] %v2312
        %2328 = vst [vmem:[#allocation3 + $0x60] sm:$0x3] %v2313
        %2329 = vst [vmem:[#allocation3 + $0x68] sm:$0x3] %v2314
        %vm2330 = vcmask 672768
        %2331 = vst.msk [vmem:[#allocation3 + $0x70] sm:$0x3] %vm2330, %v2310
        %v2332 = vrot.slane %v2242, 6
        %v2333 = vrot.slane %v2243, 6
        %v2334 = vrot.slane %v2244, 6
        %v2335 = vrot.slane %v2245, 6
        %v2336 = vrot.slane %v2246, 6
        %2337 = vrot.lane.b32.xlu0 %v2332, 122
        %v2338 = vpop.permute.xlu0 %2337
        %2339 = vrot.lane.b32.xlu0 %v2333, 122
        %v2340 = vpop.permute.xlu0 %2339
        %2341 = vrot.lane.b32.xlu0 %v2334, 122
        %v2342 = vpop.permute.xlu0 %2341
        %2343 = vrot.lane.b32.xlu0 %v2335, 122
        %v2344 = vpop.permute.xlu0 %2343
        %2345 = vrot.lane.b32.xlu0 %v2336, 122
        %v2346 = vpop.permute.xlu0 %2345
        %vm2347 = vcmask 998400
        %v2348 = vsel %vm2347, %v2338, %v2340
        %v2349 = vsel %vm2347, %v2340, %v2342
        %v2350 = vsel %vm2347, %v2342, %v2344
        %v2351 = vsel %vm2347, %v2344, %v2346
        %2357 = vst [vmem:[#allocation3 + $0x50] sm:$0xfc] %v2348
        %2358 = vst [vmem:[#allocation3 + $0x58] sm:$0xfc] %v2349
        %2359 = vst [vmem:[#allocation3 + $0x60] sm:$0xfc] %v2350
        %2360 = vst [vmem:[#allocation3 + $0x68] sm:$0xfc] %v2351
        %vm2361 = vcmask 678914
        %2362 = vst.msk [vmem:[#allocation3 + $0x70] sm:$0xfc] %vm2361, %v2346
        %2363 = vrot.lane.b32.xlu0 %v2242, 120
        %v2364 = vpop.permute.xlu0 %2363
        %2365 = vrot.lane.b32.xlu0 %v2243, 120
        %v2366 = vpop.permute.xlu0 %2365
        %2367 = vrot.lane.b32.xlu0 %v2244, 120
        %v2368 = vpop.permute.xlu0 %2367
        %2369 = vrot.lane.b32.xlu0 %v2245, 120
        %v2370 = vpop.permute.xlu0 %2369
        %2371 = vrot.lane.b32.xlu0 %v2246, 120
        %v2372 = vpop.permute.xlu0 %2371
        %vm2373 = vcmask 982016
        %v2374 = vsel %vm2373, %v2364, %v2366
        %v2375 = vsel %vm2373, %v2366, %v2368
        %v2376 = vsel %vm2373, %v2368, %v2370
        %v2377 = vsel %vm2373, %v2370, %v2372
        %2383 = vst [vmem:[#allocation3 + $0x78] sm:$0x3f] %v2374
        %2384 = vst [vmem:[#allocation3 + $0x80] sm:$0x3f] %v2375
        %2385 = vst [vmem:[#allocation3 + $0x88] sm:$0x3f] %v2376
        %2386 = vst [vmem:[#allocation3 + $0x90] sm:$0x3f] %v2377
        %2387 = vst.msk [vmem:[#allocation3 + $0x98] sm:$0x3f] %vm2253, %v2372
        %v2389 = vrot.slane %v2247, 2
        %2390 = vrot.lane.b32.xlu0 %v2260, 64
        %v2391 = vpop.permute.xlu0 %2390
        %2392 = vrot.lane.b32.xlu0 %v2261, 64
        %v2393 = vpop.permute.xlu0 %2392
        %2394 = vrot.lane.b32.xlu0 %v2262, 64
        %v2395 = vpop.permute.xlu0 %2394
        %2396 = vrot.lane.b32.xlu0 %v2263, 64
        %v2397 = vpop.permute.xlu0 %2396
        %2398 = vrot.lane.b32.xlu0 %v2264, 64
        %v2399 = vpop.permute.xlu0 %2398
        %2400 = vrot.lane.b32.xlu0 %v2389, 64
        %v2401 = vpop.permute.xlu0 %2400
        %v2402 = vsel %vm994, %v2391, %v2393
        %v2403 = vsel %vm994, %v2393, %v2395
        %v2404 = vsel %vm994, %v2395, %v2397
        %v2405 = vsel %vm994, %v2397, %v2399
        %v2406 = vsel %vm994, %v2399, %v2401
        %2412 = vst [vmem:[#allocation3 + $0x78] sm:$0xc0] %v2402
        %2413 = vst [vmem:[#allocation3 + $0x80] sm:$0xc0] %v2403
        %2414 = vst [vmem:[#allocation3 + $0x88] sm:$0xc0] %v2404
        %2415 = vst [vmem:[#allocation3 + $0x90] sm:$0xc0] %v2405
        %2416 = vst.msk [vmem:[#allocation3 + $0x98] sm:$0xc0] %vm2288, %v2406
        %2417 = vst [vmem:[#allocation3 + $0xa0] sm:$0xf] %v2402
        %2418 = vst [vmem:[#allocation3 + $0xa8] sm:$0xf] %v2403
        %2419 = vst [vmem:[#allocation3 + $0xb0] sm:$0xf] %v2404
        %2420 = vst [vmem:[#allocation3 + $0xb8] sm:$0xf] %v2405
        %2421 = vst.msk [vmem:[#allocation3 + $0xc0] sm:$0xf] %vm2294, %v2406
        %v2422 = vrot.slane %v2247, 4
        %2423 = vrot.lane.b32.xlu0 %v2296, 62
        %v2424 = vpop.permute.xlu0 %2423
        %2425 = vrot.lane.b32.xlu0 %v2297, 62
        %v2426 = vpop.permute.xlu0 %2425
        %2427 = vrot.lane.b32.xlu0 %v2298, 62
        %v2428 = vpop.permute.xlu0 %2427
        %2429 = vrot.lane.b32.xlu0 %v2299, 62
        %v2430 = vpop.permute.xlu0 %2429
        %2431 = vrot.lane.b32.xlu0 %v2300, 62
        %v2432 = vpop.permute.xlu0 %2431
        %2433 = vrot.lane.b32.xlu0 %v2422, 62
        %v2434 = vpop.permute.xlu0 %2433
        %v2435 = vsel %vm1109, %v2424, %v2426
        %v2436 = vsel %vm1109, %v2426, %v2428
        %v2437 = vsel %vm1109, %v2428, %v2430
        %v2438 = vsel %vm1109, %v2430, %v2432
        %v2439 = vsel %vm1109, %v2432, %v2434
        %2445 = vst [vmem:[#allocation3 + $0xa0] sm:$0xf0] %v2435
        %2446 = vst [vmem:[#allocation3 + $0xa8] sm:$0xf0] %v2436
        %2447 = vst [vmem:[#allocation3 + $0xb0] sm:$0xf0] %v2437
        %2448 = vst [vmem:[#allocation3 + $0xb8] sm:$0xf0] %v2438
        %2449 = vst.msk [vmem:[#allocation3 + $0xc0] sm:$0xf0] %vm2324, %v2439
        %2450 = vst [vmem:[#allocation3 + $0xc8] sm:$0x3] %v2435
        %2451 = vst [vmem:[#allocation3 + $0xd0] sm:$0x3] %v2436
        %2452 = vst [vmem:[#allocation3 + $0xd8] sm:$0x3] %v2437
        %2453 = vst [vmem:[#allocation3 + $0xe0] sm:$0x3] %v2438
        %2454 = vst.msk [vmem:[#allocation3 + $0xe8] sm:$0x3] %vm2330, %v2439
        %v2455 = vrot.slane %v2247, 6
        %2456 = vrot.lane.b32.xlu0 %v2332, 60
        %v2457 = vpop.permute.xlu0 %2456
        %2458 = vrot.lane.b32.xlu0 %v2333, 60
        %v2459 = vpop.permute.xlu0 %2458
        %2460 = vrot.lane.b32.xlu0 %v2334, 60
        %v2461 = vpop.permute.xlu0 %2460
        %2462 = vrot.lane.b32.xlu0 %v2335, 60
        %v2463 = vpop.permute.xlu0 %2462
        %2464 = vrot.lane.b32.xlu0 %v2336, 60
        %v2465 = vpop.permute.xlu0 %2464
        %2466 = vrot.lane.b32.xlu0 %v2455, 60
        %v2467 = vpop.permute.xlu0 %2466
        %v2468 = vsel %vm1232, %v2457, %v2459
        %v2469 = vsel %vm1232, %v2459, %v2461
        %v2470 = vsel %vm1232, %v2461, %v2463
        %v2471 = vsel %vm1232, %v2463, %v2465
        %v2472 = vsel %vm1232, %v2465, %v2467
        %2478 = vst [vmem:[#allocation3 + $0xc8] sm:$0xfc] %v2468
        %2479 = vst [vmem:[#allocation3 + $0xd0] sm:$0xfc] %v2469
        %2480 = vst [vmem:[#allocation3 + $0xd8] sm:$0xfc] %v2470
        %2481 = vst [vmem:[#allocation3 + $0xe0] sm:$0xfc] %v2471
        %2482 = vst.msk [vmem:[#allocation3 + $0xe8] sm:$0xfc] %vm2361, %v2472
        %2483 = vrot.lane.b32.xlu0 %v2242, 58
        %v2484 = vpop.permute.xlu0 %2483
        %2485 = vrot.lane.b32.xlu0 %v2243, 58
        %v2486 = vpop.permute.xlu0 %2485
        %2487 = vrot.lane.b32.xlu0 %v2244, 58
        %v2488 = vpop.permute.xlu0 %2487
        %2489 = vrot.lane.b32.xlu0 %v2245, 58
        %v2490 = vpop.permute.xlu0 %2489
        %2491 = vrot.lane.b32.xlu0 %v2246, 58
        %v2492 = vpop.permute.xlu0 %2491
        %2493 = vrot.lane.b32.xlu0 %v2247, 58
        %v2494 = vpop.permute.xlu0 %2493
        %vm2495 = vcmask 474112
        %v2496 = vsel %vm2495, %v2484, %v2486
        %v2497 = vsel %vm2495, %v2486, %v2488
        %v2498 = vsel %vm2495, %v2488, %v2490
        %v2499 = vsel %vm2495, %v2490, %v2492
        %v2500 = vsel %vm2495, %v2492, %v2494
        %2506 = vst [vmem:[#allocation3 + $0xf0] sm:$0x3f] %v2496
        %2507 = vst [vmem:[#allocation3 + $0xf8] sm:$0x3f] %v2497
        %2508 = vst [vmem:[#allocation3 + $0x100] sm:$0x3f] %v2498
        %2509 = vst [vmem:[#allocation3 + $0x108] sm:$0x3f] %v2499
        %2510 = vst.msk [vmem:[#allocation3 + $0x110] sm:$0x3f] %vm2253, %v2500
        %2511 = vrot.lane.b32.xlu0 %v2260, 56
        %v2512 = vpop.permute.xlu0 %2511
        %2513 = vrot.lane.b32.xlu0 %v2261, 56
        %v2514 = vpop.permute.xlu0 %2513
        %2515 = vrot.lane.b32.xlu0 %v2262, 56
        %v2516 = vpop.permute.xlu0 %2515
        %2517 = vrot.lane.b32.xlu0 %v2263, 56
        %v2518 = vpop.permute.xlu0 %2517
        %2519 = vrot.lane.b32.xlu0 %v2264, 56
        %v2520 = vpop.permute.xlu0 %2519
        %2521 = vrot.lane.b32.xlu0 %v2389, 56
        %v2522 = vpop.permute.xlu0 %2521
        %vm2523 = vcmask 457728
        %v2524 = vsel %vm2523, %v2512, %v2514
        %v2525 = vsel %vm2523, %v2514, %v2516
        %v2526 = vsel %vm2523, %v2516, %v2518
        %v2527 = vsel %vm2523, %v2518, %v2520
        %v2528 = vsel %vm2523, %v2520, %v2522
        %2534 = vst [vmem:[#allocation3 + $0xf0] sm:$0xc0] %v2524
        %2535 = vst [vmem:[#allocation3 + $0xf8] sm:$0xc0] %v2525
        %2536 = vst [vmem:[#allocation3 + $0x100] sm:$0xc0] %v2526
        %2537 = vst [vmem:[#allocation3 + $0x108] sm:$0xc0] %v2527
        %2538 = vst.msk [vmem:[#allocation3 + $0x110] sm:$0xc0] %vm2288, %v2528
        %2539 = vst [vmem:[#allocation3 + $0x118] sm:$0xf] %v2524
        %2540 = vst [vmem:[#allocation3 + $0x120] sm:$0xf] %v2525
        %2541 = vst [vmem:[#allocation3 + $0x128] sm:$0xf] %v2526
        %2542 = vst [vmem:[#allocation3 + $0x130] sm:$0xf] %v2527
        %2543 = vst.msk [vmem:[#allocation3 + $0x138] sm:$0xf] %vm2294, %v2528
        %2549 = vst [vmem:[#allocation3 + $0x118] sm:$0xf0] %v2297
        %2550 = vst [vmem:[#allocation3 + $0x120] sm:$0xf0] %v2298
        %2551 = vst [vmem:[#allocation3 + $0x128] sm:$0xf0] %v2299
        %2552 = vst [vmem:[#allocation3 + $0x130] sm:$0xf0] %v2300
        %2553 = vst.msk [vmem:[#allocation3 + $0x138] sm:$0xf0] %vm2324, %v2422
        %2554 = vst [vmem:[#allocation3 + $0x140] sm:$0x3] %v2297
        %2555 = vst [vmem:[#allocation3 + $0x148] sm:$0x3] %v2298
        %2556 = vst [vmem:[#allocation3 + $0x150] sm:$0x3] %v2299
        %2557 = vst [vmem:[#allocation3 + $0x158] sm:$0x3] %v2300
        %2558 = vst.msk [vmem:[#allocation3 + $0x160] sm:$0x3] %vm2330, %v2422
        %2559 = vrot.lane.b32.xlu0 %v2333, 126
        %v2560 = vpop.permute.xlu0 %2559
        %2561 = vrot.lane.b32.xlu0 %v2334, 126
        %v2562 = vpop.permute.xlu0 %2561
        %2563 = vrot.lane.b32.xlu0 %v2335, 126
        %v2564 = vpop.permute.xlu0 %2563
        %2565 = vrot.lane.b32.xlu0 %v2336, 126
        %v2566 = vpop.permute.xlu0 %2565
        %2567 = vrot.lane.b32.xlu0 %v2455, 126
        %v2568 = vpop.permute.xlu0 %2567
        %v2569 = vsel %vm533, %v2560, %v2562
        %v2570 = vsel %vm533, %v2562, %v2564
        %v2571 = vsel %vm533, %v2564, %v2566
        %v2572 = vsel %vm533, %v2566, %v2568
        %2578 = vst [vmem:[#allocation3 + $0x140] sm:$0xfc] %v2569
        %2579 = vst [vmem:[#allocation3 + $0x148] sm:$0xfc] %v2570
        %2580 = vst [vmem:[#allocation3 + $0x150] sm:$0xfc] %v2571
        %2581 = vst [vmem:[#allocation3 + $0x158] sm:$0xfc] %v2572
        %2582 = vst.msk [vmem:[#allocation3 + $0x160] sm:$0xfc] %vm2361, %v2568
        %2583 = vrot.lane.b32.xlu0 %v2243, 124
        %v2584 = vpop.permute.xlu0 %2583
        %2585 = vrot.lane.b32.xlu0 %v2244, 124
        %v2586 = vpop.permute.xlu0 %2585
        %2587 = vrot.lane.b32.xlu0 %v2245, 124
        %v2588 = vpop.permute.xlu0 %2587
        %2589 = vrot.lane.b32.xlu0 %v2246, 124
        %v2590 = vpop.permute.xlu0 %2589
        %2591 = vrot.lane.b32.xlu0 %v2247, 124
        %v2592 = vpop.permute.xlu0 %2591
        %v2593 = vsel %vm643, %v2584, %v2586
        %v2594 = vsel %vm643, %v2586, %v2588
        %v2595 = vsel %vm643, %v2588, %v2590
        %v2596 = vsel %vm643, %v2590, %v2592
        %2602 = vst [vmem:[#allocation3 + $0x168] sm:$0x3f] %v2593
        %2603 = vst [vmem:[#allocation3 + $0x170] sm:$0x3f] %v2594
        %2604 = vst [vmem:[#allocation3 + $0x178] sm:$0x3f] %v2595
        %2605 = vst [vmem:[#allocation3 + $0x180] sm:$0x3f] %v2596
        %2606 = vst.msk [vmem:[#allocation3 + $0x188] sm:$0x3f] %vm2253, %v2592
        %2607 = vrot.lane.b32.xlu0 %v2261, 122
        %v2608 = vpop.permute.xlu0 %2607
        %2609 = vrot.lane.b32.xlu0 %v2262, 122
        %v2610 = vpop.permute.xlu0 %2609
        %2611 = vrot.lane.b32.xlu0 %v2263, 122
        %v2612 = vpop.permute.xlu0 %2611
        %2613 = vrot.lane.b32.xlu0 %v2264, 122
        %v2614 = vpop.permute.xlu0 %2613
        %2615 = vrot.lane.b32.xlu0 %v2389, 122
        %v2616 = vpop.permute.xlu0 %2615
        %v2617 = vsel %vm2347, %v2608, %v2610
        %v2618 = vsel %vm2347, %v2610, %v2612
        %v2619 = vsel %vm2347, %v2612, %v2614
        %v2620 = vsel %vm2347, %v2614, %v2616
        %2626 = vst [vmem:[#allocation3 + $0x168] sm:$0xc0] %v2617
        %2627 = vst [vmem:[#allocation3 + $0x170] sm:$0xc0] %v2618
        %2628 = vst [vmem:[#allocation3 + $0x178] sm:$0xc0] %v2619
        %2629 = vst [vmem:[#allocation3 + $0x180] sm:$0xc0] %v2620
        %2630 = vst.msk [vmem:[#allocation3 + $0x188] sm:$0xc0] %vm2288, %v2616
        %2631 = vst [vmem:[#allocation3 + $0x190] sm:$0xf] %v2617
        %2632 = vst [vmem:[#allocation3 + $0x198] sm:$0xf] %v2618
        %2633 = vst [vmem:[#allocation3 + $0x1a0] sm:$0xf] %v2619
        %2634 = vst [vmem:[#allocation3 + $0x1a8] sm:$0xf] %v2620
        %2635 = vst.msk [vmem:[#allocation3 + $0x1b0] sm:$0xf] %vm2294, %v2616
        %2636 = vrot.lane.b32.xlu0 %v2297, 120
        %v2637 = vpop.permute.xlu0 %2636
        %2638 = vrot.lane.b32.xlu0 %v2298, 120
        %v2639 = vpop.permute.xlu0 %2638
        %2640 = vrot.lane.b32.xlu0 %v2299, 120
        %v2641 = vpop.permute.xlu0 %2640
        %2642 = vrot.lane.b32.xlu0 %v2300, 120
        %v2643 = vpop.permute.xlu0 %2642
        %2644 = vrot.lane.b32.xlu0 %v2422, 120
        %v2645 = vpop.permute.xlu0 %2644
        %v2646 = vsel %vm2373, %v2637, %v2639
        %v2647 = vsel %vm2373, %v2639, %v2641
        %v2648 = vsel %vm2373, %v2641, %v2643
        %v2649 = vsel %vm2373, %v2643, %v2645
        %2655 = vst [vmem:[#allocation3 + $0x190] sm:$0xf0] %v2646
        %2656 = vst [vmem:[#allocation3 + $0x198] sm:$0xf0] %v2647
        %2657 = vst [vmem:[#allocation3 + $0x1a0] sm:$0xf0] %v2648
        %2658 = vst [vmem:[#allocation3 + $0x1a8] sm:$0xf0] %v2649
        %2659 = vst.msk [vmem:[#allocation3 + $0x1b0] sm:$0xf0] %vm2324, %v2645
        %2660 = vst [vmem:[#allocation3 + $0x1b8] sm:$0x3] %v2646
        %2661 = vst [vmem:[#allocation3 + $0x1c0] sm:$0x3] %v2647
        %2662 = vst [vmem:[#allocation3 + $0x1c8] sm:$0x3] %v2648
        %2663 = vst [vmem:[#allocation3 + $0x1d0] sm:$0x3] %v2649
        %2664 = vst.msk [vmem:[#allocation3 + $0x1d8] sm:$0x3] %vm2330, %v2645
        %v2666 = vrot.slane %v2248, 6
        %2667 = vrot.lane.b32.xlu0 %v2333, 64
        %v2668 = vpop.permute.xlu0 %2667
        %2669 = vrot.lane.b32.xlu0 %v2334, 64
        %v2670 = vpop.permute.xlu0 %2669
        %2671 = vrot.lane.b32.xlu0 %v2335, 64
        %v2672 = vpop.permute.xlu0 %2671
        %2673 = vrot.lane.b32.xlu0 %v2336, 64
        %v2674 = vpop.permute.xlu0 %2673
        %2675 = vrot.lane.b32.xlu0 %v2455, 64
        %v2676 = vpop.permute.xlu0 %2675
        %2677 = vrot.lane.b32.xlu0 %v2666, 64
        %v2678 = vpop.permute.xlu0 %2677
        %v2679 = vsel %vm994, %v2668, %v2670
        %v2680 = vsel %vm994, %v2670, %v2672
        %v2681 = vsel %vm994, %v2672, %v2674
        %v2682 = vsel %vm994, %v2674, %v2676
        %v2683 = vsel %vm994, %v2676, %v2678
        %2689 = vst [vmem:[#allocation3 + $0x1b8] sm:$0xfc] %v2679
        %2690 = vst [vmem:[#allocation3 + $0x1c0] sm:$0xfc] %v2680
        %2691 = vst [vmem:[#allocation3 + $0x1c8] sm:$0xfc] %v2681
        %2692 = vst [vmem:[#allocation3 + $0x1d0] sm:$0xfc] %v2682
        %2693 = vst.msk [vmem:[#allocation3 + $0x1d8] sm:$0xfc] %vm2361, %v2683
        %2694 = vrot.lane.b32.xlu0 %v2243, 62
        %v2695 = vpop.permute.xlu0 %2694
        %2696 = vrot.lane.b32.xlu0 %v2244, 62
        %v2697 = vpop.permute.xlu0 %2696
        %2698 = vrot.lane.b32.xlu0 %v2245, 62
        %v2699 = vpop.permute.xlu0 %2698
        %2700 = vrot.lane.b32.xlu0 %v2246, 62
        %v2701 = vpop.permute.xlu0 %2700
        %2702 = vrot.lane.b32.xlu0 %v2247, 62
        %v2703 = vpop.permute.xlu0 %2702
        %2704 = vrot.lane.b32.xlu0 %v2248, 62
        %v2705 = vpop.permute.xlu0 %2704
        %v2706 = vsel %vm1109, %v2695, %v2697
        %v2707 = vsel %vm1109, %v2697, %v2699
        %v2708 = vsel %vm1109, %v2699, %v2701
        %v2709 = vsel %vm1109, %v2701, %v2703
        %v2710 = vsel %vm1109, %v2703, %v2705
        %2716 = vst [vmem:[#allocation3 + $0x1e0] sm:$0x3f] %v2706
        %2717 = vst [vmem:[#allocation3 + $0x1e8] sm:$0x3f] %v2707
        %2718 = vst [vmem:[#allocation3 + $0x1f0] sm:$0x3f] %v2708
        %2719 = vst [vmem:[#allocation3 + $0x1f8] sm:$0x3f] %v2709
        %2720 = vst.msk [vmem:[#allocation3 + $0x200] sm:$0x3f] %vm2253, %v2710
        %v2721 = vrot.slane %v2248, 2
        %2722 = vrot.lane.b32.xlu0 %v2261, 60
        %v2723 = vpop.permute.xlu0 %2722
        %2724 = vrot.lane.b32.xlu0 %v2262, 60
        %v2725 = vpop.permute.xlu0 %2724
        %2726 = vrot.lane.b32.xlu0 %v2263, 60
        %v2727 = vpop.permute.xlu0 %2726
        %2728 = vrot.lane.b32.xlu0 %v2264, 60
        %v2729 = vpop.permute.xlu0 %2728
        %2730 = vrot.lane.b32.xlu0 %v2389, 60
        %v2731 = vpop.permute.xlu0 %2730
        %2732 = vrot.lane.b32.xlu0 %v2721, 60
        %v2733 = vpop.permute.xlu0 %2732
        %v2734 = vsel %vm1232, %v2723, %v2725
        %v2735 = vsel %vm1232, %v2725, %v2727
        %v2736 = vsel %vm1232, %v2727, %v2729
        %v2737 = vsel %vm1232, %v2729, %v2731
        %v2738 = vsel %vm1232, %v2731, %v2733
        %2744 = vst [vmem:[#allocation3 + $0x1e0] sm:$0xc0] %v2734
        %2745 = vst [vmem:[#allocation3 + $0x1e8] sm:$0xc0] %v2735
        %2746 = vst [vmem:[#allocation3 + $0x1f0] sm:$0xc0] %v2736
        %2747 = vst [vmem:[#allocation3 + $0x1f8] sm:$0xc0] %v2737
        %2748 = vst.msk [vmem:[#allocation3 + $0x200] sm:$0xc0] %vm2288, %v2738
        %2749 = vst [vmem:[#allocation3 + $0x208] sm:$0xf] %v2734
        %2750 = vst [vmem:[#allocation3 + $0x210] sm:$0xf] %v2735
        %2751 = vst [vmem:[#allocation3 + $0x218] sm:$0xf] %v2736
        %2752 = vst [vmem:[#allocation3 + $0x220] sm:$0xf] %v2737
        %2753 = vst.msk [vmem:[#allocation3 + $0x228] sm:$0xf] %vm2294, %v2738
        %v2754 = vrot.slane %v2248, 4
        %2755 = vrot.lane.b32.xlu0 %v2297, 58
        %v2756 = vpop.permute.xlu0 %2755
        %2757 = vrot.lane.b32.xlu0 %v2298, 58
        %v2758 = vpop.permute.xlu0 %2757
        %2759 = vrot.lane.b32.xlu0 %v2299, 58
        %v2760 = vpop.permute.xlu0 %2759
        %2761 = vrot.lane.b32.xlu0 %v2300, 58
        %v2762 = vpop.permute.xlu0 %2761
        %2763 = vrot.lane.b32.xlu0 %v2422, 58
        %v2764 = vpop.permute.xlu0 %2763
        %2765 = vrot.lane.b32.xlu0 %v2754, 58
        %v2766 = vpop.permute.xlu0 %2765
        %v2767 = vsel %vm2495, %v2756, %v2758
        %v2768 = vsel %vm2495, %v2758, %v2760
        %v2769 = vsel %vm2495, %v2760, %v2762
        %v2770 = vsel %vm2495, %v2762, %v2764
        %v2771 = vsel %vm2495, %v2764, %v2766
        %2777 = vst [vmem:[#allocation3 + $0x208] sm:$0xf0] %v2767
        %2778 = vst [vmem:[#allocation3 + $0x210] sm:$0xf0] %v2768
        %2779 = vst [vmem:[#allocation3 + $0x218] sm:$0xf0] %v2769
        %2780 = vst [vmem:[#allocation3 + $0x220] sm:$0xf0] %v2770
        %2781 = vst.msk [vmem:[#allocation3 + $0x228] sm:$0xf0] %vm2324, %v2771
        %2782 = vst [vmem:[#allocation3 + $0x230] sm:$0x3] %v2767
        %2783 = vst [vmem:[#allocation3 + $0x238] sm:$0x3] %v2768
        %2784 = vst [vmem:[#allocation3 + $0x240] sm:$0x3] %v2769
        %2785 = vst [vmem:[#allocation3 + $0x248] sm:$0x3] %v2770
        %2786 = vst.msk [vmem:[#allocation3 + $0x250] sm:$0x3] %vm2330, %v2771
        %2787 = vrot.lane.b32.xlu0 %v2333, 56
        %v2788 = vpop.permute.xlu0 %2787
        %2789 = vrot.lane.b32.xlu0 %v2334, 56
        %v2790 = vpop.permute.xlu0 %2789
        %2791 = vrot.lane.b32.xlu0 %v2335, 56
        %v2792 = vpop.permute.xlu0 %2791
        %2793 = vrot.lane.b32.xlu0 %v2336, 56
        %v2794 = vpop.permute.xlu0 %2793
        %2795 = vrot.lane.b32.xlu0 %v2455, 56
        %v2796 = vpop.permute.xlu0 %2795
        %2797 = vrot.lane.b32.xlu0 %v2666, 56
        %v2798 = vpop.permute.xlu0 %2797
        %v2799 = vsel %vm2523, %v2788, %v2790
        %v2800 = vsel %vm2523, %v2790, %v2792
        %v2801 = vsel %vm2523, %v2792, %v2794
        %v2802 = vsel %vm2523, %v2794, %v2796
        %v2803 = vsel %vm2523, %v2796, %v2798
        %2809 = vst [vmem:[#allocation3 + $0x230] sm:$0xfc] %v2799
        %2810 = vst [vmem:[#allocation3 + $0x238] sm:$0xfc] %v2800
        %2811 = vst [vmem:[#allocation3 + $0x240] sm:$0xfc] %v2801
        %2812 = vst [vmem:[#allocation3 + $0x248] sm:$0xfc] %v2802
        %2813 = vst.msk [vmem:[#allocation3 + $0x250] sm:$0xfc] %vm2361, %v2803
        %2814 = vst [vmem:[#allocation3 + $0x258] sm:$0x3f] %v2244
        %2815 = vst [vmem:[#allocation3 + $0x260] sm:$0x3f] %v2245
        %2816 = vst [vmem:[#allocation3 + $0x268] sm:$0x3f] %v2246
        %2817 = vst [vmem:[#allocation3 + $0x270] sm:$0x3f] %v2247
        %2818 = vst.msk [vmem:[#allocation3 + $0x278] sm:$0x3f] %vm2253, %v2248
        %2819 = vrot.lane.b32.xlu0 %v2389, 126
        %v2820 = vpop.permute.xlu0 %2819
        %2821 = vrot.lane.b32.xlu0 %v2721, 126
        %v2822 = vpop.permute.xlu0 %2821
        %v2823 = vsel %vm533, %v2274, %v2820
        %v2824 = vsel %vm533, %v2820, %v2822
        %2828 = vst [vmem:[#allocation3 + $0x258] sm:$0xc0] %v2277
        %2829 = vst [vmem:[#allocation3 + $0x260] sm:$0xc0] %v2278
        %2830 = vst [vmem:[#allocation3 + $0x268] sm:$0xc0] %v2823
        %2831 = vst [vmem:[#allocation3 + $0x270] sm:$0xc0] %v2824
        %2832 = vst.msk [vmem:[#allocation3 + $0x278] sm:$0xc0] %vm2288, %v2822
        %2833 = vst [vmem:[#allocation3 + $0x280] sm:$0xf] %v2277
        %2834 = vst [vmem:[#allocation3 + $0x288] sm:$0xf] %v2278
        %2835 = vst [vmem:[#allocation3 + $0x290] sm:$0xf] %v2823
        %2836 = vst [vmem:[#allocation3 + $0x298] sm:$0xf] %v2824
        %2837 = vst.msk [vmem:[#allocation3 + $0x2a0] sm:$0xf] %vm2294, %v2822
        %2838 = vrot.lane.b32.xlu0 %v2422, 124
        %v2839 = vpop.permute.xlu0 %2838
        %2840 = vrot.lane.b32.xlu0 %v2754, 124
        %v2841 = vpop.permute.xlu0 %2840
        %v2842 = vsel %vm643, %v2310, %v2839
        %v2843 = vsel %vm643, %v2839, %v2841
        %2847 = vst [vmem:[#allocation3 + $0x280] sm:$0xf0] %v2313
        %2848 = vst [vmem:[#allocation3 + $0x288] sm:$0xf0] %v2314
        %2849 = vst [vmem:[#allocation3 + $0x290] sm:$0xf0] %v2842
        %2850 = vst [vmem:[#allocation3 + $0x298] sm:$0xf0] %v2843
        %2851 = vst.msk [vmem:[#allocation3 + $0x2a0] sm:$0xf0] %vm2324, %v2841
        %2852 = vst [vmem:[#allocation3 + $0x2a8] sm:$0x3] %v2313
        %2853 = vst [vmem:[#allocation3 + $0x2b0] sm:$0x3] %v2314
        %2854 = vst [vmem:[#allocation3 + $0x2b8] sm:$0x3] %v2842
        %2855 = vst [vmem:[#allocation3 + $0x2c0] sm:$0x3] %v2843
        %2856 = vst.msk [vmem:[#allocation3 + $0x2c8] sm:$0x3] %vm2330, %v2841
        %2857 = vrot.lane.b32.xlu0 %v2455, 122
        %v2858 = vpop.permute.xlu0 %2857
        %2859 = vrot.lane.b32.xlu0 %v2666, 122
        %v2860 = vpop.permute.xlu0 %2859
        %v2861 = vsel %vm2347, %v2346, %v2858
        %v2862 = vsel %vm2347, %v2858, %v2860
        %2866 = vst [vmem:[#allocation3 + $0x2a8] sm:$0xfc] %v2350
        %2867 = vst [vmem:[#allocation3 + $0x2b0] sm:$0xfc] %v2351
        %2868 = vst [vmem:[#allocation3 + $0x2b8] sm:$0xfc] %v2861
        %2869 = vst [vmem:[#allocation3 + $0x2c0] sm:$0xfc] %v2862
        %2870 = vst.msk [vmem:[#allocation3 + $0x2c8] sm:$0xfc] %vm2361, %v2860
        %2871 = vrot.lane.b32.xlu0 %v2247, 120
        %v2872 = vpop.permute.xlu0 %2871
        %2873 = vrot.lane.b32.xlu0 %v2248, 120
        %v2874 = vpop.permute.xlu0 %2873
        %v2875 = vsel %vm2373, %v2372, %v2872
        %v2876 = vsel %vm2373, %v2872, %v2874
        %2880 = vst [vmem:[#allocation3 + $0x2d0] sm:$0x3f] %v2376
        %2881 = vst [vmem:[#allocation3 + $0x2d8] sm:$0x3f] %v2377
        %2882 = vst [vmem:[#allocation3 + $0x2e0] sm:$0x3f] %v2875
        %2883 = vst [vmem:[#allocation3 + $0x2e8] sm:$0x3f] %v2876
        %2884 = vst.msk [vmem:[#allocation3 + $0x2f0] sm:$0x3f] %vm2253, %v2874
        %v2885 = vld [vmem:[%s3] sm:$0xff]
        %v2886 = vld [vmem:[%s3 + $0x8] sm:$0xff]
        %v2887 = vld [vmem:[%s3 + $0x10] sm:$0xff]
        %v2888 = vld [vmem:[%s3 + $0x18] sm:$0xff]
        %v2889 = vld [vmem:[#allocation3] sm:$0xff]
        %v2890 = vld [vmem:[#allocation3 + $0x8] sm:$0xff]
        %v2891 = vld [vmem:[#allocation3 + $0x10] sm:$0xff]
        %v2892 = vld [vmem:[#allocation3 + $0x18] sm:$0xff]
        %v2893 = vld [vmem:[#allocation3 + $0x20] sm:$0xff]
        %v2894 = vld [vmem:[#allocation3 + $0x28] sm:$0xff]
        %v2895 = vld [vmem:[#allocation3 + $0x30] sm:$0xff]
        %v2896 = vld [vmem:[#allocation3 + $0x38] sm:$0xff]
        %v2897 = vld [vmem:[#allocation3 + $0x40] sm:$0xff]
        %v2898 = vld [vmem:[#allocation3 + $0x48] sm:$0xff]
        %v2899 = vld [vmem:[#allocation3 + $0x50] sm:$0xff]
        %v2900 = vld [vmem:[#allocation3 + $0x58] sm:$0xff]
        %v2901 = vld [vmem:[#allocation3 + $0x60] sm:$0xff]
        %v2902 = vld [vmem:[#allocation3 + $0x68] sm:$0xff]
        %v2903 = vld [vmem:[#allocation3 + $0x70] sm:$0xff]
        %v2904 = vld [vmem:[#allocation3 + $0x78] sm:$0xff]
        %v2905 = vld [vmem:[#allocation3 + $0x80] sm:$0xff]
        %v2906 = vld [vmem:[#allocation3 + $0x88] sm:$0xff]
        %v2907 = vld [vmem:[#allocation3 + $0x90] sm:$0xff]
        %v2908 = vld [vmem:[#allocation3 + $0x98] sm:$0xff]
        %v2909 = vld [vmem:[#allocation3 + $0xa0] sm:$0xff]
        %v2910 = vld [vmem:[#allocation3 + $0xa8] sm:$0xff]
        %v2911 = vld [vmem:[#allocation3 + $0xb0] sm:$0xff]
        %v2912 = vld [vmem:[#allocation3 + $0xb8] sm:$0xff]
        %v2913 = vld [vmem:[#allocation3 + $0xc0] sm:$0xff]
        %v2914 = vld [vmem:[#allocation3 + $0xc8] sm:$0xff]
        %v2915 = vld [vmem:[#allocation3 + $0xd0] sm:$0xff]
        %v2916 = vld [vmem:[#allocation3 + $0xd8] sm:$0xff]
        %v2917 = vld [vmem:[#allocation3 + $0xe0] sm:$0xff]
        %v2918 = vld [vmem:[#allocation3 + $0xe8] sm:$0xff]
        %v2919 = vld [vmem:[#allocation3 + $0xf0] sm:$0xff]
        %v2920 = vld [vmem:[#allocation3 + $0xf8] sm:$0xff]
        %v2921 = vld [vmem:[#allocation3 + $0x100] sm:$0xff]
        %v2922 = vld [vmem:[#allocation3 + $0x108] sm:$0xff]
        %v2923 = vld [vmem:[#allocation3 + $0x110] sm:$0xff]
        %v2924 = vld [vmem:[#allocation3 + $0x118] sm:$0xff]
        %v2925 = vld [vmem:[#allocation3 + $0x120] sm:$0xff]
        %v2926 = vld [vmem:[#allocation3 + $0x128] sm:$0xff]
        %v2927 = vld [vmem:[#allocation3 + $0x130] sm:$0xff]
        %v2928 = vld [vmem:[#allocation3 + $0x138] sm:$0xff]
        %v2929 = vld [vmem:[#allocation3 + $0x140] sm:$0xff]
        %v2930 = vld [vmem:[#allocation3 + $0x148] sm:$0xff]
        %v2931 = vld [vmem:[#allocation3 + $0x150] sm:$0xff]
        %v2932 = vld [vmem:[#allocation3 + $0x158] sm:$0xff]
        %v2933 = vld [vmem:[#allocation3 + $0x160] sm:$0xff]
        %v2934 = vld [vmem:[#allocation3 + $0x168] sm:$0xff]
        %v2935 = vld [vmem:[#allocation3 + $0x170] sm:$0xff]
        %v2936 = vld [vmem:[#allocation3 + $0x178] sm:$0xff]
        %v2937 = vld [vmem:[#allocation3 + $0x180] sm:$0xff]
        %v2938 = vld [vmem:[#allocation3 + $0x188] sm:$0xff]
        %v2939 = vld [vmem:[#allocation3 + $0x190] sm:$0xff]
        %v2940 = vld [vmem:[#allocation3 + $0x198] sm:$0xff]
        %v2941 = vld [vmem:[#allocation3 + $0x1a0] sm:$0xff]
        %v2942 = vld [vmem:[#allocation3 + $0x1a8] sm:$0xff]
        %v2943 = vld [vmem:[#allocation3 + $0x1b0] sm:$0xff]
        %v2944 = vld [vmem:[#allocation3 + $0x1b8] sm:$0xff]
        %v2945 = vld [vmem:[#allocation3 + $0x1c0] sm:$0xff]
        %v2946 = vld [vmem:[#allocation3 + $0x1c8] sm:$0xff]
        %v2947 = vld [vmem:[#allocation3 + $0x1d0] sm:$0xff]
        %v2948 = vld [vmem:[#allocation3 + $0x1d8] sm:$0xff]
        %v2949 = vld [vmem:[#allocation3 + $0x1e0] sm:$0xff]
        %v2950 = vld [vmem:[#allocation3 + $0x1e8] sm:$0xff]
        %v2951 = vld [vmem:[#allocation3 + $0x1f0] sm:$0xff]
        %v2952 = vld [vmem:[#allocation3 + $0x1f8] sm:$0xff]
        %v2953 = vld [vmem:[#allocation3 + $0x200] sm:$0xff]
        %v2954 = vld [vmem:[#allocation3 + $0x208] sm:$0xff]
        %v2955 = vld [vmem:[#allocation3 + $0x210] sm:$0xff]
        %v2956 = vld [vmem:[#allocation3 + $0x218] sm:$0xff]
        %v2957 = vld [vmem:[#allocation3 + $0x220] sm:$0xff]
        %v2958 = vld [vmem:[#allocation3 + $0x228] sm:$0xff]
        %v2959 = vld [vmem:[#allocation3 + $0x230] sm:$0xff]
        %v2960 = vld [vmem:[#allocation3 + $0x238] sm:$0xff]
        %v2961 = vld [vmem:[#allocation3 + $0x240] sm:$0xff]
        %v2962 = vld [vmem:[#allocation3 + $0x248] sm:$0xff]
        %v2963 = vld [vmem:[#allocation3 + $0x250] sm:$0xff]
        %v2964 = vld [vmem:[#allocation3 + $0x258] sm:$0xff]
        %v2965 = vld [vmem:[#allocation3 + $0x260] sm:$0xff]
        %v2966 = vld [vmem:[#allocation3 + $0x268] sm:$0xff]
        %v2967 = vld [vmem:[#allocation3 + $0x270] sm:$0xff]
        %v2968 = vld [vmem:[#allocation3 + $0x278] sm:$0xff]
        %v2969 = vld [vmem:[#allocation3 + $0x280] sm:$0xff]
        %v2970 = vld [vmem:[#allocation3 + $0x288] sm:$0xff]
        %v2971 = vld [vmem:[#allocation3 + $0x290] sm:$0xff]
        %v2972 = vld [vmem:[#allocation3 + $0x298] sm:$0xff]
        %v2973 = vld [vmem:[#allocation3 + $0x2a0] sm:$0xff]
        %v2974 = vld [vmem:[#allocation3 + $0x2a8] sm:$0xff]
        %v2975 = vld [vmem:[#allocation3 + $0x2b0] sm:$0xff]
        %v2976 = vld [vmem:[#allocation3 + $0x2b8] sm:$0xff]
        %v2977 = vld [vmem:[#allocation3 + $0x2c0] sm:$0xff]
        %v2978 = vld [vmem:[#allocation3 + $0x2c8] sm:$0xff]
        %v2979 = vld [vmem:[#allocation3 + $0x2d0] sm:$0x3f]
        %v2980 = vld [vmem:[#allocation3 + $0x2d8] sm:$0x3f]
        %v2981 = vld [vmem:[#allocation3 + $0x2e0] sm:$0x3f]
        %v2982 = vld [vmem:[#allocation3 + $0x2e8] sm:$0x3f]
        %v2983 = vld [vmem:[#allocation3 + $0x2f0] sm:$0x3f]
        %v2984 = vld [vmem:[%s4] sm:$0xff]
        %v2985 = vld [vmem:[%s4 + $0x8] sm:$0xff]
        %2987 = vset.pattern.permute.xlu0 0
        %2988 = vperm.xlu0 %2987, %v2984
        %v2989 = vpop.permute.xlu0 %2988
        %2992 = vset.pattern.permute.xlu0 0
        %2993 = vperm.xlu0 %2992, %v2985
        %v2994 = vpop.permute.xlu0 %2993
        %vm2996 = vcmask 179200
        %v2998 = vsel %vm2996, %v2886, 0
        %v3001 = vsel %vm2996, %v2888, 0
        %vm3003 = vcmask 1045504
        %v3005 = vsel %vm3003, %v2979, 0
        %v3008 = vsel %vm3003, %v2980, 0
        %v3011 = vsel %vm3003, %v2981, 0
        %v3014 = vsel %vm3003, %v2982, 0
        %v3017 = vsel %vm3003, %v2983, 0
        %3019 = vmatprep.subr.mxu0 %v2890
        %3020 = vmatpush1.msra.mxu0 %v2889
        %3021 = vmatprep.subr.mxu0 %v2895
        %3022 = vmatpush1.msra.mxu0 %v2894
        %3023 = vmatprep.subr.mxu0 %v2900
        %3024 = vmatpush1.msra.mxu0 %v2899
        %3025 = vmatprep.subr.mxu0 %v2905
        %3026 = vmatpush1.msra.mxu0 %v2904
        %3027 = vmatprep.subr.mxu0 %v2910
        %3028 = vmatpush1.msra.mxu0 %v2909
        %3029 = vmatprep.subr.mxu0 %v2915
        %3030 = vmatpush1.msra.mxu0 %v2914
        %3031 = vmatprep.subr.mxu0 %v2920
        %3032 = vmatpush1.msra.mxu0 %v2919
        %3033 = vmatprep.subr.mxu0 %v2925
        %3034 = vmatpush1.msra.mxu0 %v2924
        %3035 = vmatprep.subr.mxu0 %v2930
        %3036 = vmatpush1.msra.mxu0 %v2929
        %3037 = vmatprep.subr.mxu0 %v2935
        %3038 = vmatpush1.msra.mxu0 %v2934
        %3039 = vmatprep.subr.mxu0 %v2940
        %3040 = vmatpush1.msra.mxu0 %v2939
        %3041 = vmatprep.subr.mxu0 %v2945
        %3042 = vmatpush1.msra.mxu0 %v2944
        %3043 = vmatprep.subr.mxu0 %v2950
        %3044 = vmatpush1.msra.mxu0 %v2949
        %3045 = vmatprep.subr.mxu0 %v2955
        %3046 = vmatpush1.msra.mxu0 %v2954
        %3047 = vmatprep.subr.mxu0 %v2960
        %3048 = vmatpush1.msra.mxu0 %v2959
        %3049 = vmatprep.subr.mxu0 %v2965
        %3050 = vmatpush1.msra.mxu0 %v2964
        %3051 = vmatprep.subr.mxu0 %v2970
        %3052 = vmatpush1.msra.mxu0 %v2969
        %3053 = vmatprep.subr.mxu0 %v2975
        %3054 = vmatpush1.msra.mxu0 %v2974
        %3055 = vmatprep.subr.mxu0 %v3008
        %3056 = vmatpush1.msra.mxu0 %v3005
        %3057 = vmatprep.subr.mxu0 0.0
        %3058 = vmatpush1.msra.mxu0 0.0
        %3059 = vmatprep.subr.mxu0 0.0
        %3060 = vmatpush1.msra.mxu0 0.0
        %3061 = vmatprep.subr.mxu0 0.0
        %3062 = vmatpush1.msra.mxu0 0.0
        %3063 = vmatprep.subr.mxu0 0.0
        %3064 = vmatpush1.msra.mxu0 0.0
        %3065 = vmatprep.subr.mxu0 0.0
        %3066 = vmatpush1.msra.mxu0 0.0
        %3067 = vmatprep.subr.mxu0 0.0
        %3068 = vmatpush1.msra.mxu0 0.0
        %3069 = vmatprep.subr.mxu0 0.0
        %3070 = vmatpush1.msra.mxu0 0.0
        %3071 = vmatprep.subr.mxu0 0.0
        %3072 = vmatpush1.msra.mxu0 0.0
        %3073 = vmatprep.subr.mxu0 0.0
        %3074 = vmatpush1.msra.mxu0 0.0
        %3075 = vmatprep.subr.mxu0 0.0
        %3076 = vmatpush1.msra.mxu0 0.0
        %3077 = vmatprep.subr.mxu0 0.0
        %3078 = vmatpush1.msra.mxu0 0.0
        %3079 = vmatprep.subr.mxu0 0.0
        %3080 = vmatpush1.msra.mxu0 0.0
        %3081 = vmatprep.subr.mxu0 0.0
        %3082 = vmatpush1.msra.mxu0 0.0
        %3083 = vmatprep.mubr.f32.mxu0 %v2998
        %3084 = vmatmul.mubr.f32.gmra.mrb[0].mxu0 %v2885
        %v3085 = vpop.f32.mrb[0].mxu0
        %v3086 = vadd.f32 %v2989, %v3085
        %v3087 = vpop.f32.mrb[0].mxu0
        %v3088 = vadd.f32 %v2989, %v3087
        %3089 = vmatprep.mubr.f32.mxu0 %v3001
        %3090 = vmatmul.mubr.f32.gmra.mrb[0].mxu0 %v2887
        %v3091 = vpop.f32.mrb[0].mxu0
        %v3092 = vadd.f32 %v2994, %v3091
        %v3093 = vpop.f32.mrb[0].mxu0
        %v3094 = vadd.f32 %v2994, %v3093
        %3095 = vdwg.mxu0
        %3096 = vmatprep.subr.mxu0 %v2892
        %3097 = vmatpush1.msra.mxu0 %v2891
        %3098 = vmatprep.subr.mxu0 %v2897
        %3099 = vmatpush1.msra.mxu0 %v2896
        %3100 = vmatprep.subr.mxu0 %v2902
        %3101 = vmatpush1.msra.mxu0 %v2901
        %3102 = vmatprep.subr.mxu0 %v2907
        %3103 = vmatpush1.msra.mxu0 %v2906
        %3104 = vmatprep.subr.mxu0 %v2912
        %3105 = vmatpush1.msra.mxu0 %v2911
        %3106 = vmatprep.subr.mxu0 %v2917
        %3107 = vmatpush1.msra.mxu0 %v2916
        %3108 = vmatprep.subr.mxu0 %v2922
        %3109 = vmatpush1.msra.mxu0 %v2921
        %3110 = vmatprep.subr.mxu0 %v2927
        %3111 = vmatpush1.msra.mxu0 %v2926
        %3112 = vmatprep.subr.mxu0 %v2932
        %3113 = vmatpush1.msra.mxu0 %v2931
        %3114 = vmatprep.subr.mxu0 %v2937
        %3115 = vmatpush1.msra.mxu0 %v2936
        %3116 = vmatprep.subr.mxu0 %v2942
        %3117 = vmatpush1.msra.mxu0 %v2941
        %3118 = vmatprep.subr.mxu0 %v2947
        %3119 = vmatpush1.msra.mxu0 %v2946
        %3120 = vmatprep.subr.mxu0 %v2952
        %3121 = vmatpush1.msra.mxu0 %v2951
        %3122 = vmatprep.subr.mxu0 %v2957
        %3123 = vmatpush1.msra.mxu0 %v2956
        %3124 = vmatprep.subr.mxu0 %v2962
        %3125 = vmatpush1.msra.mxu0 %v2961
        %3126 = vmatprep.subr.mxu0 %v2967
        %3127 = vmatpush1.msra.mxu0 %v2966
        %3128 = vmatprep.subr.mxu0 %v2972
        %3129 = vmatpush1.msra.mxu0 %v2971
        %3130 = vmatprep.subr.mxu0 %v2977
        %3131 = vmatpush1.msra.mxu0 %v2976
        %3132 = vmatprep.subr.mxu0 %v3014
        %3133 = vmatpush1.msra.mxu0 %v3011
        %3134 = vmatprep.subr.mxu0 0.0
        %3135 = vmatpush1.msra.mxu0 0.0
        %3136 = vmatprep.subr.mxu0 0.0
        %3137 = vmatpush1.msra.mxu0 0.0
        %3138 = vmatprep.subr.mxu0 0.0
        %3139 = vmatpush1.msra.mxu0 0.0
        %3140 = vmatprep.subr.mxu0 0.0
        %3141 = vmatpush1.msra.mxu0 0.0
        %3142 = vmatprep.subr.mxu0 0.0
        %3143 = vmatpush1.msra.mxu0 0.0
        %3144 = vmatprep.subr.mxu0 0.0
        %3145 = vmatpush1.msra.mxu0 0.0
        %3146 = vmatprep.subr.mxu0 0.0
        %3147 = vmatpush1.msra.mxu0 0.0
        %3148 = vmatprep.subr.mxu0 0.0
        %3149 = vmatpush1.msra.mxu0 0.0
        %3150 = vmatprep.subr.mxu0 0.0
        %3151 = vmatpush1.msra.mxu0 0.0
        %3152 = vmatprep.subr.mxu0 0.0
        %3153 = vmatpush1.msra.mxu0 0.0
        %3154 = vmatprep.subr.mxu0 0.0
        %3155 = vmatpush1.msra.mxu0 0.0
        %3156 = vmatprep.subr.mxu0 0.0
        %3157 = vmatpush1.msra.mxu0 0.0
        %3158 = vmatprep.subr.mxu0 0.0
        %3159 = vmatpush1.msra.mxu0 0.0
        %3160 = vmatprep.mubr.f32.mxu0 %v2998
        %3161 = vmatmul.mubr.f32.gmra.mrb[0].mxu0 %v2885
        %v3162 = vpop.f32.mrb[0].mxu0
        %v3163 = vadd.f32 %v2989, %v3162
        %v3164 = vpop.f32.mrb[0].mxu0
        %v3165 = vadd.f32 %v2989, %v3164
        %3166 = vmatprep.mubr.f32.mxu0 %v3001
        %3167 = vmatmul.mubr.f32.gmra.mrb[0].mxu0 %v2887
        %v3168 = vpop.f32.mrb[0].mxu0
        %v3169 = vadd.f32 %v2994, %v3168
        %v3170 = vpop.f32.mrb[0].mxu0
        %v3171 = vadd.f32 %v2994, %v3170
        %3172 = vdwg.mxu0
        %3173 = vmatprep.subr.mxu0 0.0
        %3174 = vmatpush1.msra.mxu0 %v2893
        %3175 = vmatprep.subr.mxu0 0.0
        %3176 = vmatpush1.msra.mxu0 %v2898
        %3177 = vmatprep.subr.mxu0 0.0
        %3178 = vmatpush1.msra.mxu0 %v2903
        %3179 = vmatprep.subr.mxu0 0.0
        %3180 = vmatpush1.msra.mxu0 %v2908
        %3181 = vmatprep.subr.mxu0 0.0
        %3182 = vmatpush1.msra.mxu0 %v2913
        %3183 = vmatprep.subr.mxu0 0.0
        %3184 = vmatpush1.msra.mxu0 %v2918
        %3185 = vmatprep.subr.mxu0 0.0
        %3186 = vmatpush1.msra.mxu0 %v2923
        %3187 = vmatprep.subr.mxu0 0.0
        %3188 = vmatpush1.msra.mxu0 %v2928
        %3189 = vmatprep.subr.mxu0 0.0
        %3190 = vmatpush1.msra.mxu0 %v2933
        %3191 = vmatprep.subr.mxu0 0.0
        %3192 = vmatpush1.msra.mxu0 %v2938
        %3193 = vmatprep.subr.mxu0 0.0
        %3194 = vmatpush1.msra.mxu0 %v2943
        %3195 = vmatprep.subr.mxu0 0.0
        %3196 = vmatpush1.msra.mxu0 %v2948
        %3197 = vmatprep.subr.mxu0 0.0
        %3198 = vmatpush1.msra.mxu0 %v2953
        %3199 = vmatprep.subr.mxu0 0.0
        %3200 = vmatpush1.msra.mxu0 %v2958
        %3201 = vmatprep.subr.mxu0 0.0
        %3202 = vmatpush1.msra.mxu0 %v2963
        %3203 = vmatprep.subr.mxu0 0.0
        %3204 = vmatpush1.msra.mxu0 %v2968
        %3205 = vmatprep.subr.mxu0 0.0
        %3206 = vmatpush1.msra.mxu0 %v2973
        %3207 = vmatprep.subr.mxu0 0.0
        %3208 = vmatpush1.msra.mxu0 %v2978
        %3209 = vmatprep.subr.mxu0 0.0
        %3210 = vmatpush1.msra.mxu0 %v3017
        %3211 = vmatprep.subr.mxu0 0.0
        %3212 = vmatpush1.msra.mxu0 0.0
        %3213 = vmatprep.subr.mxu0 0.0
        %3214 = vmatpush1.msra.mxu0 0.0
        %3215 = vmatprep.subr.mxu0 0.0
        %3216 = vmatpush1.msra.mxu0 0.0
        %3217 = vmatprep.subr.mxu0 0.0
        %3218 = vmatpush1.msra.mxu0 0.0
        %3219 = vmatprep.subr.mxu0 0.0
        %3220 = vmatpush1.msra.mxu0 0.0
        %3221 = vmatprep.subr.mxu0 0.0
        %3222 = vmatpush1.msra.mxu0 0.0
        %3223 = vmatprep.subr.mxu0 0.0
        %3224 = vmatpush1.msra.mxu0 0.0
        %3225 = vmatprep.subr.mxu0 0.0
        %3226 = vmatpush1.msra.mxu0 0.0
        %3227 = vmatprep.subr.mxu0 0.0
        %3228 = vmatpush1.msra.mxu0 0.0
        %3229 = vmatprep.subr.mxu0 0.0
        %3230 = vmatpush1.msra.mxu0 0.0
        %3231 = vmatprep.subr.mxu0 0.0
        %3232 = vmatpush1.msra.mxu0 0.0
        %3233 = vmatprep.subr.mxu0 0.0
        %3234 = vmatpush1.msra.mxu0 0.0
        %3235 = vmatprep.subr.mxu0 0.0
        %3236 = vmatpush1.msra.mxu0 0.0
        %3237 = vmatprep.mubr.f32.mxu0 %v2998
        %3238 = vmatmul.mubr.f32.gmra.mrb[0].mxu0 %v2885
        %v3239 = vpop.f32.mrb[0].mxu0
        %v3240 = vadd.f32 %v2989, %v3239
        %v3241 = vpop.f32.mrb[0].mxu0
        %3242 = vmatprep.mubr.f32.mxu0 %v3001
        %3243 = vmatmul.mubr.f32.gmra.mrb[0].mxu0 %v2887
        %v3244 = vpop.f32.mrb[0].mxu0
        %v3245 = vadd.f32 %v2994, %v3244
        %v3246 = vpop.f32.mrb[0].mxu0
        %3247 = vdwg.mxu0
        %v3248 = vmax.f32 %v3086, 0.0
        %v3249 = vmax.f32 %v3088, 0.0
        %v3250 = vmax.f32 %v3163, 0.0
        %v3251 = vmax.f32 %v3165, 0.0
        %v3252 = vmax.f32 %v3240, 0.0
        %v3253 = vmax.f32 %v3092, 0.0
        %v3254 = vmax.f32 %v3094, 0.0
        %v3255 = vmax.f32 %v3169, 0.0
        %v3256 = vmax.f32 %v3171, 0.0
        %v3257 = vmax.f32 %v3245, 0.0
        %3268 = vrot.lane.b32.xlu0 %v3248, 126
        %v3269 = vpop.permute.xlu0 %3268
        %3270 = vrot.lane.b32.xlu0 %v3249, 126
        %v3271 = vpop.permute.xlu0 %3270
        %3272 = vrot.lane.b32.xlu0 %v3250, 126
        %v3273 = vpop.permute.xlu0 %3272
        %3274 = vrot.lane.b32.xlu0 %v3251, 126
        %v3275 = vpop.permute.xlu0 %3274
        %3276 = vrot.lane.b32.xlu0 %v3252, 126
        %v3277 = vpop.permute.xlu0 %3276
        %3278 = vrot.lane.b32.xlu0 %v3253, 126
        %v3279 = vpop.permute.xlu0 %3278
        %3280 = vrot.lane.b32.xlu0 %v3254, 126
        %v3281 = vpop.permute.xlu0 %3280
        %3282 = vrot.lane.b32.xlu0 %v3255, 126
        %v3283 = vpop.permute.xlu0 %3282
        %3284 = vrot.lane.b32.xlu0 %v3256, 126
        %v3285 = vpop.permute.xlu0 %3284
        %3286 = vrot.lane.b32.xlu0 %v3257, 126
        %v3287 = vpop.permute.xlu0 %3286
        %v3288 = vsel %vm533, %v3269, %v3271
        %v3289 = vsel %vm533, %v3271, %v3273
        %v3290 = vsel %vm533, %v3273, %v3275
        %v3291 = vsel %vm533, %v3275, %v3277
        %v3292 = vsel %vm533, %v3279, %v3281
        %v3293 = vsel %vm533, %v3281, %v3283
        %v3294 = vsel %vm533, %v3283, %v3285
        %v3295 = vsel %vm533, %v3285, %v3287
        %v3306 = vmax.f32 %v3248, %v3288
        %v3307 = vmax.f32 %v3249, %v3289
        %v3308 = vmax.f32 %v3250, %v3290
        %v3309 = vmax.f32 %v3251, %v3291
        %v3310 = vmax.f32 %v3252, %v3277
        %v3311 = vmax.f32 %v3253, %v3292
        %v3312 = vmax.f32 %v3254, %v3293
        %v3313 = vmax.f32 %v3255, %v3294
        %v3314 = vmax.f32 %v3256, %v3295
        %v3315 = vmax.f32 %v3257, %v3287
        %3326 = vrot.lane.b32.xlu0 %v3306, 64
        %v3327 = vpop.permute.xlu0 %3326
        %3328 = vrot.lane.b32.xlu0 %v3307, 64
        %v3329 = vpop.permute.xlu0 %3328
        %3330 = vrot.lane.b32.xlu0 %v3308, 64
        %v3331 = vpop.permute.xlu0 %3330
        %3332 = vrot.lane.b32.xlu0 %v3309, 64
        %v3333 = vpop.permute.xlu0 %3332
        %3334 = vrot.lane.b32.xlu0 %v3310, 64
        %v3335 = vpop.permute.xlu0 %3334
        %3336 = vrot.lane.b32.xlu0 %v3311, 64
        %v3337 = vpop.permute.xlu0 %3336
        %3338 = vrot.lane.b32.xlu0 %v3312, 64
        %v3339 = vpop.permute.xlu0 %3338
        %3340 = vrot.lane.b32.xlu0 %v3313, 64
        %v3341 = vpop.permute.xlu0 %3340
        %3342 = vrot.lane.b32.xlu0 %v3314, 64
        %v3343 = vpop.permute.xlu0 %3342
        %3344 = vrot.lane.b32.xlu0 %v3315, 64
        %v3345 = vpop.permute.xlu0 %3344
        %v3346 = vsel %vm994, %v3327, %v3329
        %v3347 = vsel %vm994, %v3329, %v3331
        %v3348 = vsel %vm994, %v3331, %v3333
        %v3349 = vsel %vm994, %v3333, %v3335
        %v3350 = vsel %vm994, %v3337, %v3339
        %v3351 = vsel %vm994, %v3339, %v3341
        %v3352 = vsel %vm994, %v3341, %v3343
        %v3353 = vsel %vm994, %v3343, %v3345
        %v3364 = vmax.f32 %v3306, %v3346
        %v3365 = vmax.f32 %v3307, %v3347
        %v3366 = vmax.f32 %v3308, %v3348
        %v3367 = vmax.f32 %v3309, %v3349
        %v3368 = vmax.f32 %v3310, %v3335
        %v3369 = vmax.f32 %v3311, %v3350
        %v3370 = vmax.f32 %v3312, %v3351
        %v3371 = vmax.f32 %v3313, %v3352
        %v3372 = vmax.f32 %v3314, %v3353
        %v3373 = vmax.f32 %v3315, %v3345
        %v3374 = vld [vmem:[%s5] sm:$0xff]
        %v3375 = vld [vmem:[%s5 + $0x8] sm:$0xff]
        %v3376 = vld [vmem:[%s5 + $0x10] sm:$0xff]
        %v3377 = vld [vmem:[%s5 + $0x18] sm:$0xff]
        %v3378 = vld [vmem:[%s5 + $0x20] sm:$0xff]
        %v3379 = vld [vmem:[%s5 + $0x28] sm:$0xff]
        %v3380 = vld [vmem:[%s5 + $0x30] sm:$0xff]
        %v3381 = vld [vmem:[%s5 + $0x38] sm:$0xff]
        %v3382 = vld [vmem:[%s5 + $0x40] sm:$0xff]
        %v3383 = vld [vmem:[%s5 + $0x48] sm:$0xff]
        %v3384 = vld [vmem:[%s5 + $0x50] sm:$0xff]
        %v3385 = vld [vmem:[%s5 + $0x58] sm:$0xff]
        %v3386 = vld [vmem:[%s5 + $0x60] sm:$0xff]
        %v3387 = vld [vmem:[%s5 + $0x68] sm:$0xff]
        %v3388 = vld [vmem:[%s5 + $0x70] sm:$0xff]
        %v3389 = vld [vmem:[%s5 + $0x78] sm:$0xff]
        %v3390 = vld [vmem:[%s5 + $0x80] sm:$0xff]
        %v3391 = vld [vmem:[%s5 + $0x88] sm:$0xff]
        %v3392 = vld [vmem:[%s5 + $0x90] sm:$0xff]
        %v3393 = vld [vmem:[%s5 + $0x98] sm:$0xff]
        %v3394 = vld [vmem:[%s5 + $0xa0] sm:$0xff]
        %v3395 = vld [vmem:[%s5 + $0xa8] sm:$0xff]
        %v3396 = vld [vmem:[%s5 + $0xb0] sm:$0xff]
        %v3397 = vld [vmem:[%s5 + $0xb8] sm:$0xff]
        %v3398 = vld [vmem:[%s5 + $0xc0] sm:$0xff]
        %v3399 = vld [vmem:[%s5 + $0xc8] sm:$0xff]
        %v3400 = vld [vmem:[%s5 + $0xd0] sm:$0xff]
        %v3401 = vld [vmem:[%s5 + $0xd8] sm:$0xff]
        %v3402 = vld [vmem:[%s5 + $0xe0] sm:$0xff]
        %v3403 = vld [vmem:[%s5 + $0xe8] sm:$0xff]
        %v3404 = vld [vmem:[%s5 + $0xf0] sm:$0xff]
        %v3405 = vld [vmem:[%s5 + $0xf8] sm:$0xff]
        %v3406 = vld [vmem:[%s5 + $0x100] sm:$0xff]
        %v3407 = vld [vmem:[%s5 + $0x108] sm:$0xff]
        %v3408 = vld [vmem:[%s5 + $0x110] sm:$0xff]
        %v3409 = vld [vmem:[%s5 + $0x118] sm:$0xff]
        %v3410 = vld [vmem:[%s5 + $0x120] sm:$0xff]
        %v3411 = vld [vmem:[%s5 + $0x128] sm:$0xff]
        %v3412 = vld [vmem:[%s5 + $0x130] sm:$0xff]
        %v3413 = vld [vmem:[%s5 + $0x138] sm:$0xff]
        %v3414 = vld [vmem:[%s5 + $0x140] sm:$0xff]
        %v3415 = vld [vmem:[%s5 + $0x148] sm:$0xff]
        %v3416 = vld [vmem:[%s5 + $0x150] sm:$0xff]
        %v3417 = vld [vmem:[%s5 + $0x158] sm:$0xff]
        %v3418 = vld [vmem:[%s5 + $0x160] sm:$0xff]
        %v3419 = vld [vmem:[%s5 + $0x168] sm:$0xff]
        %v3420 = vld [vmem:[%s5 + $0x170] sm:$0xff]
        %v3421 = vld [vmem:[%s5 + $0x178] sm:$0xff]
        %v3422 = vld [vmem:[%s5 + $0x180] sm:$0xff]
        %v3423 = vld [vmem:[%s5 + $0x188] sm:$0xff]
        %v3424 = vld [vmem:[%s5 + $0x190] sm:$0xff]
        %v3425 = vld [vmem:[%s5 + $0x198] sm:$0xff]
        %v3426 = vld [vmem:[%s5 + $0x1a0] sm:$0xff]
        %v3427 = vld [vmem:[%s5 + $0x1a8] sm:$0xff]
        %v3428 = vld [vmem:[%s5 + $0x1b0] sm:$0xff]
        %v3429 = vld [vmem:[%s5 + $0x1b8] sm:$0xff]
        %v3430 = vld [vmem:[%s5 + $0x1c0] sm:$0xff]
        %v3431 = vld [vmem:[%s5 + $0x1c8] sm:$0xff]
        %v3432 = vld [vmem:[%s5 + $0x1d0] sm:$0xff]
        %v3433 = vld [vmem:[%s5 + $0x1d8] sm:$0xff]
        %v3434 = vld [vmem:[%s5 + $0x1e0] sm:$0xff]
        %v3435 = vld [vmem:[%s5 + $0x1e8] sm:$0xff]
        %v3436 = vld [vmem:[%s5 + $0x1f0] sm:$0xff]
        %v3437 = vld [vmem:[%s5 + $0x1f8] sm:$0xff]
        %v3438 = vld [vmem:[%s5 + $0x200] sm:$0xff]
        %v3439 = vld [vmem:[%s5 + $0x208] sm:$0xff]
        %v3440 = vld [vmem:[%s5 + $0x210] sm:$0x1]
        %vm3441 = vcmask 138240
        %v3443 = vsel %vm3441, %v3368, 0
        %v3446 = vsel %vm3441, %v3373, 0
        %vm3448 = vcmask 1040384
        %v3450 = vsel %vm3448, %v3440, 0
        %3452 = vmatprep.subr.mxu0 0.0
        %3453 = vmatpush1.msra.mxu0 %v3374
        %3454 = vmatprep.subr.mxu0 0.0
        %3455 = vmatpush1.msra.mxu0 %v3375
        %3456 = vmatprep.subr.mxu0 0.0
        %3457 = vmatpush1.msra.mxu0 %v3376
        %3458 = vmatprep.subr.mxu0 0.0
        %3459 = vmatpush1.msra.mxu0 %v3377
        %3460 = vmatprep.subr.mxu0 0.0
        %3461 = vmatpush1.msra.mxu0 %v3378
        %3462 = vmatprep.subr.mxu0 0.0
        %3463 = vmatpush1.msra.mxu0 %v3379
        %3464 = vmatprep.subr.mxu0 0.0
        %3465 = vmatpush1.msra.mxu0 %v3380
        %3466 = vmatprep.subr.mxu0 0.0
        %3467 = vmatpush1.msra.mxu0 %v3381
        %3468 = vmatprep.subr.mxu0 0.0
        %3469 = vmatpush1.msra.mxu0 %v3382
        %3470 = vmatprep.subr.mxu0 0.0
        %3471 = vmatpush1.msra.mxu0 %v3383
        %3472 = vmatprep.subr.mxu0 0.0
        %3473 = vmatpush1.msra.mxu0 %v3384
        %3474 = vmatprep.subr.mxu0 0.0
        %3475 = vmatpush1.msra.mxu0 %v3385
        %3476 = vmatprep.subr.mxu0 0.0
        %3477 = vmatpush1.msra.mxu0 %v3386
        %3478 = vmatprep.subr.mxu0 0.0
        %3479 = vmatpush1.msra.mxu0 %v3387
        %3480 = vmatprep.subr.mxu0 0.0
        %3481 = vmatpush1.msra.mxu0 %v3388
        %3482 = vmatprep.subr.mxu0 0.0
        %3483 = vmatpush1.msra.mxu0 %v3389
        %3484 = vmatprep.subr.mxu0 0.0
        %3485 = vmatpush1.msra.mxu0 %v3390
        %3486 = vmatprep.subr.mxu0 0.0
        %3487 = vmatpush1.msra.mxu0 %v3391
        %3488 = vmatprep.subr.mxu0 0.0
        %3489 = vmatpush1.msra.mxu0 %v3392
        %3490 = vmatprep.subr.mxu0 0.0
        %3491 = vmatpush1.msra.mxu0 %v3393
        %3492 = vmatprep.subr.mxu0 0.0
        %3493 = vmatpush1.msra.mxu0 %v3394
        %3494 = vmatprep.subr.mxu0 0.0
        %3495 = vmatpush1.msra.mxu0 %v3395
        %3496 = vmatprep.subr.mxu0 0.0
        %3497 = vmatpush1.msra.mxu0 %v3396
        %3498 = vmatprep.subr.mxu0 0.0
        %3499 = vmatpush1.msra.mxu0 %v3397
        %3500 = vmatprep.subr.mxu0 0.0
        %3501 = vmatpush1.msra.mxu0 %v3398
        %3502 = vmatprep.subr.mxu0 0.0
        %3503 = vmatpush1.msra.mxu0 %v3399
        %3504 = vmatprep.subr.mxu0 0.0
        %3505 = vmatpush1.msra.mxu0 %v3400
        %3506 = vmatprep.subr.mxu0 0.0
        %3507 = vmatpush1.msra.mxu0 %v3401
        %3508 = vmatprep.subr.mxu0 0.0
        %3509 = vmatpush1.msra.mxu0 %v3402
        %3510 = vmatprep.subr.mxu0 0.0
        %3511 = vmatpush1.msra.mxu0 %v3403
        %3512 = vmatprep.subr.mxu0 0.0
        %3513 = vmatpush1.msra.mxu0 %v3404
        %3514 = vmatprep.subr.mxu0 0.0
        %3515 = vmatpush1.msra.mxu0 %v3405
        %3516 = vmatprep.mubr.f32.mxu0 %v3365
        %3517 = vmatmul.mubr.f32.gmra.mrb[0].mxu0 %v3364
        %v3518 = vpop.f32.mrb[0].mxu0
        %v3519 = vadd.f32 0.0, %v3518
        %v3520 = vpop.f32.mrb[0].mxu0
        %3521 = vmatprep.mubr.f32.mxu0 %v3370
        %3522 = vmatmul.mubr.f32.gmra.mrb[0].mxu0 %v3369
        %v3523 = vpop.f32.mrb[0].mxu0
        %v3524 = vadd.f32 0.0, %v3523
        %v3525 = vpop.f32.mrb[0].mxu0
        %3526 = vdwg.mxu0
        %3527 = vmatprep.subr.mxu0 0.0
        %3528 = vmatpush1.msra.mxu0 %v3406
        %3529 = vmatprep.subr.mxu0 0.0
        %3530 = vmatpush1.msra.mxu0 %v3407
        %3531 = vmatprep.subr.mxu0 0.0
        %3532 = vmatpush1.msra.mxu0 %v3408
        %3533 = vmatprep.subr.mxu0 0.0
        %3534 = vmatpush1.msra.mxu0 %v3409
        %3535 = vmatprep.subr.mxu0 0.0
        %3536 = vmatpush1.msra.mxu0 %v3410
        %3537 = vmatprep.subr.mxu0 0.0
        %3538 = vmatpush1.msra.mxu0 %v3411
        %3539 = vmatprep.subr.mxu0 0.0
        %3540 = vmatpush1.msra.mxu0 %v3412
        %3541 = vmatprep.subr.mxu0 0.0
        %3542 = vmatpush1.msra.mxu0 %v3413
        %3543 = vmatprep.subr.mxu0 0.0
        %3544 = vmatpush1.msra.mxu0 %v3414
        %3545 = vmatprep.subr.mxu0 0.0
        %3546 = vmatpush1.msra.mxu0 %v3415
        %3547 = vmatprep.subr.mxu0 0.0
        %3548 = vmatpush1.msra.mxu0 %v3416
        %3549 = vmatprep.subr.mxu0 0.0
        %3550 = vmatpush1.msra.mxu0 %v3417
        %3551 = vmatprep.subr.mxu0 0.0
        %3552 = vmatpush1.msra.mxu0 %v3418
        %3553 = vmatprep.subr.mxu0 0.0
        %3554 = vmatpush1.msra.mxu0 %v3419
        %3555 = vmatprep.subr.mxu0 0.0
        %3556 = vmatpush1.msra.mxu0 %v3420
        %3557 = vmatprep.subr.mxu0 0.0
        %3558 = vmatpush1.msra.mxu0 %v3421
        %3559 = vmatprep.subr.mxu0 0.0
        %3560 = vmatpush1.msra.mxu0 %v3422
        %3561 = vmatprep.subr.mxu0 0.0
        %3562 = vmatpush1.msra.mxu0 %v3423
        %3563 = vmatprep.subr.mxu0 0.0
        %3564 = vmatpush1.msra.mxu0 %v3424
        %3565 = vmatprep.subr.mxu0 0.0
        %3566 = vmatpush1.msra.mxu0 %v3425
        %3567 = vmatprep.subr.mxu0 0.0
        %3568 = vmatpush1.msra.mxu0 %v3426
        %3569 = vmatprep.subr.mxu0 0.0
        %3570 = vmatpush1.msra.mxu0 %v3427
        %3571 = vmatprep.subr.mxu0 0.0
        %3572 = vmatpush1.msra.mxu0 %v3428
        %3573 = vmatprep.subr.mxu0 0.0
        %3574 = vmatpush1.msra.mxu0 %v3429
        %3575 = vmatprep.subr.mxu0 0.0
        %3576 = vmatpush1.msra.mxu0 %v3430
        %3577 = vmatprep.subr.mxu0 0.0
        %3578 = vmatpush1.msra.mxu0 %v3431
        %3579 = vmatprep.subr.mxu0 0.0
        %3580 = vmatpush1.msra.mxu0 %v3432
        %3581 = vmatprep.subr.mxu0 0.0
        %3582 = vmatpush1.msra.mxu0 %v3433
        %3583 = vmatprep.subr.mxu0 0.0
        %3584 = vmatpush1.msra.mxu0 %v3434
        %3585 = vmatprep.subr.mxu0 0.0
        %3586 = vmatpush1.msra.mxu0 %v3435
        %3587 = vmatprep.subr.mxu0 0.0
        %3588 = vmatpush1.msra.mxu0 %v3436
        %3589 = vmatprep.subr.mxu0 0.0
        %3590 = vmatpush1.msra.mxu0 %v3437
        %3591 = vmatprep.mubr.f32.mxu0 %v3367
        %3592 = vmatmul.mubr.f32.gmra.mrb[0].mxu0 %v3366
        %v3593 = vpop.f32.mrb[0].mxu0
        %v3594 = vadd.f32 %v3519, %v3593
        %v3595 = vpop.f32.mrb[0].mxu0
        %3596 = vmatprep.mubr.f32.mxu0 %v3372
        %3597 = vmatmul.mubr.f32.gmra.mrb[0].mxu0 %v3371
        %v3598 = vpop.f32.mrb[0].mxu0
        %v3599 = vadd.f32 %v3524, %v3598
        %v3600 = vpop.f32.mrb[0].mxu0
        %3601 = vdwg.mxu0
        %3602 = vmatprep.subr.mxu0 0.0
        %3603 = vmatpush1.msra.mxu0 %v3438
        %3604 = vmatprep.subr.mxu0 0.0
        %3605 = vmatpush1.msra.mxu0 %v3439
        %3606 = vmatprep.subr.mxu0 0.0
        %3607 = vmatpush1.msra.mxu0 %v3450
        %3608 = vmatprep.subr.mxu0 0.0
        %3609 = vmatpush1.msra.mxu0 0.0
        %3610 = vmatprep.subr.mxu0 0.0
        %3611 = vmatpush1.msra.mxu0 0.0
        %3612 = vmatprep.subr.mxu0 0.0
        %3613 = vmatpush1.msra.mxu0 0.0
        %3614 = vmatprep.subr.mxu0 0.0
        %3615 = vmatpush1.msra.mxu0 0.0
        %3616 = vmatprep.subr.mxu0 0.0
        %3617 = vmatpush1.msra.mxu0 0.0
        %3618 = vmatprep.subr.mxu0 0.0
        %3619 = vmatpush1.msra.mxu0 0.0
        %3620 = vmatprep.subr.mxu0 0.0
        %3621 = vmatpush1.msra.mxu0 0.0
        %3622 = vmatprep.subr.mxu0 0.0
        %3623 = vmatpush1.msra.mxu0 0.0
        %3624 = vmatprep.subr.mxu0 0.0
        %3625 = vmatpush1.msra.mxu0 0.0
        %3626 = vmatprep.subr.mxu0 0.0
        %3627 = vmatpush1.msra.mxu0 0.0
        %3628 = vmatprep.subr.mxu0 0.0
        %3629 = vmatpush1.msra.mxu0 0.0
        %3630 = vmatprep.subr.mxu0 0.0
        %3631 = vmatpush1.msra.mxu0 0.0
        %3632 = vmatprep.subr.mxu0 0.0
        %3633 = vmatpush1.msra.mxu0 0.0
        %3634 = vmatprep.subr.mxu0 0.0
        %3635 = vmatpush1.msra.mxu0 0.0
        %3636 = vmatprep.subr.mxu0 0.0
        %3637 = vmatpush1.msra.mxu0 0.0
        %3638 = vmatprep.subr.mxu0 0.0
        %3639 = vmatpush1.msra.mxu0 0.0
        %3640 = vmatprep.subr.mxu0 0.0
        %3641 = vmatpush1.msra.mxu0 0.0
        %3642 = vmatprep.subr.mxu0 0.0
        %3643 = vmatpush1.msra.mxu0 0.0
        %3644 = vmatprep.subr.mxu0 0.0
        %3645 = vmatpush1.msra.mxu0 0.0
        %3646 = vmatprep.subr.mxu0 0.0
        %3647 = vmatpush1.msra.mxu0 0.0
        %3648 = vmatprep.subr.mxu0 0.0
        %3649 = vmatpush1.msra.mxu0 0.0
        %3650 = vmatprep.subr.mxu0 0.0
        %3651 = vmatpush1.msra.mxu0 0.0
        %3652 = vmatprep.subr.mxu0 0.0
        %3653 = vmatpush1.msra.mxu0 0.0
        %3654 = vmatprep.subr.mxu0 0.0
        %3655 = vmatpush1.msra.mxu0 0.0
        %3656 = vmatprep.subr.mxu0 0.0
        %3657 = vmatpush1.msra.mxu0 0.0
        %3658 = vmatprep.subr.mxu0 0.0
        %3659 = vmatpush1.msra.mxu0 0.0
        %3660 = vmatprep.subr.mxu0 0.0
        %3661 = vmatpush1.msra.mxu0 0.0
        %3662 = vmatprep.subr.mxu0 0.0
        %3663 = vmatpush1.msra.mxu0 0.0
        %3664 = vmatprep.subr.mxu0 0.0
        %3665 = vmatpush1.msra.mxu0 0.0
        %3666 = vmatprep.mubr.f32.mxu0 0.0
        %3667 = vmatmul.mubr.f32.gmra.mrb[0].mxu0 %v3443
        %v3668 = vpop.f32.mrb[0].mxu0
        %v3669 = vadd.f32 %v3594, %v3668
        %v3670 = vpop.f32.mrb[0].mxu0
        %3671 = vmatprep.mubr.f32.mxu0 0.0
        %3672 = vmatmul.mubr.f32.gmra.mrb[0].mxu0 %v3446
        %v3673 = vpop.f32.mrb[0].mxu0
        %v3674 = vadd.f32 %v3599, %v3673
        %v3675 = vpop.f32.mrb[0].mxu0
        %3676 = vdwg.mxu0
        %v3677 = vlaneseq
        %vm3678 = vcmp.ge.s32.totalorder %v3677, 0
        %vm3679 = vcmp.lt.s32.totalorder %v3677, 25
        %vm3680 = vmand %vm3678, %vm3679
        %3681 = vst.msk [vmem:[#allocation4] sm:$0x1] %vm3680, %v3669
        %v3684 = vunpack.c.l.s4 1966171168
        %v3685 = vunpack.c.0.s8 %v3684
        %v3686 = vlaneseq
        %v3687 = vshrl.u32 %v3686, 7
        %v3688 = vsub.s32 %v3685, %v3687
        %v3689 = vrot.slane %v3669, %v3688
        %v3690 = vcombine.high %v3689, %v3689
        %v3692 = vunpack.c.l.s4 1966171168
        %v3693 = vunpack.c.0.s8 %v3692
        %v3694 = vlaneseq
        %v3695 = vshrl.u32 %v3694, 7
        %v3696 = vsub.s32 %v3693, %v3695
        %v3697 = vrot.slane %v3689, %v3696
        %v3699 = vunpack.c.l.s4 1966171168
        %v3700 = vunpack.c.0.s8 %v3699
        %v3701 = vlaneseq
        %v3702 = vshrl.u32 %v3701, 7
        %v3703 = vsub.s32 %v3700, %v3702
        %v3704 = vrot.slane %v3690, %v3703
        %3705 = vrot.lane.b32.xlu0 %v3704, 25
        %v3706 = vpop.permute.xlu0 %3705
        %vm3708 = vcmp.ge.s32.totalorder %v3677, 25
        %vm3709 = vcmp.lt.s32.totalorder %v3677, 50
        %vm3710 = vmand %vm3708, %vm3709
        %3711 = vst.msk [vmem:[#allocation4] sm:$0x1] %vm3710, %v3706
        %v3712 = vcombine.high %v3697, %v3697
        %3713 = vrot.lane.b32.xlu0 %v3712, 50
        %v3714 = vpop.permute.xlu0 %3713
        %vm3716 = vcmp.ge.s32.totalorder %v3677, 50
        %vm3717 = vcmp.lt.s32.totalorder %v3677, 75
        %vm3718 = vmand %vm3716, %vm3717
        %3719 = vst.msk [vmem:[#allocation4] sm:$0x1] %vm3718, %v3714
        %v3720 = vcombine.high %v3704, %v3704
        %3721 = vrot.lane.b32.xlu0 %v3720, 75
        %v3722 = vpop.permute.xlu0 %3721
        %vm3724 = vcmp.ge.s32.totalorder %v3677, 75
        %vm3725 = vcmp.lt.s32.totalorder %v3677, 100
        %vm3726 = vmand %vm3724, %vm3725
        %3727 = vst.msk [vmem:[#allocation4] sm:$0x1] %vm3726, %v3722
        %v3728 = vcombine.high %v3669, %v3669
        %v3730 = vunpack.c.l.s4 1966171168
        %v3731 = vunpack.c.0.s8 %v3730
        %v3732 = vlaneseq
        %v3733 = vshrl.u32 %v3732, 7
        %v3734 = vsub.s32 %v3731, %v3733
        %v3735 = vrot.slane %v3728, %v3734
        %v3737 = vunpack.c.l.s4 1966171168
        %v3738 = vunpack.c.0.s8 %v3737
        %v3739 = vlaneseq
        %v3740 = vshrl.u32 %v3739, 7
        %v3741 = vsub.s32 %v3738, %v3740
        %v3742 = vrot.slane %v3735, %v3741
        %3743 = vrot.lane.b32.xlu0 %v3742, 100
        %v3744 = vpop.permute.xlu0 %3743
        %vm3746 = vcmp.ge.s32.totalorder %v3677, 100
        %vm3747 = vcmp.lt.s32.totalorder %v3677, 125
        %vm3748 = vmand %vm3746, %vm3747
        %3749 = vst.msk [vmem:[#allocation4] sm:$0x1] %vm3748, %v3744
        %v3750 = vcombine.high %v3735, %v3735
        %v3752 = vunpack.c.l.s4 1966171168
        %v3753 = vunpack.c.0.s8 %v3752
        %v3754 = vlaneseq
        %v3755 = vshrl.u32 %v3754, 7
        %v3756 = vsub.s32 %v3753, %v3755
        %v3757 = vrot.slane %v3750, %v3756
        %3758 = vrot.lane.b32.xlu0 %v3757, 125
        %v3759 = vpop.permute.xlu0 %3758
        %v3760 = vrot.slane %v3759, 7
        %v3761 = vsel %vm595, %v3760, %v3759
        %vm3763 = vcmp.ge.s32.totalorder %v3677, 125
        %vm3764 = vcmp.lt.s32.totalorder %v3677, 150
        %vm3765 = vmand %vm3763, %vm3764
        %3766 = vst.msk [vmem:[#allocation4] sm:$0x3] %vm3765, %v3761
        %v3767 = vcombine.high %v3742, %v3742
        %3768 = vrot.lane.b32.xlu0 %v3767, 22
        %v3769 = vpop.permute.xlu0 %3768
        %vm3771 = vcmp.ge.s32.totalorder %v3677, 22
        %vm3772 = vcmp.lt.s32.totalorder %v3677, 47
        %vm3773 = vmand %vm3771, %vm3772
        %3774 = vst.msk [vmem:[#allocation4 + $0x1] sm:$0x1] %vm3773, %v3769
        %v3775 = vcombine.high %v3757, %v3757
        %3776 = vrot.lane.b32.xlu0 %v3775, 47
        %v3777 = vpop.permute.xlu0 %3776
        %vm3779 = vcmp.ge.s32.totalorder %v3677, 47
        %vm3780 = vcmp.lt.s32.totalorder %v3677, 72
        %vm3781 = vmand %vm3779, %vm3780
        %3782 = vst.msk [vmem:[#allocation4 + $0x1] sm:$0x1] %vm3781, %v3777
        %v3785 = vunpack.c.l.s4 1966171168
        %v3786 = vunpack.c.0.s8 %v3785
        %v3787 = vlaneseq
        %v3788 = vshrl.u32 %v3787, 7
        %v3789 = vsub.s32 %v3786, %v3788
        %v3790 = vrot.slane %v3674, %v3789
        %v3792 = vunpack.c.l.s4 1966171168
        %v3793 = vunpack.c.0.s8 %v3792
        %v3794 = vlaneseq
        %v3795 = vshrl.u32 %v3794, 7
        %v3796 = vsub.s32 %v3793, %v3795
        %v3797 = vrot.slane %v3790, %v3796
        %3798 = vrot.lane.b32.xlu0 %v3797, 72
        %v3799 = vpop.permute.xlu0 %3798
        %vm3801 = vcmp.ge.s32.totalorder %v3677, 72
        %vm3802 = vcmp.lt.s32.totalorder %v3677, 97
        %vm3803 = vmand %vm3801, %vm3802
        %3804 = vst.msk [vmem:[#allocation4 + $0x1] sm:$0x1] %vm3803, %v3799
        %v3805 = vcombine.high %v3790, %v3790
        %v3807 = vunpack.c.l.s4 1966171168
        %v3808 = vunpack.c.0.s8 %v3807
        %v3809 = vlaneseq
        %v3810 = vshrl.u32 %v3809, 7
        %v3811 = vsub.s32 %v3808, %v3810
        %v3812 = vrot.slane %v3805, %v3811
        %3813 = vrot.lane.b32.xlu0 %v3812, 97
        %v3814 = vpop.permute.xlu0 %3813
        %vm3816 = vcmp.ge.s32.totalorder %v3677, 97
        %vm3817 = vcmp.lt.s32.totalorder %v3677, 122
        %vm3818 = vmand %vm3816, %vm3817
        %3819 = vst.msk [vmem:[#allocation4 + $0x1] sm:$0x1] %vm3818, %v3814
        %v3820 = vcombine.high %v3797, %v3797
        %3821 = vrot.lane.b32.xlu0 %v3820, 122
        %v3822 = vpop.permute.xlu0 %3821
        %v3823 = vrot.slane %v3822, 7
        %v3824 = vsel %vm2347, %v3823, %v3822
        %vm3826 = vcmp.ge.s32.totalorder %v3677, 122
        %vm3827 = vcmp.lt.s32.totalorder %v3677, 147
        %vm3828 = vmand %vm3826, %vm3827
        %3829 = vst.msk [vmem:[#allocation4 + $0x1] sm:$0x3] %vm3828, %v3824
        %v3830 = vcombine.high %v3812, %v3812
        %3831 = vrot.lane.b32.xlu0 %v3830, 19
        %v3832 = vpop.permute.xlu0 %3831
        %vm3834 = vcmp.ge.s32.totalorder %v3677, 19
        %vm3835 = vcmp.lt.s32.totalorder %v3677, 44
        %vm3836 = vmand %vm3834, %vm3835
        %3837 = vst.msk [vmem:[#allocation4 + $0x2] sm:$0x1] %vm3836, %v3832
        %v3838 = vcombine.high %v3674, %v3674
        %v3840 = vunpack.c.l.s4 1966171168
        %v3841 = vunpack.c.0.s8 %v3840
        %v3842 = vlaneseq
        %v3843 = vshrl.u32 %v3842, 7
        %v3844 = vsub.s32 %v3841, %v3843
        %v3845 = vrot.slane %v3838, %v3844
        %v3847 = vunpack.c.l.s4 1966171168
        %v3848 = vunpack.c.0.s8 %v3847
        %v3849 = vlaneseq
        %v3850 = vshrl.u32 %v3849, 7
        %v3851 = vsub.s32 %v3848, %v3850
        %v3852 = vrot.slane %v3845, %v3851
        %3853 = vrot.lane.b32.xlu0 %v3852, 44
        %v3854 = vpop.permute.xlu0 %3853
        %vm3856 = vcmp.ge.s32.totalorder %v3677, 44
        %vm3857 = vcmp.lt.s32.totalorder %v3677, 69
        %vm3858 = vmand %vm3856, %vm3857
        %3859 = vst.msk [vmem:[#allocation4 + $0x2] sm:$0x1] %vm3858, %v3854
        %v3860 = vcombine.high %v3845, %v3845
        %v3862 = vunpack.c.l.s4 1966171168
        %v3863 = vunpack.c.0.s8 %v3862
        %v3864 = vlaneseq
        %v3865 = vshrl.u32 %v3864, 7
        %v3866 = vsub.s32 %v3863, %v3865
        %v3867 = vrot.slane %v3860, %v3866
        %3868 = vrot.lane.b32.xlu0 %v3867, 69
        %v3869 = vpop.permute.xlu0 %3868
        %vm3871 = vcmp.ge.s32.totalorder %v3677, 69
        %vm3872 = vcmp.lt.s32.totalorder %v3677, 94
        %vm3873 = vmand %vm3871, %vm3872
        %3874 = vst.msk [vmem:[#allocation4 + $0x2] sm:$0x1] %vm3873, %v3869
        %v3875 = vcombine.high %v3852, %v3852
        %3876 = vrot.lane.b32.xlu0 %v3875, 94
        %v3877 = vpop.permute.xlu0 %3876
        %vm3879 = vcmp.ge.s32.totalorder %v3677, 94
        %vm3880 = vcmp.lt.s32.totalorder %v3677, 119
        %vm3881 = vmand %vm3879, %vm3880
        %3882 = vst.msk [vmem:[#allocation4 + $0x2] sm:$0x1] %vm3881, %v3877
        %v3883 = vcombine.high %v3867, %v3867
        %3884 = vrot.lane.b32.xlu0 %v3883, 119
        %v3885 = vpop.permute.xlu0 %3884
        %v3886 = vrot.slane %v3885, 7
        %vm3887 = vcmask 973824
        %v3888 = vsel %vm3887, %v3886, %v3885
        %vm3890 = vcmp.ge.s32.totalorder %v3677, 119
        %vm3891 = vcmp.lt.s32.totalorder %v3677, 144
        %vm3892 = vmand %vm3890, %vm3891
        %3893 = vst.msk [vmem:[#allocation4 + $0x2] sm:$0x3] %vm3892, %v3888
        %v3894 = vld [vmem:[#allocation4] sm:$0xf]
        %v3895 = vld [vmem:[%s6] sm:$0xff]
        %v3896 = vld [vmem:[%s6 + $0x8] sm:$0xff]
        %v3897 = vld [vmem:[%s6 + $0x10] sm:$0xff]
        %v3898 = vld [vmem:[%s6 + $0x18] sm:$0xff]
        %v3899 = vld [vmem:[%s6 + $0x20] sm:$0xff]
        %v3900 = vld [vmem:[%s6 + $0x28] sm:$0xff]
        %v3901 = vld [vmem:[%s6 + $0x30] sm:$0xff]
        %v3902 = vld [vmem:[%s6 + $0x38] sm:$0xff]
        %v3903 = vld [vmem:[%s6 + $0x40] sm:$0xff]
        %v3904 = vld [vmem:[%s6 + $0x48] sm:$0xff]
        %v3905 = vld [vmem:[%s6 + $0x50] sm:$0xff]
        %v3906 = vld [vmem:[%s6 + $0x58] sm:$0xff]
        %v3907 = vld [vmem:[%s6 + $0x60] sm:$0xff]
        %v3908 = vld [vmem:[%s6 + $0x68] sm:$0xff]
        %v3909 = vld [vmem:[%s6 + $0x70] sm:$0xff]
        %v3910 = vld [vmem:[%s6 + $0x78] sm:$0xff]
        %v3911 = vld [vmem:[%s6 + $0x80] sm:$0xff]
        %v3912 = vld [vmem:[%s6 + $0x88] sm:$0xff]
        %v3913 = vld [vmem:[%s6 + $0x90] sm:$0xff]
        %v3914 = vld [vmem:[%s6 + $0x98] sm:$0xff]
        %v3915 = vld [vmem:[%s6 + $0xa0] sm:$0xff]
        %v3916 = vld [vmem:[%s6 + $0xa8] sm:$0xff]
        %v3917 = vld [vmem:[%s6 + $0xb0] sm:$0xff]
        %v3918 = vld [vmem:[%s6 + $0xb8] sm:$0xff]
        %v3919 = vld [vmem:[%s6 + $0xc0] sm:$0xff]
        %v3920 = vld [vmem:[%s6 + $0xc8] sm:$0xff]
        %v3921 = vld [vmem:[%s6 + $0xd0] sm:$0xff]
        %v3922 = vld [vmem:[%s6 + $0xd8] sm:$0xff]
        %v3923 = vld [vmem:[%s6 + $0xe0] sm:$0xff]
        %v3924 = vld [vmem:[%s6 + $0xe8] sm:$0xff]
        %v3925 = vld [vmem:[%s6 + $0xf0] sm:$0xff]
        %v3926 = vld [vmem:[%s6 + $0xf8] sm:$0xff]
        %v3927 = vld [vmem:[%s6 + $0x100] sm:$0xff]
        %v3928 = vld [vmem:[%s6 + $0x108] sm:$0xff]
        %v3929 = vld [vmem:[%s6 + $0x110] sm:$0xff]
        %v3930 = vld [vmem:[%s6 + $0x118] sm:$0xff]
        %v3931 = vld [vmem:[%s6 + $0x120] sm:$0xff]
        %v3932 = vld [vmem:[%s6 + $0x128] sm:$0xff]
        %v3933 = vld [vmem:[%s6 + $0x130] sm:$0xff]
        %v3934 = vld [vmem:[%s6 + $0x138] sm:$0xff]
        %v3935 = vld [vmem:[%s6 + $0x140] sm:$0xff]
        %v3936 = vld [vmem:[%s6 + $0x148] sm:$0xff]
        %v3937 = vld [vmem:[%s6 + $0x150] sm:$0xff]
        %v3938 = vld [vmem:[%s6 + $0x158] sm:$0xff]
        %v3939 = vld [vmem:[%s6 + $0x160] sm:$0xff]
        %v3940 = vld [vmem:[%s6 + $0x168] sm:$0xff]
        %v3941 = vld [vmem:[%s6 + $0x170] sm:$0xff]
        %v3942 = vld [vmem:[%s6 + $0x178] sm:$0xff]
        %v3943 = vld [vmem:[%s6 + $0x180] sm:$0xff]
        %v3944 = vld [vmem:[%s6 + $0x188] sm:$0xff]
        %v3945 = vld [vmem:[%s7] sm:$0x1]
        %v3947 = vlaneseq
        %v3948 = vshrl.u32 %v3947, 7
        %v3949 = vsub.s32 0, %v3948
        %v3950 = vrot.slane %v3894, %v3949
        %v3951 = vlaneseq
        %v3952 = vshrl.u32 %v3951, 7
        %v3953 = vsub.s32 1, %v3952
        %v3954 = vrot.slane %v3894, %v3953
        %v3955 = vlaneseq
        %v3956 = vshrl.u32 %v3955, 7
        %v3957 = vsub.s32 2, %v3956
        %v3958 = vrot.slane %v3894, %v3957
        %v3959 = vlaneseq
        %v3960 = vshrl.u32 %v3959, 7
        %v3961 = vsub.s32 3, %v3960
        %v3962 = vrot.slane %v3894, %v3961
        %vm3966 = vcmask 130048
        %v3967 = vsel %vm3966, %v3962, 0
        %3969 = vmatprep.subr.mxu0 0.0
        %3970 = vmatpush1.msra.mxu0 %v3895
        %3971 = vmatprep.subr.mxu0 0.0
        %3972 = vmatpush1.msra.mxu0 %v3896
        %3973 = vmatprep.subr.mxu0 0.0
        %3974 = vmatpush1.msra.mxu0 %v3897
        %3975 = vmatprep.subr.mxu0 0.0
        %3976 = vmatpush1.msra.mxu0 %v3898
        %3977 = vmatprep.subr.mxu0 0.0
        %3978 = vmatpush1.msra.mxu0 %v3899
        %3979 = vmatprep.subr.mxu0 0.0
        %3980 = vmatpush1.msra.mxu0 %v3900
        %3981 = vmatprep.subr.mxu0 0.0
        %3982 = vmatpush1.msra.mxu0 %v3901
        %3983 = vmatprep.subr.mxu0 0.0
        %3984 = vmatpush1.msra.mxu0 %v3902
        %3985 = vmatprep.subr.mxu0 0.0
        %3986 = vmatpush1.msra.mxu0 %v3903
        %3987 = vmatprep.subr.mxu0 0.0
        %3988 = vmatpush1.msra.mxu0 %v3904
        %3989 = vmatprep.subr.mxu0 0.0
        %3990 = vmatpush1.msra.mxu0 %v3905
        %3991 = vmatprep.subr.mxu0 0.0
        %3992 = vmatpush1.msra.mxu0 %v3906
        %3993 = vmatprep.subr.mxu0 0.0
        %3994 = vmatpush1.msra.mxu0 %v3907
        %3995 = vmatprep.subr.mxu0 0.0
        %3996 = vmatpush1.msra.mxu0 %v3908
        %3997 = vmatprep.subr.mxu0 0.0
        %3998 = vmatpush1.msra.mxu0 %v3909
        %3999 = vmatprep.subr.mxu0 0.0
        %4000 = vmatpush1.msra.mxu0 %v3910
        %4001 = vmatprep.subr.mxu0 0.0
        %4002 = vmatpush1.msra.mxu0 %v3911
        %4003 = vmatprep.subr.mxu0 0.0
        %4004 = vmatpush1.msra.mxu0 %v3912
        %4005 = vmatprep.subr.mxu0 0.0
        %4006 = vmatpush1.msra.mxu0 %v3913
        %4007 = vmatprep.subr.mxu0 0.0
        %4008 = vmatpush1.msra.mxu0 %v3914
        %4009 = vmatprep.subr.mxu0 0.0
        %4010 = vmatpush1.msra.mxu0 %v3915
        %4011 = vmatprep.subr.mxu0 0.0
        %4012 = vmatpush1.msra.mxu0 %v3916
        %4013 = vmatprep.subr.mxu0 0.0
        %4014 = vmatpush1.msra.mxu0 %v3917
        %4015 = vmatprep.subr.mxu0 0.0
        %4016 = vmatpush1.msra.mxu0 %v3918
        %4017 = vmatprep.subr.mxu0 0.0
        %4018 = vmatpush1.msra.mxu0 %v3919
        %4019 = vmatprep.subr.mxu0 0.0
        %4020 = vmatpush1.msra.mxu0 %v3920
        %4021 = vmatprep.subr.mxu0 0.0
        %4022 = vmatpush1.msra.mxu0 %v3921
        %4023 = vmatprep.subr.mxu0 0.0
        %4024 = vmatpush1.msra.mxu0 %v3922
        %4025 = vmatprep.subr.mxu0 0.0
        %4026 = vmatpush1.msra.mxu0 %v3923
        %4027 = vmatprep.subr.mxu0 0.0
        %4028 = vmatpush1.msra.mxu0 %v3924
        %4029 = vmatprep.subr.mxu0 0.0
        %4030 = vmatpush1.msra.mxu0 %v3925
        %4031 = vmatprep.subr.mxu0 0.0
        %4032 = vmatpush1.msra.mxu0 %v3926
        %4033 = vmatprep.mubr.f32.mxu0 %v3954
        %4034 = vmatmul.mubr.f32.gmra.mrb[0].mxu0 %v3950
        %v4035 = vpop.f32.mrb[0].mxu0
        %v4036 = vadd.f32 %v3945, %v4035
        %v4037 = vpop.f32.mrb[0].mxu0
        %4038 = vdwg.mxu0
        %4039 = vmatprep.subr.mxu0 0.0
        %4040 = vmatpush1.msra.mxu0 %v3927
        %4041 = vmatprep.subr.mxu0 0.0
        %4042 = vmatpush1.msra.mxu0 %v3928
        %4043 = vmatprep.subr.mxu0 0.0
        %4044 = vmatpush1.msra.mxu0 %v3929
        %4045 = vmatprep.subr.mxu0 0.0
        %4046 = vmatpush1.msra.mxu0 %v3930
        %4047 = vmatprep.subr.mxu0 0.0
        %4048 = vmatpush1.msra.mxu0 %v3931
        %4049 = vmatprep.subr.mxu0 0.0
        %4050 = vmatpush1.msra.mxu0 %v3932
        %4051 = vmatprep.subr.mxu0 0.0
        %4052 = vmatpush1.msra.mxu0 %v3933
        %4053 = vmatprep.subr.mxu0 0.0
        %4054 = vmatpush1.msra.mxu0 %v3934
        %4055 = vmatprep.subr.mxu0 0.0
        %4056 = vmatpush1.msra.mxu0 %v3935
        %4057 = vmatprep.subr.mxu0 0.0
        %4058 = vmatpush1.msra.mxu0 %v3936
        %4059 = vmatprep.subr.mxu0 0.0
        %4060 = vmatpush1.msra.mxu0 %v3937
        %4061 = vmatprep.subr.mxu0 0.0
        %4062 = vmatpush1.msra.mxu0 %v3938
        %4063 = vmatprep.subr.mxu0 0.0
        %4064 = vmatpush1.msra.mxu0 %v3939
        %4065 = vmatprep.subr.mxu0 0.0
        %4066 = vmatpush1.msra.mxu0 %v3940
        %4067 = vmatprep.subr.mxu0 0.0
        %4068 = vmatpush1.msra.mxu0 %v3941
        %4069 = vmatprep.subr.mxu0 0.0
        %4070 = vmatpush1.msra.mxu0 %v3942
        %4071 = vmatprep.subr.mxu0 0.0
        %4072 = vmatpush1.msra.mxu0 %v3943
        %4073 = vmatprep.subr.mxu0 0.0
        %4074 = vmatpush1.msra.mxu0 %v3944
        %4075 = vmatprep.subr.mxu0 0.0
        %4076 = vmatpush1.msra.mxu0 0.0
        %4077 = vmatprep.subr.mxu0 0.0
        %4078 = vmatpush1.msra.mxu0 0.0
        %4079 = vmatprep.subr.mxu0 0.0
        %4080 = vmatpush1.msra.mxu0 0.0
        %4081 = vmatprep.subr.mxu0 0.0
        %4082 = vmatpush1.msra.mxu0 0.0
        %4083 = vmatprep.subr.mxu0 0.0
        %4084 = vmatpush1.msra.mxu0 0.0
        %4085 = vmatprep.subr.mxu0 0.0
        %4086 = vmatpush1.msra.mxu0 0.0
        %4087 = vmatprep.subr.mxu0 0.0
        %4088 = vmatpush1.msra.mxu0 0.0
        %4089 = vmatprep.subr.mxu0 0.0
        %4090 = vmatpush1.msra.mxu0 0.0
        %4091 = vmatprep.subr.mxu0 0.0
        %4092 = vmatpush1.msra.mxu0 0.0
        %4093 = vmatprep.subr.mxu0 0.0
        %4094 = vmatpush1.msra.mxu0 0.0
        %4095 = vmatprep.subr.mxu0 0.0
        %4096 = vmatpush1.msra.mxu0 0.0
        %4097 = vmatprep.subr.mxu0 0.0
        %4098 = vmatpush1.msra.mxu0 0.0
        %4099 = vmatprep.subr.mxu0 0.0
        %4100 = vmatpush1.msra.mxu0 0.0
        %4101 = vmatprep.subr.mxu0 0.0
        %4102 = vmatpush1.msra.mxu0 0.0
        %4103 = vmatprep.mubr.f32.mxu0 %v3967
        %4104 = vmatmul.mubr.f32.gmra.mrb[0].mxu0 %v3958
        %v4105 = vpop.f32.mrb[0].mxu0
        %v4106 = vadd.f32 %v4036, %v4105
        %v4107 = vpop.f32.mrb[0].mxu0
        %4108 = vdwg.mxu0
        %v4109 = vmax.f32 %v4106, 0.0
        %v4110 = vld [vmem:[#allocation5] sm:$0xff]
        %v4111 = vld [vmem:[#allocation5 + $0x8] sm:$0xff]
        %v4112 = vld [vmem:[#allocation5 + $0x10] sm:$0xff]
        %v4113 = vld [vmem:[#allocation5 + $0x18] sm:$0xff]
        %v4114 = vld [vmem:[#allocation5 + $0x20] sm:$0xff]
        %v4115 = vld [vmem:[#allocation5 + $0x28] sm:$0xff]
        %v4116 = vld [vmem:[#allocation5 + $0x30] sm:$0xff]
        %v4117 = vld [vmem:[#allocation5 + $0x38] sm:$0xff]
        %v4118 = vld [vmem:[#allocation5 + $0x40] sm:$0xff]
        %v4119 = vld [vmem:[#allocation5 + $0x48] sm:$0xff]
        %v4120 = vld [vmem:[#allocation5 + $0x50] sm:$0xff]
        %v4121 = vld [vmem:[#allocation5 + $0x58] sm:$0xff]
        %v4122 = vld [vmem:[#allocation5 + $0x60] sm:$0xf]
        %v4123 = vld [vmem:[%s9] sm:$0x1]
        %vm4124 = vcmask 818176
        %v4126 = vsel %vm4124, %v4109, 0
        %vm4128 = vcmask 1043456
        %v4130 = vsel %vm4128, %v4122, 0
        %4132 = vmatprep.subr.mxu0 0.0
        %4133 = vmatpush1.msra.mxu0 %v4110
        %4134 = vmatprep.subr.mxu0 0.0
        %4135 = vmatpush1.msra.mxu0 %v4111
        %4136 = vmatprep.subr.mxu0 0.0
        %4137 = vmatpush1.msra.mxu0 %v4112
        %4138 = vmatprep.subr.mxu0 0.0
        %4139 = vmatpush1.msra.mxu0 %v4113
        %4140 = vmatprep.subr.mxu0 0.0
        %4141 = vmatpush1.msra.mxu0 %v4114
        %4142 = vmatprep.subr.mxu0 0.0
        %4143 = vmatpush1.msra.mxu0 %v4115
        %4144 = vmatprep.subr.mxu0 0.0
        %4145 = vmatpush1.msra.mxu0 %v4116
        %4146 = vmatprep.subr.mxu0 0.0
        %4147 = vmatpush1.msra.mxu0 %v4117
        %4148 = vmatprep.subr.mxu0 0.0
        %4149 = vmatpush1.msra.mxu0 %v4118
        %4150 = vmatprep.subr.mxu0 0.0
        %4151 = vmatpush1.msra.mxu0 %v4119
        %4152 = vmatprep.subr.mxu0 0.0
        %4153 = vmatpush1.msra.mxu0 %v4120
        %4154 = vmatprep.subr.mxu0 0.0
        %4155 = vmatpush1.msra.mxu0 %v4121
        %4156 = vmatprep.subr.mxu0 0.0
        %4157 = vmatpush1.msra.mxu0 %v4130
        %4158 = vmatprep.subr.mxu0 0.0
        %4159 = vmatpush1.msra.mxu0 0.0
        %4160 = vmatprep.subr.mxu0 0.0
        %4161 = vmatpush1.msra.mxu0 0.0
        %4162 = vmatprep.subr.mxu0 0.0
        %4163 = vmatpush1.msra.mxu0 0.0
        %4164 = vmatprep.subr.mxu0 0.0
        %4165 = vmatpush1.msra.mxu0 0.0
        %4166 = vmatprep.subr.mxu0 0.0
        %4167 = vmatpush1.msra.mxu0 0.0
        %4168 = vmatprep.subr.mxu0 0.0
        %4169 = vmatpush1.msra.mxu0 0.0
        %4170 = vmatprep.subr.mxu0 0.0
        %4171 = vmatpush1.msra.mxu0 0.0
        %4172 = vmatprep.subr.mxu0 0.0
        %4173 = vmatpush1.msra.mxu0 0.0
        %4174 = vmatprep.subr.mxu0 0.0
        %4175 = vmatpush1.msra.mxu0 0.0
        %4176 = vmatprep.subr.mxu0 0.0
        %4177 = vmatpush1.msra.mxu0 0.0
        %4178 = vmatprep.subr.mxu0 0.0
        %4179 = vmatpush1.msra.mxu0 0.0
        %4180 = vmatprep.subr.mxu0 0.0
        %4181 = vmatpush1.msra.mxu0 0.0
        %4182 = vmatprep.subr.mxu0 0.0
        %4183 = vmatpush1.msra.mxu0 0.0
        %4184 = vmatprep.subr.mxu0 0.0
        %4185 = vmatpush1.msra.mxu0 0.0
        %4186 = vmatprep.subr.mxu0 0.0
        %4187 = vmatpush1.msra.mxu0 0.0
        %4188 = vmatprep.subr.mxu0 0.0
        %4189 = vmatpush1.msra.mxu0 0.0
        %4190 = vmatprep.subr.mxu0 0.0
        %4191 = vmatpush1.msra.mxu0 0.0
        %4192 = vmatprep.subr.mxu0 0.0
        %4193 = vmatpush1.msra.mxu0 0.0
        %4194 = vmatprep.subr.mxu0 0.0
        %4195 = vmatpush1.msra.mxu0 0.0
        %4196 = vmatprep.mubr.f32.mxu0 0.0
        %4197 = vmatmul.mubr.f32.gmra.mrb[0].mxu0 %v4126
        %v4198 = vpop.f32.mrb[0].mxu0
        %v4199 = vadd.f32 %v4123, %v4198
        %v4200 = vpop.f32.mrb[0].mxu0
        %4201 = vdwg.mxu0
        %v4202 = vmax.f32 %v4199, 0.0
        %v4203 = vld [vmem:[%s10] sm:$0xff]
        %v4204 = vld [vmem:[%s10 + $0x8] sm:$0xff]
        %v4205 = vld [vmem:[%s10 + $0x10] sm:$0xff]
        %v4206 = vld [vmem:[%s10 + $0x18] sm:$0xff]
        %v4207 = vld [vmem:[%s10 + $0x20] sm:$0xff]
        %v4208 = vld [vmem:[%s10 + $0x28] sm:$0xff]
        %v4209 = vld [vmem:[%s10 + $0x30] sm:$0xff]
        %v4210 = vld [vmem:[%s10 + $0x38] sm:$0xff]
        %v4211 = vld [vmem:[%s10 + $0x40] sm:$0xff]
        %v4212 = vld [vmem:[%s10 + $0x48] sm:$0xff]
        %v4213 = vld [vmem:[%s10 + $0x50] sm:$0xff]
        %v4214 = vld [vmem:[%s10 + $0x58] sm:$0xff]
        %v4215 = vld [vmem:[%s10 + $0x60] sm:$0xf]
        %v4216 = vld [vmem:[%s11] sm:$0x1]
        %v4218 = vsel %vm4124, %v4202, 0
        %v4221 = vsel %vm4128, %v4215, 0
        %4223 = vmatprep.subr.mxu0 0.0
        %4224 = vmatpush1.msra.mxu0 %v4203
        %4225 = vmatprep.subr.mxu0 0.0
        %4226 = vmatpush1.msra.mxu0 %v4204
        %4227 = vmatprep.subr.mxu0 0.0
        %4228 = vmatpush1.msra.mxu0 %v4205
        %4229 = vmatprep.subr.mxu0 0.0
        %4230 = vmatpush1.msra.mxu0 %v4206
        %4231 = vmatprep.subr.mxu0 0.0
        %4232 = vmatpush1.msra.mxu0 %v4207
        %4233 = vmatprep.subr.mxu0 0.0
        %4234 = vmatpush1.msra.mxu0 %v4208
        %4235 = vmatprep.subr.mxu0 0.0
        %4236 = vmatpush1.msra.mxu0 %v4209
        %4237 = vmatprep.subr.mxu0 0.0
        %4238 = vmatpush1.msra.mxu0 %v4210
        %4239 = vmatprep.subr.mxu0 0.0
        %4240 = vmatpush1.msra.mxu0 %v4211
        %4241 = vmatprep.subr.mxu0 0.0
        %4242 = vmatpush1.msra.mxu0 %v4212
        %4243 = vmatprep.subr.mxu0 0.0
        %4244 = vmatpush1.msra.mxu0 %v4213
        %4245 = vmatprep.subr.mxu0 0.0
        %4246 = vmatpush1.msra.mxu0 %v4214
        %4247 = vmatprep.subr.mxu0 0.0
        %4248 = vmatpush1.msra.mxu0 %v4221
        %4249 = vmatprep.subr.mxu0 0.0
        %4250 = vmatpush1.msra.mxu0 0.0
        %4251 = vmatprep.subr.mxu0 0.0
        %4252 = vmatpush1.msra.mxu0 0.0
        %4253 = vmatprep.subr.mxu0 0.0
        %4254 = vmatpush1.msra.mxu0 0.0
        %4255 = vmatprep.subr.mxu0 0.0
        %4256 = vmatpush1.msra.mxu0 0.0
        %4257 = vmatprep.subr.mxu0 0.0
        %4258 = vmatpush1.msra.mxu0 0.0
        %4259 = vmatprep.subr.mxu0 0.0
        %4260 = vmatpush1.msra.mxu0 0.0
        %4261 = vmatprep.subr.mxu0 0.0
        %4262 = vmatpush1.msra.mxu0 0.0
        %4263 = vmatprep.subr.mxu0 0.0
        %4264 = vmatpush1.msra.mxu0 0.0
        %4265 = vmatprep.subr.mxu0 0.0
        %4266 = vmatpush1.msra.mxu0 0.0
        %4267 = vmatprep.subr.mxu0 0.0
        %4268 = vmatpush1.msra.mxu0 0.0
        %4269 = vmatprep.subr.mxu0 0.0
        %4270 = vmatpush1.msra.mxu0 0.0
        %4271 = vmatprep.subr.mxu0 0.0
        %4272 = vmatpush1.msra.mxu0 0.0
        %4273 = vmatprep.subr.mxu0 0.0
        %4274 = vmatpush1.msra.mxu0 0.0
        %4275 = vmatprep.subr.mxu0 0.0
        %4276 = vmatpush1.msra.mxu0 0.0
        %4277 = vmatprep.subr.mxu0 0.0
        %4278 = vmatpush1.msra.mxu0 0.0
        %4279 = vmatprep.subr.mxu0 0.0
        %4280 = vmatpush1.msra.mxu0 0.0
        %4281 = vmatprep.subr.mxu0 0.0
        %4282 = vmatpush1.msra.mxu0 0.0
        %4283 = vmatprep.subr.mxu0 0.0
        %4284 = vmatpush1.msra.mxu0 0.0
        %4285 = vmatprep.subr.mxu0 0.0
        %4286 = vmatpush1.msra.mxu0 0.0
        %4287 = vmatprep.mubr.f32.mxu0 0.0
        %4288 = vmatmul.mubr.f32.gmra.mrb[0].mxu0 %v4218
        %v4289 = vpop.f32.mrb[0].mxu0
        %v4290 = vadd.f32 %v4216, %v4289
        %v4291 = vpop.f32.mrb[0].mxu0
        %4292 = vdwg.mxu0
        %vm4293 = vcmask 73728
        %4294 = vst.msk [vmem:[%s420] sm:$0x1] %vm4293, %v4290
        %s4295 = sand.u32 %s292, 1
        %s4296 = scalar_lea.sflag [#allocation7], %s4295
        %s4297 = sand.u32 %s292, 1
        %s4298 = scalar_lea.vmem [#allocation8], %s4297
        // Predicated region
        $region73: #{convnet_forward.1} parent=67 // pred_check
          %p4299 = pneg %p302
        $region74: #{convnet_forward.1} parent=67 // pred_check_branch
          %4301 = sbr.rel (%p4299) target = $region76
        $region75: #{convnet_forward.1} parent=67 // pred_region
          %s4303 = ssub.s32 16, 16
          %4304 = vsyncadd %s4296, %s4303
          %s4305 = smul.addr %s27, 16
          %s4306 = scalar_lea.hbm %s12, %s4305
          %s4308 = sshll.u32 %s4298, 4
          %s4309 = int_to_ptr.vmem [resolvable:$true] %s4308
          %4311 = dma.vmem_to_hbm [thread:$0]  %s4309, 16, %s4306, %s4296
        $region76: #{convnet_forward.1} parent=67 // pred_fallthru
          _
      $region68: #{convnet_forward.1} parent=5 // pred_fallthru
        _
      %p4312 = scmp.le.s32.totalorder 2, %s22
      // Predicated region
      $region77: #{convnet_forward.1} parent=5 // pred_check
        %p4313 = pneg %p4312
      $region78: #{convnet_forward.1} parent=5 // pred_check_branch
        %4315 = sbr.rel (%p4313) target = $region80
      $region79: #{convnet_forward.1} parent=5 // pred_region
        %s4316 = ssub.s32 %s22, 2
        // Predicated region
        $region81: #{convnet_forward.1} parent=79 // pred_check
          %p4317 = pneg %p308
        $region82: #{convnet_forward.1} parent=79 // pred_check_branch
          %4319 = sbr.rel (%p4317) target = $region84
        $region83: #{convnet_forward.1} parent=79 // pred_region
          %s4320 = sand.u32 %s293, 1
          %s4321 = scalar_lea.sflag [#allocation7], %s4320
          %s4322 = sand.u32 %s293, 1
          %s4323 = scalar_lea.vmem [#allocation8], %s4322
          %4324 = dma.done %s4321, 16
        $region84: #{convnet_forward.1} parent=79 // pred_fallthru
          _
      $region80: #{convnet_forward.1} parent=5 // pred_fallthru
        _
    $region6: #{convnet_forward.1} parent=1 // loop_footer
      %s26 = sadd.s32 1, %s22
    $region7: #{convnet_forward.1} parent=1 // loop_footer_branch
      %21 = sbr.rel target = $region3
    $region8: #{convnet_forward.1} parent=1 // loop_exit
      _
    %4325 = vsyncpa [#allocation6], 1
    %s4326 = scalar_lea.sflag [#allocation6], 1
    %4327 = vsyncpa %s4326, 1
    %4328 = vsyncpa [#allocation7], 1
    %s4329 = scalar_lea.sflag [#allocation7], 1
    %4330 = vsyncpa %s4329, 1

</llo_original>
